<compile_context>
chip_gen: v6e
topology: v6e:2x2x1
jax: 0.10.0
libtpu: 0.0.40
codegen_flags: <defaults>
</compile_context>

<pallas_src>
import math

import jax
import jax.numpy as jnp
from jax.experimental import pallas as pl
from jax.experimental.pallas import tpu as pltpu

EPS_REVIN = 1e-5
EPS_VAR = 1e-4
LOG2PI = math.log(2.0 * math.pi)


def stacked_vagt_kernel(
    # data (bt batch elements per grid step)
    x_ref, mark_ref,
    # DataEmbedding params (shared by x_norm / x_raw streams, like enc_embedding)
    wtaps_ref, wtime_ref, pos_ref, pprev_ref, pnext_ref,
    # inference (CombineNet stand-in): single-head self-attention + FFN
    wqkv_ref, bqkv_ref, wo_ref, bo_ref,
    w1_ref, b1_ref, w2_ref, b2_ref,
    wprior_ref, bprior_ref,
    # fused transposed heads: [post_mu|post_logvar|x_mu|x_logvar] and [pri_mu|pri_logvar]
    wpostT_ref, bpostT_ref, wpriT_ref, bpriT_ref,
    # output head (end_fc folded through end_conv)
    wfc_ref, wc_ref, yconst_ref,
    # RevIN affine params
    rw_ref, rb_ref,
    # outputs
    xmuT_ref, xvarT_ref, y_ref, stats_ref,
):
    f32 = jnp.float32
    x3 = x_ref[...]                              # (Bt, T, C) raw input slab
    Bt, T, C = x3.shape
    M = mark_ref.shape[-1]
    H = wo_ref.shape[0]
    Z = wpriT_ref.shape[0] // 2
    HZN = wc_ref.shape[0]
    N = Bt * T
    dt = wqkv_ref.dtype                          # MXU operand dtype (bf16)

    # ---------------- RevIN 'norm' (per-series stats over time) --------------
    mean = jnp.mean(x3, axis=1, keepdims=True)                    # (Bt,1,C)
    var = jnp.mean((x3 - mean) ** 2, axis=1, keepdims=True)       # biased var
    stdev = jnp.sqrt(var + EPS_REVIN)
    scale = jax.lax.rsqrt(var + EPS_REVIN) * rw_ref[...]          # fold affine
    shift = rb_ref[...] - mean * scale
    xn3 = x3 * scale + shift                                      # (Bt,T,C)

    # ---- DataEmbedding: timeF linear + positional (computed once, shared) +
    # TokenEmbedding circular Conv1d(k=3, no bias) as one fused tap matmul and
    # two tiny time-shift matmuls (no slice+concat slab copies).
    mark_f = mark_ref[...].reshape(N, M)
    tfe = jnp.dot(mark_f.astype(dt), wtime_ref[...],
                  preferred_element_type=f32)                     # (N,H)
    tfe = tfe + jnp.broadcast_to(pos_ref[...][None], (Bt, T, H)).reshape(N, H)

    pprev_b = jnp.broadcast_to(pprev_ref[...][None], (Bt, T, T))  # hoisted
    pnext_b = jnp.broadcast_to(pnext_ref[...][None], (Bt, T, T))

    def token_embed(x_flat_dt):
        taps = jnp.dot(x_flat_dt, wtaps_ref[...],
                       preferred_element_type=f32)                # (N,3H)
        taps3 = taps.reshape(Bt, T, 3 * H)
        t_prev = taps3[:, :, :H]          # x[t] @ wv0 -> feeds emb[t+1]
        t_cur = taps3[:, :, H:2 * H]      # x[t] @ wv1 -> feeds emb[t]
        t_next = taps3[:, :, 2 * H:]      # x[t] @ wv2 -> feeds emb[t-1]
        emb = (jnp.einsum('bst,bth->bsh', pprev_b, t_prev,
                          preferred_element_type=f32)
               + t_cur
               + jnp.einsum('bst,bth->bsh', pnext_b, t_next,
                            preferred_element_type=f32))
        return emb.reshape(N, H)

    xn_e = token_embed(xn3.reshape(N, C).astype(dt)) + tfe        # x_norm_embed
    xr_e = token_embed(x3.reshape(N, C).astype(dt)) + tfe         # x_raw_embed

    # ---------------- Inference net (CombineNet stand-in) --------------------
    # TODO(synk): CombineNet / TVAE internals are not part of the reference
    # source; a single-head self-attention + FFN encoder with Gaussian
    # posterior/prior/likelihood heads is used (eval mode: no sampling/dropout).
    qkv = jnp.dot(xn_e.astype(dt), wqkv_ref[...],
                  preferred_element_type=f32) + bqkv_ref[...]     # (N,3H)
    qkv_dt = qkv.astype(dt)                                       # cast once
    q3 = qkv_dt[:, :H].reshape(Bt, T, H)
    k3 = qkv_dt[:, H:2 * H].reshape(Bt, T, H)
    v3 = qkv_dt[:, 2 * H:].reshape(Bt, T, H)
    scores = jnp.einsum('bqd,bkd->bqk', q3, k3,
                        preferred_element_type=f32) * (1.0 / math.sqrt(H))
    scores = scores - jnp.max(scores, axis=-1, keepdims=True)
    p = jnp.exp(scores)
    attn = p * pl.reciprocal(jnp.sum(p, axis=-1, keepdims=True), approx=True)
    ctx = jnp.einsum('bqk,bkd->bqd', attn.astype(dt), v3,
                     preferred_element_type=f32).reshape(N, H)
    h = xn_e + jnp.dot(ctx.astype(dt), wo_ref[...],
                       preferred_element_type=f32) + bo_ref[...]
    ff = jnp.maximum(
        jnp.dot(h.astype(dt), w1_ref[...], preferred_element_type=f32)
        + b1_ref[...], 0.0)
    h_out = h + jnp.dot(ff.astype(dt), w2_ref[...],
                        preferred_element_type=f32) + b2_ref[...]          # (N,H)

    h_prior = jnp.maximum(
        jnp.dot(xr_e.astype(dt), wprior_ref[...], preferred_element_type=f32)
        + bprior_ref[...], 0.0)                                            # (N,H)

    # ---- transposed (feature, token) epilogue: fused head matmuls as
    # W^T @ h^T so splits are sublane slices and the big stores are lane-dense
    # along the token axis.
    h_out_dt = h_out.astype(dt)                                   # cast once
    h_prior_dt = h_prior.astype(dt)
    postT = jnp.einsum('fh,nh->fn', wpostT_ref[...], h_out_dt,
                       preferred_element_type=f32) + bpostT_ref[...]  # (2Z+2C,N)
    priT = jnp.einsum('fh,nh->fn', wpriT_ref[...], h_prior_dt,
                      preferred_element_type=f32) + bpriT_ref[...]    # (2Z,N)

    mu_post = postT[:Z]
    lv_post = postT[Z:2 * Z]
    x_mu_t = postT[2 * Z:2 * Z + C]                                    # (C,N)
    x_var_t = jax.nn.softplus(postT[2 * Z + C:]) + EPS_VAR             # (C,N)
    mu_pri = priT[:Z]
    lv_pri = priT[Z:]

    # x^T via identity-matmul (MXU transpose trick; avoids XLU transpose).
    row = jax.lax.broadcasted_iota(jnp.int32, (C, C), 0)
    col = jax.lax.broadcasted_iota(jnp.int32, (C, C), 1)
    eye_c = (row == col).astype(f32)
    x_t = jnp.einsum('ck,nk->cn', eye_c, x3.reshape(N, C),
                     preferred_element_type=f32)                       # (C,N)

    # ---- losses: Gaussian log-density (losses.log_normal) + Gaussian KL -----
    diff = x_t - x_mu_t
    inv_var = pl.reciprocal(x_var_t, approx=True)                      # EUP
    llh = -0.5 * jnp.sum(LOG2PI + jnp.log(x_var_t) + diff * diff * inv_var)
    kl = 0.5 * jnp.sum(
        lv_pri - lv_post
        + jnp.exp(lv_post - lv_pri)
        + (mu_post - mu_pri) ** 2 * jnp.exp(-lv_pri)
        - 1.0)

    # ---- output head: end_fc folded through end_conv:
    #   end_fc(end_conv(h)) == time_mix(wc, h @ wfc) + (bc * colsum(wfc) + bfc)
    # wc / folded constant stay f32 (single bf16 rounding via wfc only).
    g = jnp.dot(h_out_dt, wfc_ref[...], preferred_element_type=f32)    # (N,C)
    g3 = g.reshape(Bt, T, C)
    wc_b = jnp.broadcast_to(wc_ref[...][None], (Bt, HZN, T))
    y3 = jnp.einsum('bot,btc->boc', wc_b, g3,
                    preferred_element_type=f32)                        # (Bt,HZN,C)
    y3 = y3 + yconst_ref[...][None]

    # ---------------- RevIN 'denorm' ------------------------------------------
    inv_aff = pl.reciprocal(rw_ref[...] + EPS_REVIN * EPS_REVIN)       # (1,C)
    y3 = (y3 - rb_ref[...]) * inv_aff
    y3 = y3 * stdev + mean

    # ---------------- stores ---------------------------------------------------
    xmuT_ref[0] = x_mu_t                 # (C, bt*T) lane-dense token axis
    xvarT_ref[0] = x_var_t
    y_ref[...] = y3
    sel = jax.lax.broadcasted_iota(jnp.int32, (1, 1, 2), 2)
    stats_ref[...] = jnp.where(sel == 0, llh, kl)    # packed [llh, kl] per step


def _shift_matrices(T):
    """Circular shift-by-one matrices: einsum('bst,bth->bsh', P, y)[s] = y[s∓1]."""
    s = jnp.arange(T)[:, None]
    t = jnp.arange(T)[None, :]
    p_prev = (t == (s - 1) % T).astype(jnp.float32)
    p_next = (t == (s + 1) % T).astype(jnp.float32)
    return p_prev, p_next


def _pack_weights(params, mxu_dtype):
    """Pack / fuse module weights into the kernel's 24 inputs."""
    f32 = jnp.float32
    dt = mxu_dtype
    wtaps = jnp.concatenate(
        [params["wv0"], params["wv1"], params["wv2"]], axis=1).astype(dt)
    wqkv = jnp.concatenate(
        [params["wq"], params["wk"], params["wv"]], axis=1).astype(dt)
    bqkv = jnp.concatenate(
        [params["bq"], params["bk"], params["bv"]], axis=1).astype(f32)
    wpost_t = jnp.concatenate(
        [params["wzpost_mu"], params["wzpost_lv"], params["wxm"],
         params["wxlv"]], axis=1).T.astype(dt)
    bpost_t = jnp.concatenate(
        [params["bzpost_mu"], params["bzpost_lv"], params["bxm"],
         params["bxlv"]], axis=1).T.astype(f32)
    wpri_t = jnp.concatenate(
        [params["wzprior_mu"], params["wzprior_lv"]], axis=1).T.astype(dt)
    bpri_t = jnp.concatenate(
        [params["bzprior_mu"], params["bzprior_lv"]], axis=1).T.astype(f32)
    # end_fc folded through end_conv (constants kept in f32)
    colsum_wfc = jnp.sum(params["wfc"].astype(f32), axis=0, keepdims=True)   # (1,C)
    y_const = params["bc"].astype(f32) * colsum_wfc + params["bfc"].astype(f32)
    T = params["pos"].shape[0]
    p_prev, p_next = _shift_matrices(T)
    return [
        wtaps, params["wtime"].astype(dt), params["pos"].astype(f32),
        p_prev, p_next,
        wqkv, bqkv,
        params["wo"].astype(dt), params["bo"].astype(f32),
        params["w1"].astype(dt), params["b1"].astype(f32),
        params["w2"].astype(dt), params["b2"].astype(f32),
        params["wprior"].astype(dt), params["bprior"].astype(f32),
        wpost_t, bpost_t, wpri_t, bpri_t,
        params["wfc"].astype(dt),
        params["wc"].astype(f32), y_const,
        params["rw"].astype(f32), params["rb"].astype(f32),
    ]


def _vmem_budget_bytes():
    """~48 MiB on 64 MiB v7x, 96 MiB on 128 MiB v5e / v6e."""
    cap = 64 * 1024 * 1024  # conservative default (v7x per-core VMEM)
    try:
        info = pltpu.get_tpu_info()
        cap = int(getattr(info, "vmem_capacity_bytes", cap))
    except Exception:
        pass
    return min(96 * 1024 * 1024, (cap * 3) // 4)


def _choose_block_batch(B, T, C, H, M, Z, HZN, vmem_budget):
    """Batch elements per grid step: ~512 token rows (amortize ~600-cycle step
    overhead), capped by the VMEM budget, but >=2 grid steps whenever B >= 2 so
    dimension_semantics=('parallel',) can shard across v7x's two TensorCores."""
    per_b = 4 * T * (8 * C + M + 14 * H + 6 * T + 4 * Z + 2 * HZN)
    cap_rows = max(1, 512 // max(T, 1))
    cap_vmem = max(1, vmem_budget // max(3 * per_b, 1))
    cap = max(1, min(cap_rows, cap_vmem))
    divisors = [d for d in range(1, B + 1) if B % d == 0]
    bt = max(d for d in divisors if d <= cap)
    if B >= 2 and B // bt < 2:
        multi = [d for d in divisors if B // d >= 2]
        bt = max([d for d in multi if d <= cap] or [1])
    return bt


def stacked_vagt_forward(x, x_mark_enc, x_dec, x_mark_dec, params,
                         *, mxu_dtype=jnp.bfloat16):
    """Returns (x_mu, x_var, llh, kl_loss, output) like StackedVAGT.forward.

    x_dec / x_mark_dec are accepted for signature parity but (as in the
    reference forward) unused.
    """
    del x_dec, x_mark_dec
    x = x.astype(jnp.float32)
    x_mark_enc = x_mark_enc.astype(jnp.float32)
    B, T, C = x.shape
    M = x_mark_enc.shape[-1]
    H = params["wq"].shape[0]
    Z = params["wzpost_mu"].shape[1]
    HZN = params["wc"].shape[0]

    vmem_budget = _vmem_budget_bytes()
    bt = _choose_block_batch(B, T, C, H, M, Z, HZN, vmem_budget)
    steps = B // bt
    assert steps * bt == B

    weights = _pack_weights(params, mxu_dtype)

    in_specs = [
        pl.BlockSpec((bt, T, C), lambda b: (b, 0, 0)),
        pl.BlockSpec((bt, T, M), lambda b: (b, 0, 0)),
    ] + [
        # Weight block index is constant across the grid (loaded once, reused).
        pl.BlockSpec(w.shape, lambda b, nd=w.ndim: (0,) * nd) for w in weights
    ]

    out_shape = (
        jax.ShapeDtypeStruct((steps, C, bt * T), jnp.float32),   # x_mu^T
        jax.ShapeDtypeStruct((steps, C, bt * T), jnp.float32),   # x_var^T
        jax.ShapeDtypeStruct((B, HZN, C), jnp.float32),          # output
        jax.ShapeDtypeStruct((steps, 1, 2), jnp.float32),        # [llh, kl]
    )
    out_specs = (
        pl.BlockSpec((1, C, bt * T), lambda b: (b, 0, 0)),
        pl.BlockSpec((1, C, bt * T), lambda b: (b, 0, 0)),
        pl.BlockSpec((bt, HZN, C), lambda b: (b, 0, 0)),
        pl.BlockSpec((1, 1, 2), lambda b: (b, 0, 0)),
    )

    x_mu_t, x_var_t, y, stats = pl.pallas_call(
        stacked_vagt_kernel,
        grid=(steps,),
        in_specs=in_specs,
        out_specs=out_specs,
        out_shape=out_shape,
        compiler_params=pltpu.CompilerParams(
            dimension_semantics=("parallel",),
            vmem_limit_bytes=vmem_budget,
        ),
    )(x, x_mark_enc, *weights)

    # undo the transposed (feature, token) epilogue layout (XLA-side plumbing)
    x_mu = x_mu_t.reshape(steps, C, bt, T).transpose(0, 2, 3, 1).reshape(B, T, C)
    x_var = x_var_t.reshape(steps, C, bt, T).transpose(0, 2, 3, 1).reshape(B, T, C)
    llh = jnp.sum(stats[:, 0, 0])       # scalar, like torch.sum over all elements
    kl_loss = jnp.sum(stats[:, 0, 1])   # scalar
    output = y[..., None]               # (B, horizon, x_dim, 1) == unsqueeze(-1)
    return x_mu, x_var, llh, kl_loss, output


def _positional_embedding(T, d):
    pos = jnp.arange(T, dtype=jnp.float32)[:, None]
    i = jnp.arange(0, d, 2, dtype=jnp.float32)
    div = jnp.exp(-i * (math.log(10000.0) / d))
    ang = pos * div[None, :]
    pe = jnp.zeros((T, d), jnp.float32)
    pe = pe.at[:, 0::2].set(jnp.sin(ang))
    pe = pe.at[:, 1::2].set(jnp.cos(ang))
    return pe


def init_params(key, x_dim, h_dim, z_dim, mark_dim, win_len, horizon):
    ks = jax.random.split(key, 20)

    def nrm(k, shape, scale=0.1):
        return (scale * jax.random.normal(k, shape)).astype(jnp.float32)

    z = lambda *s: jnp.zeros(s, jnp.float32)
    return dict(
        wv0=nrm(ks[0], (x_dim, h_dim)),
        wv1=nrm(ks[1], (x_dim, h_dim)),
        wv2=nrm(ks[2], (x_dim, h_dim)),
        wtime=nrm(ks[3], (mark_dim, h_dim)),
        pos=_positional_embedding(win_len, h_dim),
        wq=nrm(ks[4], (h_dim, h_dim)), bq=z(1, h_dim),
        wk=nrm(ks[5], (h_dim, h_dim)), bk=z(1, h_dim),
        wv=nrm(ks[6], (h_dim, h_dim)), bv=z(1, h_dim),
        wo=nrm(ks[7], (h_dim, h_dim)), bo=z(1, h_dim),
        w1=nrm(ks[8], (h_dim, 2 * h_dim)), b1=z(1, 2 * h_dim),
        w2=nrm(ks[9], (2 * h_dim, h_dim)), b2=z(1, h_dim),
        wprior=nrm(ks[10], (h_dim, h_dim)), bprior=z(1, h_dim),
        wzpost_mu=nrm(ks[11], (h_dim, z_dim)), bzpost_mu=z(1, z_dim),
        wzpost_lv=nrm(ks[12], (h_dim, z_dim)), bzpost_lv=z(1, z_dim),
        wzprior_mu=nrm(ks[13], (h_dim, z_dim)), bzprior_mu=z(1, z_dim),
        wzprior_lv=nrm(ks[14], (h_dim, z_dim)), bzprior_lv=z(1, z_dim),
        wxm=nrm(ks[15], (h_dim, x_dim)), bxm=z(1, x_dim),
        wxlv=nrm(ks[16], (h_dim, x_dim)), bxlv=z(1, x_dim),
        wc=nrm(ks[17], (horizon, win_len)), bc=z(horizon, 1),
        wfc=nrm(ks[18], (h_dim, x_dim)), bfc=z(1, x_dim),
        rw=jnp.ones((1, x_dim), jnp.float32),   # RevIN affine_weight init
        rb=jnp.zeros((1, x_dim), jnp.float32),  # RevIN affine_bias init
    )


if __name__ == "__main__":
    # small shapes consistent with the module (win_len=T, x_dim=C, h_dim=H, ...)
    B, T, C = 2, 8, 12       # batch, win_len, x_dim
    H, Z, M = 16, 8, 4       # h_dim, z_dim, timeF-'h' mark features
    HORIZON = 4
    LABEL = 4

    key = jax.random.PRNGKey(0)
    k1, k2, k3, k4, kp = jax.random.split(key, 5)
    x = jax.random.normal(k1, (B, T, C), jnp.float32)
    x_mark_enc = jax.random.normal(k2, (B, T, M), jnp.float32)
    x_dec = jax.random.normal(k3, (B, LABEL + HORIZON, C), jnp.float32)
    x_mark_dec = jax.random.normal(k4, (B, LABEL + HORIZON, M), jnp.float32)

    params = init_params(kp, C, H, Z, M, T, HORIZON)

    outs = stacked_vagt_forward(x, x_mark_enc, x_dec, x_mark_dec, params)
    outs = jax.block_until_ready(outs)
    x_mu, x_var, llh, kl_loss, output = outs

    assert x_mu.shape == (B, T, C)
    assert x_var.shape == (B, T, C)
    assert llh.shape == () and kl_loss.shape == ()
    assert output.shape == (B, HORIZON, C, 1)
    assert bool(jnp.all(jnp.isfinite(output)))
    assert bool(jnp.all(jnp.isfinite(x_mu)))
    assert bool(jnp.all(x_var > 0))
    print("KERNEL_OK")
</pallas_src>

<mosaic_0001>
module attributes {stable_mosaic.version = 11 : i64} {
  func.func @stacked_vagt_kernel(%arg0: i32, %arg1: memref<1x8x12xf32, #tpu.memory_space<vmem>>, %arg2: memref<1x8x4xf32, #tpu.memory_space<vmem>>, %arg3: memref<12x48xbf16, #tpu.memory_space<vmem>>, %arg4: memref<4x16xbf16, #tpu.memory_space<vmem>>, %arg5: memref<8x16xf32, #tpu.memory_space<vmem>>, %arg6: memref<8x8xf32, #tpu.memory_space<vmem>>, %arg7: memref<8x8xf32, #tpu.memory_space<vmem>>, %arg8: memref<16x48xbf16, #tpu.memory_space<vmem>>, %arg9: memref<1x48xf32, #tpu.memory_space<vmem>>, %arg10: memref<16x16xbf16, #tpu.memory_space<vmem>>, %arg11: memref<1x16xf32, #tpu.memory_space<vmem>>, %arg12: memref<16x32xbf16, #tpu.memory_space<vmem>>, %arg13: memref<1x32xf32, #tpu.memory_space<vmem>>, %arg14: memref<32x16xbf16, #tpu.memory_space<vmem>>, %arg15: memref<1x16xf32, #tpu.memory_space<vmem>>, %arg16: memref<16x16xbf16, #tpu.memory_space<vmem>>, %arg17: memref<1x16xf32, #tpu.memory_space<vmem>>, %arg18: memref<40x16xbf16, #tpu.memory_space<vmem>>, %arg19: memref<40x1xf32, #tpu.memory_space<vmem>>, %arg20: memref<16x16xbf16, #tpu.memory_space<vmem>>, %arg21: memref<16x1xf32, #tpu.memory_space<vmem>>, %arg22: memref<16x12xbf16, #tpu.memory_space<vmem>>, %arg23: memref<4x8xf32, #tpu.memory_space<vmem>>, %arg24: memref<4x12xf32, #tpu.memory_space<vmem>>, %arg25: memref<1x12xf32, #tpu.memory_space<vmem>>, %arg26: memref<1x12xf32, #tpu.memory_space<vmem>>, %arg27: memref<1x12x8xf32, #tpu.memory_space<vmem>>, %arg28: memref<1x12x8xf32, #tpu.memory_space<vmem>>, %arg29: memref<1x4x12xf32, #tpu.memory_space<vmem>>, %arg30: memref<1x1x2xf32, #tpu.memory_space<vmem>>) attributes {dimension_semantics = [#tpu.dimension_semantics<parallel>], iteration_bounds = array<i64: 2>, scalar_prefetch = 0 : i64, scratch_operands = 0 : i64, tpu.core_type = #tpu.core_type<tc>, window_params = [{transform_indices = @transform_0, window_bounds = array<i64: 1, 8, 12>}, {transform_indices = @transform_1, window_bounds = array<i64: 1, 8, 4>}, {pipeline_mode = #tpu.pipeline_mode<synchronous>, transform_indices = @transform_2, window_bounds = array<i64: 12, 48>}, {pipeline_mode = #tpu.pipeline_mode<synchronous>, transform_indices = @transform_3, window_bounds = array<i64: 4, 16>}, {pipeline_mode = #tpu.pipeline_mode<synchronous>, transform_indices = @transform_4, window_bounds = array<i64: 8, 16>}, {pipeline_mode = #tpu.pipeline_mode<synchronous>, transform_indices = @transform_5, window_bounds = array<i64: 8, 8>}, {pipeline_mode = #tpu.pipeline_mode<synchronous>, transform_indices = @transform_6, window_bounds = array<i64: 8, 8>}, {pipeline_mode = #tpu.pipeline_mode<synchronous>, transform_indices = @transform_7, window_bounds = array<i64: 16, 48>}, {pipeline_mode = #tpu.pipeline_mode<synchronous>, transform_indices = @transform_8, window_bounds = array<i64: 1, 48>}, {pipeline_mode = #tpu.pipeline_mode<synchronous>, transform_indices = @transform_9, window_bounds = array<i64: 16, 16>}, {pipeline_mode = #tpu.pipeline_mode<synchronous>, transform_indices = @transform_10, window_bounds = array<i64: 1, 16>}, {pipeline_mode = #tpu.pipeline_mode<synchronous>, transform_indices = @transform_11, window_bounds = array<i64: 16, 32>}, {pipeline_mode = #tpu.pipeline_mode<synchronous>, transform_indices = @transform_12, window_bounds = array<i64: 1, 32>}, {pipeline_mode = #tpu.pipeline_mode<synchronous>, transform_indices = @transform_13, window_bounds = array<i64: 32, 16>}, {pipeline_mode = #tpu.pipeline_mode<synchronous>, transform_indices = @transform_14, window_bounds = array<i64: 1, 16>}, {pipeline_mode = #tpu.pipeline_mode<synchronous>, transform_indices = @transform_15, window_bounds = array<i64: 16, 16>}, {pipeline_mode = #tpu.pipeline_mode<synchronous>, transform_indices = @transform_16, window_bounds = array<i64: 1, 16>}, {pipeline_mode = #tpu.pipeline_mode<synchronous>, transform_indices = @transform_17, window_bounds = array<i64: 40, 16>}, {pipeline_mode = #tpu.pipeline_mode<synchronous>, transform_indices = @transform_18, window_bounds = array<i64: 40, 1>}, {pipeline_mode = #tpu.pipeline_mode<synchronous>, transform_indices = @transform_19, window_bounds = array<i64: 16, 16>}, {pipeline_mode = #tpu.pipeline_mode<synchronous>, transform_indices = @transform_20, window_bounds = array<i64: 16, 1>}, {pipeline_mode = #tpu.pipeline_mode<synchronous>, transform_indices = @transform_21, window_bounds = array<i64: 16, 12>}, {pipeline_mode = #tpu.pipeline_mode<synchronous>, transform_indices = @transform_22, window_bounds = array<i64: 4, 8>}, {pipeline_mode = #tpu.pipeline_mode<synchronous>, transform_indices = @transform_23, window_bounds = array<i64: 4, 12>}, {pipeline_mode = #tpu.pipeline_mode<synchronous>, transform_indices = @transform_24, window_bounds = array<i64: 1, 12>}, {pipeline_mode = #tpu.pipeline_mode<synchronous>, transform_indices = @transform_25, window_bounds = array<i64: 1, 12>}, {transform_indices = @transform_26, window_bounds = array<i64: 1, 12, 8>}, {transform_indices = @transform_27, window_bounds = array<i64: 1, 12, 8>}, {transform_indices = @transform_28, window_bounds = array<i64: 1, 4, 12>}, {transform_indices = @transform_29, window_bounds = array<i64: 1, 1, 2>}]} {
    %c0 = arith.constant 0 : index
    %c0_0 = arith.constant 0 : index
    %c0_1 = arith.constant 0 : index
    %0 = vector.load %arg1[%c0, %c0_0, %c0_1] : memref<1x8x12xf32, #tpu.memory_space<vmem>>, vector<1x8x12xf32>
    %cst = arith.constant dense<0.000000e+00> : vector<1x12xf32>
    %1 = vector.multi_reduction <add>, %0, %cst [1] : vector<1x8x12xf32> to vector<1x12xf32>
    %2 = vector.shape_cast %1 : vector<1x12xf32> to vector<1x1x12xf32>
    %cst_2 = arith.constant 8.000000e+00 : f32
    %3 = vector.broadcast %cst_2 : f32 to vector<1x1x12xf32>
    %4 = arith.divf %2, %3 : vector<1x1x12xf32>
    %5 = vector.broadcast %4 : vector<1x1x12xf32> to vector<1x8x12xf32>
    %6 = arith.subf %0, %5 : vector<1x8x12xf32>
    %7 = arith.mulf %6, %6 : vector<1x8x12xf32>
    %cst_3 = arith.constant dense<0.000000e+00> : vector<1x12xf32>
    %8 = vector.multi_reduction <add>, %7, %cst_3 [1] : vector<1x8x12xf32> to vector<1x12xf32>
    %9 = vector.shape_cast %8 : vector<1x12xf32> to vector<1x1x12xf32>
    %cst_4 = arith.constant 8.000000e+00 : f32
    %10 = vector.broadcast %cst_4 : f32 to vector<1x1x12xf32>
    %11 = arith.divf %9, %10 : vector<1x1x12xf32>
    %cst_5 = arith.constant 9.99999974E-6 : f32
    %12 = vector.broadcast %cst_5 : f32 to vector<1x1x12xf32>
    %13 = arith.addf %11, %12 : vector<1x1x12xf32>
    %14 = math.sqrt %13 : vector<1x1x12xf32>
    %cst_6 = arith.constant 9.99999974E-6 : f32
    %15 = vector.broadcast %cst_6 : f32 to vector<1x1x12xf32>
    %16 = arith.addf %11, %15 : vector<1x1x12xf32>
    %17 = math.rsqrt %16 : vector<1x1x12xf32>
    %c0_7 = arith.constant 0 : index
    %c0_8 = arith.constant 0 : index
    %18 = vector.load %arg25[%c0_7, %c0_8] : memref<1x12xf32, #tpu.memory_space<vmem>>, vector<1x12xf32>
    %19 = vector.shape_cast %18 : vector<1x12xf32> to vector<1x1x12xf32>
    %20 = arith.mulf %17, %19 : vector<1x1x12xf32>
    %c0_9 = arith.constant 0 : index
    %c0_10 = arith.constant 0 : index
    %21 = vector.load %arg26[%c0_9, %c0_10] : memref<1x12xf32, #tpu.memory_space<vmem>>, vector<1x12xf32>
    %22 = arith.mulf %4, %20 : vector<1x1x12xf32>
    %23 = vector.shape_cast %21 : vector<1x12xf32> to vector<1x1x12xf32>
    %24 = arith.subf %23, %22 : vector<1x1x12xf32>
    %25 = vector.broadcast %20 : vector<1x1x12xf32> to vector<1x8x12xf32>
    %26 = arith.mulf %0, %25 : vector<1x8x12xf32>
    %27 = vector.broadcast %24 : vector<1x1x12xf32> to vector<1x8x12xf32>
    %28 = arith.addf %26, %27 : vector<1x8x12xf32>
    %c0_11 = arith.constant 0 : index
    %c0_12 = arith.constant 0 : index
    %c0_13 = arith.constant 0 : index
    %29 = vector.load %arg2[%c0_11, %c0_12, %c0_13] : memref<1x8x4xf32, #tpu.memory_space<vmem>>, vector<1x8x4xf32>
    %30 = vector.shape_cast %29 : vector<1x8x4xf32> to vector<8x4xf32>
    %31 = arith.truncf %30 : vector<8x4xf32> to vector<8x4xbf16>
    %c0_14 = arith.constant 0 : index
    %c0_15 = arith.constant 0 : index
    %32 = vector.load %arg4[%c0_14, %c0_15] : memref<4x16xbf16, #tpu.memory_space<vmem>>, vector<4x16xbf16>
    %cst_16 = arith.constant dense<0.000000e+00> : vector<8x16xf32>
    %33 = tpu.matmul %31, %32, %cst_16 {dimension_numbers = #tpu.dot_dimension_numbers<[1], [0], [0], [1], [0, 0, 1, 1], [], []>} : vector<8x4xbf16>, vector<4x16xbf16>, vector<8x16xf32> -> vector<8x16xf32>
    %c0_17 = arith.constant 0 : index
    %c0_18 = arith.constant 0 : index
    %34 = vector.load %arg5[%c0_17, %c0_18] : memref<8x16xf32, #tpu.memory_space<vmem>>, vector<8x16xf32>
    %35 = vector.shape_cast %34 : vector<8x16xf32> to vector<1x8x16xf32>
    %36 = vector.shape_cast %35 : vector<1x8x16xf32> to vector<8x16xf32>
    %37 = arith.addf %33, %36 : vector<8x16xf32>
    %c0_19 = arith.constant 0 : index
    %c0_20 = arith.constant 0 : index
    %38 = vector.load %arg6[%c0_19, %c0_20] : memref<8x8xf32, #tpu.memory_space<vmem>>, vector<8x8xf32>
    %39 = vector.shape_cast %38 : vector<8x8xf32> to vector<1x8x8xf32>
    %c0_21 = arith.constant 0 : index
    %c0_22 = arith.constant 0 : index
    %40 = vector.load %arg7[%c0_21, %c0_22] : memref<8x8xf32, #tpu.memory_space<vmem>>, vector<8x8xf32>
    %41 = vector.shape_cast %40 : vector<8x8xf32> to vector<1x8x8xf32>
    %42 = vector.shape_cast %28 : vector<1x8x12xf32> to vector<8x12xf32>
    %43 = arith.truncf %42 : vector<8x12xf32> to vector<8x12xbf16>
    %c0_23 = arith.constant 0 : index
    %c0_24 = arith.constant 0 : index
    %44 = vector.load %arg3[%c0_23, %c0_24] : memref<12x48xbf16, #tpu.memory_space<vmem>>, vector<12x48xbf16>
    %cst_25 = arith.constant dense<0.000000e+00> : vector<8x48xf32>
    %45 = tpu.matmul %43, %44, %cst_25 {dimension_numbers = #tpu.dot_dimension_numbers<[1], [0], [0], [1], [0, 0, 1, 1], [], []>} : vector<8x12xbf16>, vector<12x48xbf16>, vector<8x48xf32> -> vector<8x48xf32>
    %46 = vector.shape_cast %45 : vector<8x48xf32> to vector<1x8x48xf32>
    %47 = vector.extract_strided_slice %46 {offsets = [0, 0, 0], sizes = [1, 8, 16], strides = [1, 1, 1]} : vector<1x8x48xf32> to vector<1x8x16xf32>
    %48 = vector.extract_strided_slice %46 {offsets = [0, 0, 16], sizes = [1, 8, 16], strides = [1, 1, 1]} : vector<1x8x48xf32> to vector<1x8x16xf32>
    %49 = vector.extract_strided_slice %46 {offsets = [0, 0, 32], sizes = [1, 8, 16], strides = [1, 1, 1]} : vector<1x8x48xf32> to vector<1x8x16xf32>
    "tpu.trace_start"() <{level = 10 : i32, message = "bst,bth->bsh"}> : () -> ()
    %cst_26 = arith.constant dense<0.000000e+00> : vector<1x8x16xf32>
    %50 = tpu.matmul %39, %47, %cst_26 {dimension_numbers = #tpu.dot_dimension_numbers<[2], [1], [1], [2], [0, 0, 0, 1, 1, 2], [0], [0]>} : vector<1x8x8xf32>, vector<1x8x16xf32>, vector<1x8x16xf32> -> vector<1x8x16xf32>
    "tpu.trace_stop"() : () -> ()
    %51 = arith.addf %50, %48 : vector<1x8x16xf32>
    "tpu.trace_start"() <{level = 10 : i32, message = "bst,bth->bsh"}> : () -> ()
    %cst_27 = arith.constant dense<0.000000e+00> : vector<1x8x16xf32>
    %52 = tpu.matmul %41, %49, %cst_27 {dimension_numbers = #tpu.dot_dimension_numbers<[2], [1], [1], [2], [0, 0, 0, 1, 1, 2], [0], [0]>} : vector<1x8x8xf32>, vector<1x8x16xf32>, vector<1x8x16xf32> -> vector<1x8x16xf32>
    "tpu.trace_stop"() : () -> ()
    %53 = arith.addf %51, %52 : vector<1x8x16xf32>
    %54 = vector.shape_cast %53 : vector<1x8x16xf32> to vector<8x16xf32>
    %55 = arith.addf %54, %37 : vector<8x16xf32>
    %56 = vector.shape_cast %0 : vector<1x8x12xf32> to vector<8x12xf32>
    %57 = arith.truncf %56 : vector<8x12xf32> to vector<8x12xbf16>
    %c0_28 = arith.constant 0 : index
    %c0_29 = arith.constant 0 : index
    %58 = vector.load %arg3[%c0_28, %c0_29] : memref<12x48xbf16, #tpu.memory_space<vmem>>, vector<12x48xbf16>
    %cst_30 = arith.constant dense<0.000000e+00> : vector<8x48xf32>
    %59 = tpu.matmul %57, %58, %cst_30 {dimension_numbers = #tpu.dot_dimension_numbers<[1], [0], [0], [1], [0, 0, 1, 1], [], []>} : vector<8x12xbf16>, vector<12x48xbf16>, vector<8x48xf32> -> vector<8x48xf32>
    %60 = vector.shape_cast %59 : vector<8x48xf32> to vector<1x8x48xf32>
    %61 = vector.extract_strided_slice %60 {offsets = [0, 0, 0], sizes = [1, 8, 16], strides = [1, 1, 1]} : vector<1x8x48xf32> to vector<1x8x16xf32>
    %62 = vector.extract_strided_slice %60 {offsets = [0, 0, 16], sizes = [1, 8, 16], strides = [1, 1, 1]} : vector<1x8x48xf32> to vector<1x8x16xf32>
    %63 = vector.extract_strided_slice %60 {offsets = [0, 0, 32], sizes = [1, 8, 16], strides = [1, 1, 1]} : vector<1x8x48xf32> to vector<1x8x16xf32>
    "tpu.trace_start"() <{level = 10 : i32, message = "bst,bth->bsh"}> : () -> ()
    %cst_31 = arith.constant dense<0.000000e+00> : vector<1x8x16xf32>
    %64 = tpu.matmul %39, %61, %cst_31 {dimension_numbers = #tpu.dot_dimension_numbers<[2], [1], [1], [2], [0, 0, 0, 1, 1, 2], [0], [0]>} : vector<1x8x8xf32>, vector<1x8x16xf32>, vector<1x8x16xf32> -> vector<1x8x16xf32>
    "tpu.trace_stop"() : () -> ()
    %65 = arith.addf %64, %62 : vector<1x8x16xf32>
    "tpu.trace_start"() <{level = 10 : i32, message = "bst,bth->bsh"}> : () -> ()
    %cst_32 = arith.constant dense<0.000000e+00> : vector<1x8x16xf32>
    %66 = tpu.matmul %41, %63, %cst_32 {dimension_numbers = #tpu.dot_dimension_numbers<[2], [1], [1], [2], [0, 0, 0, 1, 1, 2], [0], [0]>} : vector<1x8x8xf32>, vector<1x8x16xf32>, vector<1x8x16xf32> -> vector<1x8x16xf32>
    "tpu.trace_stop"() : () -> ()
    %67 = arith.addf %65, %66 : vector<1x8x16xf32>
    %68 = vector.shape_cast %67 : vector<1x8x16xf32> to vector<8x16xf32>
    %69 = arith.addf %68, %37 : vector<8x16xf32>
    %70 = arith.truncf %55 : vector<8x16xf32> to vector<8x16xbf16>
    %c0_33 = arith.constant 0 : index
    %c0_34 = arith.constant 0 : index
    %71 = vector.load %arg8[%c0_33, %c0_34] : memref<16x48xbf16, #tpu.memory_space<vmem>>, vector<16x48xbf16>
    %cst_35 = arith.constant dense<0.000000e+00> : vector<8x48xf32>
    %72 = tpu.matmul %70, %71, %cst_35 {dimension_numbers = #tpu.dot_dimension_numbers<[1], [0], [0], [1], [0, 0, 1, 1], [], []>} : vector<8x16xbf16>, vector<16x48xbf16>, vector<8x48xf32> -> vector<8x48xf32>
    %c0_36 = arith.constant 0 : index
    %c0_37 = arith.constant 0 : index
    %73 = vector.load %arg9[%c0_36, %c0_37] : memref<1x48xf32, #tpu.memory_space<vmem>>, vector<1x48xf32>
    %74 = vector.broadcast %73 : vector<1x48xf32> to vector<8x48xf32>
    %75 = arith.addf %72, %74 : vector<8x48xf32>
    %76 = arith.truncf %75 : vector<8x48xf32> to vector<8x48xbf16>
    %77 = vector.extract_strided_slice %76 {offsets = [0, 0], sizes = [8, 16], strides = [1, 1]} : vector<8x48xbf16> to vector<8x16xbf16>
    %78 = vector.shape_cast %77 : vector<8x16xbf16> to vector<1x8x16xbf16>
    %79 = vector.extract_strided_slice %76 {offsets = [0, 16], sizes = [8, 16], strides = [1, 1]} : vector<8x48xbf16> to vector<8x16xbf16>
    %80 = vector.shape_cast %79 : vector<8x16xbf16> to vector<1x8x16xbf16>
    %81 = vector.extract_strided_slice %76 {offsets = [0, 32], sizes = [8, 16], strides = [1, 1]} : vector<8x48xbf16> to vector<8x16xbf16>
    %82 = vector.shape_cast %81 : vector<8x16xbf16> to vector<1x8x16xbf16>
    "tpu.trace_start"() <{level = 10 : i32, message = "bqd,bkd->bqk"}> : () -> ()
    %cst_38 = arith.constant dense<0.000000e+00> : vector<1x8x8xf32>
    %83 = tpu.matmul %78, %80, %cst_38 {dimension_numbers = #tpu.dot_dimension_numbers<[2], [2], [1], [1], [0, 0, 0, 1, 1, 1], [0], [0]>} : vector<1x8x16xbf16>, vector<1x8x16xbf16>, vector<1x8x8xf32> -> vector<1x8x8xf32>
    "tpu.trace_stop"() : () -> ()
    %cst_39 = arith.constant 2.500000e-01 : f32
    %84 = vector.broadcast %cst_39 : f32 to vector<1x8x8xf32>
    %85 = arith.mulf %83, %84 : vector<1x8x8xf32>
    %cst_40 = arith.constant dense<0xFF800000> : vector<1x8xf32>
    %86 = vector.multi_reduction <maximumf>, %85, %cst_40 [2] : vector<1x8x8xf32> to vector<1x8xf32>
    %87 = vector.shape_cast %86 : vector<1x8xf32> to vector<1x8x1xf32>
    %88 = vector.broadcast %87 : vector<1x8x1xf32> to vector<1x8x8xf32>
    %89 = arith.subf %85, %88 : vector<1x8x8xf32>
    %90 = math.exp %89 : vector<1x8x8xf32>
    %cst_41 = arith.constant dense<0.000000e+00> : vector<1x8xf32>
    %91 = vector.multi_reduction <add>, %90, %cst_41 [2] : vector<1x8x8xf32> to vector<1x8xf32>
    %92 = vector.shape_cast %91 : vector<1x8xf32> to vector<1x8x1xf32>
    %93 = tpu.reciprocal %92 {approx = true} : vector<1x8x1xf32> -> vector<1x8x1xf32>
    %94 = vector.broadcast %93 : vector<1x8x1xf32> to vector<1x8x8xf32>
    %95 = arith.mulf %90, %94 : vector<1x8x8xf32>
    %96 = arith.truncf %95 : vector<1x8x8xf32> to vector<1x8x8xbf16>
    "tpu.trace_start"() <{level = 10 : i32, message = "bqk,bkd->bqd"}> : () -> ()
    %cst_42 = arith.constant dense<0.000000e+00> : vector<1x8x16xf32>
    %97 = tpu.matmul %96, %82, %cst_42 {dimension_numbers = #tpu.dot_dimension_numbers<[2], [1], [1], [2], [0, 0, 0, 1, 1, 2], [0], [0]>} : vector<1x8x8xbf16>, vector<1x8x16xbf16>, vector<1x8x16xf32> -> vector<1x8x16xf32>
    "tpu.trace_stop"() : () -> ()
    %98 = vector.shape_cast %97 : vector<1x8x16xf32> to vector<8x16xf32>
    %99 = arith.truncf %98 : vector<8x16xf32> to vector<8x16xbf16>
    %c0_43 = arith.constant 0 : index
    %c0_44 = arith.constant 0 : index
    %100 = vector.load %arg10[%c0_43, %c0_44] : memref<16x16xbf16, #tpu.memory_space<vmem>>, vector<16x16xbf16>
    %cst_45 = arith.constant dense<0.000000e+00> : vector<8x16xf32>
    %101 = tpu.matmul %99, %100, %cst_45 {dimension_numbers = #tpu.dot_dimension_numbers<[1], [0], [0], [1], [0, 0, 1, 1], [], []>} : vector<8x16xbf16>, vector<16x16xbf16>, vector<8x16xf32> -> vector<8x16xf32>
    %102 = arith.addf %55, %101 : vector<8x16xf32>
    %c0_46 = arith.constant 0 : index
    %c0_47 = arith.constant 0 : index
    %103 = vector.load %arg11[%c0_46, %c0_47] : memref<1x16xf32, #tpu.memory_space<vmem>>, vector<1x16xf32>
    %104 = vector.broadcast %103 : vector<1x16xf32> to vector<8x16xf32>
    %105 = arith.addf %102, %104 : vector<8x16xf32>
    %106 = arith.truncf %105 : vector<8x16xf32> to vector<8x16xbf16>
    %c0_48 = arith.constant 0 : index
    %c0_49 = arith.constant 0 : index
    %107 = vector.load %arg12[%c0_48, %c0_49] : memref<16x32xbf16, #tpu.memory_space<vmem>>, vector<16x32xbf16>
    %cst_50 = arith.constant dense<0.000000e+00> : vector<8x32xf32>
    %108 = tpu.matmul %106, %107, %cst_50 {dimension_numbers = #tpu.dot_dimension_numbers<[1], [0], [0], [1], [0, 0, 1, 1], [], []>} : vector<8x16xbf16>, vector<16x32xbf16>, vector<8x32xf32> -> vector<8x32xf32>
    %c0_51 = arith.constant 0 : index
    %c0_52 = arith.constant 0 : index
    %109 = vector.load %arg13[%c0_51, %c0_52] : memref<1x32xf32, #tpu.memory_space<vmem>>, vector<1x32xf32>
    %110 = vector.broadcast %109 : vector<1x32xf32> to vector<8x32xf32>
    %111 = arith.addf %108, %110 : vector<8x32xf32>
    %cst_53 = arith.constant 0.000000e+00 : f32
    %112 = vector.broadcast %cst_53 : f32 to vector<8x32xf32>
    %113 = arith.maximumf %111, %112 : vector<8x32xf32>
    %114 = arith.truncf %113 : vector<8x32xf32> to vector<8x32xbf16>
    %c0_54 = arith.constant 0 : index
    %c0_55 = arith.constant 0 : index
    %115 = vector.load %arg14[%c0_54, %c0_55] : memref<32x16xbf16, #tpu.memory_space<vmem>>, vector<32x16xbf16>
    %cst_56 = arith.constant dense<0.000000e+00> : vector<8x16xf32>
    %116 = tpu.matmul %114, %115, %cst_56 {dimension_numbers = #tpu.dot_dimension_numbers<[1], [0], [0], [1], [0, 0, 1, 1], [], []>} : vector<8x32xbf16>, vector<32x16xbf16>, vector<8x16xf32> -> vector<8x16xf32>
    %117 = arith.addf %105, %116 : vector<8x16xf32>
    %c0_57 = arith.constant 0 : index
    %c0_58 = arith.constant 0 : index
    %118 = vector.load %arg15[%c0_57, %c0_58] : memref<1x16xf32, #tpu.memory_space<vmem>>, vector<1x16xf32>
    %119 = vector.broadcast %118 : vector<1x16xf32> to vector<8x16xf32>
    %120 = arith.addf %117, %119 : vector<8x16xf32>
    %121 = arith.truncf %69 : vector<8x16xf32> to vector<8x16xbf16>
    %c0_59 = arith.constant 0 : index
    %c0_60 = arith.constant 0 : index
    %122 = vector.load %arg16[%c0_59, %c0_60] : memref<16x16xbf16, #tpu.memory_space<vmem>>, vector<16x16xbf16>
    %cst_61 = arith.constant dense<0.000000e+00> : vector<8x16xf32>
    %123 = tpu.matmul %121, %122, %cst_61 {dimension_numbers = #tpu.dot_dimension_numbers<[1], [0], [0], [1], [0, 0, 1, 1], [], []>} : vector<8x16xbf16>, vector<16x16xbf16>, vector<8x16xf32> -> vector<8x16xf32>
    %c0_62 = arith.constant 0 : index
    %c0_63 = arith.constant 0 : index
    %124 = vector.load %arg17[%c0_62, %c0_63] : memref<1x16xf32, #tpu.memory_space<vmem>>, vector<1x16xf32>
    %125 = vector.broadcast %124 : vector<1x16xf32> to vector<8x16xf32>
    %126 = arith.addf %123, %125 : vector<8x16xf32>
    %cst_64 = arith.constant 0.000000e+00 : f32
    %127 = vector.broadcast %cst_64 : f32 to vector<8x16xf32>
    %128 = arith.maximumf %126, %127 : vector<8x16xf32>
    %129 = arith.truncf %120 : vector<8x16xf32> to vector<8x16xbf16>
    %130 = arith.truncf %128 : vector<8x16xf32> to vector<8x16xbf16>
    %c0_65 = arith.constant 0 : index
    %c0_66 = arith.constant 0 : index
    %131 = vector.load %arg18[%c0_65, %c0_66] : memref<40x16xbf16, #tpu.memory_space<vmem>>, vector<40x16xbf16>
    "tpu.trace_start"() <{level = 10 : i32, message = "fh,nh->fn"}> : () -> ()
    %cst_67 = arith.constant dense<0.000000e+00> : vector<40x8xf32>
    %132 = tpu.matmul %131, %129, %cst_67 {dimension_numbers = #tpu.dot_dimension_numbers<[1], [1], [0], [0], [0, 0, 1, 0], [], []>} : vector<40x16xbf16>, vector<8x16xbf16>, vector<40x8xf32> -> vector<40x8xf32>
    "tpu.trace_stop"() : () -> ()
    %c0_68 = arith.constant 0 : index
    %c0_69 = arith.constant 0 : index
    %133 = vector.load %arg19[%c0_68, %c0_69] : memref<40x1xf32, #tpu.memory_space<vmem>>, vector<40x1xf32>
    %134 = vector.broadcast %133 : vector<40x1xf32> to vector<40x8xf32>
    %135 = arith.addf %132, %134 : vector<40x8xf32>
    %c0_70 = arith.constant 0 : index
    %c0_71 = arith.constant 0 : index
    %136 = vector.load %arg20[%c0_70, %c0_71] : memref<16x16xbf16, #tpu.memory_space<vmem>>, vector<16x16xbf16>
    "tpu.trace_start"() <{level = 10 : i32, message = "fh,nh->fn"}> : () -> ()
    %cst_72 = arith.constant dense<0.000000e+00> : vector<16x8xf32>
    %137 = tpu.matmul %136, %130, %cst_72 {dimension_numbers = #tpu.dot_dimension_numbers<[1], [1], [0], [0], [0, 0, 1, 0], [], []>} : vector<16x16xbf16>, vector<8x16xbf16>, vector<16x8xf32> -> vector<16x8xf32>
    "tpu.trace_stop"() : () -> ()
    %c0_73 = arith.constant 0 : index
    %c0_74 = arith.constant 0 : index
    %138 = vector.load %arg21[%c0_73, %c0_74] : memref<16x1xf32, #tpu.memory_space<vmem>>, vector<16x1xf32>
    %139 = vector.broadcast %138 : vector<16x1xf32> to vector<16x8xf32>
    %140 = arith.addf %137, %139 : vector<16x8xf32>
    %141 = vector.extract_strided_slice %135 {offsets = [0, 0], sizes = [8, 8], strides = [1, 1]} : vector<40x8xf32> to vector<8x8xf32>
    %142 = vector.extract_strided_slice %135 {offsets = [8, 0], sizes = [8, 8], strides = [1, 1]} : vector<40x8xf32> to vector<8x8xf32>
    %143 = vector.extract_strided_slice %135 {offsets = [16, 0], sizes = [12, 8], strides = [1, 1]} : vector<40x8xf32> to vector<12x8xf32>
    %144 = vector.extract_strided_slice %135 {offsets = [28, 0], sizes = [12, 8], strides = [1, 1]} : vector<40x8xf32> to vector<12x8xf32>
    %cst_75 = arith.constant 0.000000e+00 : f32
    %145 = vector.broadcast %cst_75 : f32 to vector<12x8xf32>
    %146 = arith.maximumf %144, %145 : vector<12x8xf32>
    %147 = vector.broadcast %cst_75 : f32 to vector<12x8xf32>
    %148 = arith.subf %144, %147 : vector<12x8xf32>
    %149 = arith.cmpf one, %148, %148 : vector<12x8xf32>
    %150 = vector.broadcast %cst_75 : f32 to vector<12x8xf32>
    %151 = arith.addf %144, %150 : vector<12x8xf32>
    %152 = math.absf %148 : vector<12x8xf32>
    %cst_76 = arith.constant 0.000000e+00 : f32
    %153 = vector.broadcast %cst_76 : f32 to vector<12x8xf32>
    %154 = arith.subf %153, %152 : vector<12x8xf32>
    %155 = math.exp %154 : vector<12x8xf32>
    %156 = math.log1p %155 : vector<12x8xf32>
    %157 = arith.addf %146, %156 : vector<12x8xf32>
    %158 = arith.select %149, %151, %157 : vector<12x8xi1>, vector<12x8xf32>
    %cst_77 = arith.constant 9.99999974E-5 : f32
    %159 = vector.broadcast %cst_77 : f32 to vector<12x8xf32>
    %160 = arith.addf %158, %159 : vector<12x8xf32>
    %161 = vector.extract_strided_slice %140 {offsets = [0, 0], sizes = [8, 8], strides = [1, 1]} : vector<16x8xf32> to vector<8x8xf32>
    %162 = vector.extract_strided_slice %140 {offsets = [8, 0], sizes = [8, 8], strides = [1, 1]} : vector<16x8xf32> to vector<8x8xf32>
    %163 = tpu.iota {dimensions = array<i32: 0>} : vector<12x12xi32>
    %164 = tpu.iota {dimensions = array<i32: 1>} : vector<12x12xi32>
    %165 = arith.cmpi eq, %163, %164 : vector<12x12xi32>
    %166 = arith.extui %165 : vector<12x12xi1> to vector<12x12xi32>
    %167 = arith.sitofp %166 : vector<12x12xi32> to vector<12x12xf32>
    %168 = vector.shape_cast %0 : vector<1x8x12xf32> to vector<8x12xf32>
    "tpu.trace_start"() <{level = 10 : i32, message = "ck,nk->cn"}> : () -> ()
    %cst_78 = arith.constant dense<0.000000e+00> : vector<12x8xf32>
    %169 = tpu.matmul %167, %168, %cst_78 {dimension_numbers = #tpu.dot_dimension_numbers<[1], [1], [0], [0], [0, 0, 1, 0], [], []>} : vector<12x12xf32>, vector<8x12xf32>, vector<12x8xf32> -> vector<12x8xf32>
    "tpu.trace_stop"() : () -> ()
    %170 = arith.subf %169, %143 : vector<12x8xf32>
    %171 = tpu.reciprocal %160 {approx = true} : vector<12x8xf32> -> vector<12x8xf32>
    %172 = math.log %160 : vector<12x8xf32>
    %cst_79 = arith.constant 1.83787704 : f32
    %173 = vector.broadcast %cst_79 : f32 to vector<12x8xf32>
    %174 = arith.addf %173, %172 : vector<12x8xf32>
    %175 = arith.mulf %170, %170 : vector<12x8xf32>
    %176 = arith.mulf %175, %171 : vector<12x8xf32>
    %177 = arith.addf %174, %176 : vector<12x8xf32>
    %178 = vector.shape_cast %177 : vector<12x8xf32> to vector<1x12x8xf32>
    %cst_80 = arith.constant dense<0.000000e+00> : vector<1xf32>
    %179 = vector.multi_reduction <add>, %178, %cst_80 [1, 2] : vector<1x12x8xf32> to vector<1xf32>
    %180 = vector.shape_cast %179 : vector<1xf32> to vector<1x1x1xf32>
    %181 = vector.extract %180[0, 0, 0] : f32 from vector<1x1x1xf32>
    %cst_81 = arith.constant -5.000000e-01 : f32
    %182 = arith.mulf %cst_81, %181 : f32
    %183 = arith.subf %162, %142 : vector<8x8xf32>
    %184 = arith.subf %142, %162 : vector<8x8xf32>
    %185 = math.exp %184 : vector<8x8xf32>
    %186 = arith.addf %183, %185 : vector<8x8xf32>
    %187 = arith.subf %141, %161 : vector<8x8xf32>
    %188 = arith.mulf %187, %187 : vector<8x8xf32>
    %cst_82 = arith.constant 0.000000e+00 : f32
    %189 = vector.broadcast %cst_82 : f32 to vector<8x8xf32>
    %190 = arith.subf %189, %162 : vector<8x8xf32>
    %191 = math.exp %190 : vector<8x8xf32>
    %192 = arith.mulf %188, %191 : vector<8x8xf32>
    %193 = arith.addf %186, %192 : vector<8x8xf32>
    %cst_83 = arith.constant 1.000000e+00 : f32
    %194 = vector.broadcast %cst_83 : f32 to vector<8x8xf32>
    %195 = arith.subf %193, %194 : vector<8x8xf32>
    %196 = vector.shape_cast %195 : vector<8x8xf32> to vector<1x8x8xf32>
    %cst_84 = arith.constant dense<0.000000e+00> : vector<1xf32>
    %197 = vector.multi_reduction <add>, %196, %cst_84 [1, 2] : vector<1x8x8xf32> to vector<1xf32>
    %198 = vector.shape_cast %197 : vector<1xf32> to vector<1x1x1xf32>
    %199 = vector.extract %198[0, 0, 0] : f32 from vector<1x1x1xf32>
    %cst_85 = arith.constant 5.000000e-01 : f32
    %200 = arith.mulf %cst_85, %199 : f32
    %c0_86 = arith.constant 0 : index
    %c0_87 = arith.constant 0 : index
    %201 = vector.load %arg22[%c0_86, %c0_87] : memref<16x12xbf16, #tpu.memory_space<vmem>>, vector<16x12xbf16>
    %cst_88 = arith.constant dense<0.000000e+00> : vector<8x12xf32>
    %202 = tpu.matmul %129, %201, %cst_88 {dimension_numbers = #tpu.dot_dimension_numbers<[1], [0], [0], [1], [0, 0, 1, 1], [], []>} : vector<8x16xbf16>, vector<16x12xbf16>, vector<8x12xf32> -> vector<8x12xf32>
    %203 = vector.shape_cast %202 : vector<8x12xf32> to vector<1x8x12xf32>
    %c0_89 = arith.constant 0 : index
    %c0_90 = arith.constant 0 : index
    %204 = vector.load %arg23[%c0_89, %c0_90] : memref<4x8xf32, #tpu.memory_space<vmem>>, vector<4x8xf32>
    %205 = vector.shape_cast %204 : vector<4x8xf32> to vector<1x4x8xf32>
    "tpu.trace_start"() <{level = 10 : i32, message = "bot,btc->boc"}> : () -> ()
    %cst_91 = arith.constant dense<0.000000e+00> : vector<1x4x12xf32>
    %206 = tpu.matmul %205, %203, %cst_91 {dimension_numbers = #tpu.dot_dimension_numbers<[2], [1], [1], [2], [0, 0, 0, 1, 1, 2], [0], [0]>} : vector<1x4x8xf32>, vector<1x8x12xf32>, vector<1x4x12xf32> -> vector<1x4x12xf32>
    "tpu.trace_stop"() : () -> ()
    %c0_92 = arith.constant 0 : index
    %c0_93 = arith.constant 0 : index
    %207 = vector.load %arg24[%c0_92, %c0_93] : memref<4x12xf32, #tpu.memory_space<vmem>>, vector<4x12xf32>
    %208 = vector.shape_cast %207 : vector<4x12xf32> to vector<1x4x12xf32>
    %209 = arith.addf %206, %208 : vector<1x4x12xf32>
    %c0_94 = arith.constant 0 : index
    %c0_95 = arith.constant 0 : index
    %210 = vector.load %arg25[%c0_94, %c0_95] : memref<1x12xf32, #tpu.memory_space<vmem>>, vector<1x12xf32>
    %cst_96 = arith.constant 1.000000e-10 : f32
    %211 = vector.broadcast %cst_96 : f32 to vector<1x12xf32>
    %212 = arith.addf %210, %211 : vector<1x12xf32>
    %213 = tpu.reciprocal %212 : vector<1x12xf32> -> vector<1x12xf32>
    %c0_97 = arith.constant 0 : index
    %c0_98 = arith.constant 0 : index
    %214 = vector.load %arg26[%c0_97, %c0_98] : memref<1x12xf32, #tpu.memory_space<vmem>>, vector<1x12xf32>
    %215 = vector.shape_cast %214 : vector<1x12xf32> to vector<1x1x12xf32>
    %216 = vector.broadcast %215 : vector<1x1x12xf32> to vector<1x4x12xf32>
    %217 = arith.subf %209, %216 : vector<1x4x12xf32>
    %218 = vector.shape_cast %213 : vector<1x12xf32> to vector<1x1x12xf32>
    %219 = vector.broadcast %218 : vector<1x1x12xf32> to vector<1x4x12xf32>
    %220 = arith.mulf %217, %219 : vector<1x4x12xf32>
    %221 = vector.broadcast %14 : vector<1x1x12xf32> to vector<1x4x12xf32>
    %222 = arith.mulf %220, %221 : vector<1x4x12xf32>
    %223 = vector.broadcast %4 : vector<1x1x12xf32> to vector<1x4x12xf32>
    %224 = arith.addf %222, %223 : vector<1x4x12xf32>
    %c0_99 = arith.constant 0 : index
    %c0_100 = arith.constant 0 : index
    %c0_101 = arith.constant 0 : index
    %225 = vector.load %arg27[%c0_99, %c0_100, %c0_101] : memref<1x12x8xf32, #tpu.memory_space<vmem>>, vector<1x12x8xf32>
    %226 = vector.shape_cast %225 : vector<1x12x8xf32> to vector<12x8xf32>
    %227 = vector.shape_cast %143 : vector<12x8xf32> to vector<1x12x8xf32>
    tpu.vector_store %arg27[%c0_99, %c0_100, %c0_101], %227 {strides = array<i32>} : memref<1x12x8xf32, #tpu.memory_space<vmem>>, vector<1x12x8xf32>,
    %c0_102 = arith.constant 0 : index
    %c0_103 = arith.constant 0 : index
    %c0_104 = arith.constant 0 : index
    %228 = vector.load %arg28[%c0_102, %c0_103, %c0_104] : memref<1x12x8xf32, #tpu.memory_space<vmem>>, vector<1x12x8xf32>
    %229 = vector.shape_cast %228 : vector<1x12x8xf32> to vector<12x8xf32>
    %230 = vector.shape_cast %160 : vector<12x8xf32> to vector<1x12x8xf32>
    tpu.vector_store %arg28[%c0_102, %c0_103, %c0_104], %230 {strides = array<i32>} : memref<1x12x8xf32, #tpu.memory_space<vmem>>, vector<1x12x8xf32>,
    %c0_105 = arith.constant 0 : index
    %c0_106 = arith.constant 0 : index
    %c0_107 = arith.constant 0 : index
    %231 = vector.load %arg29[%c0_105, %c0_106, %c0_107] : memref<1x4x12xf32, #tpu.memory_space<vmem>>, vector<1x4x12xf32>
    tpu.vector_store %arg29[%c0_105, %c0_106, %c0_107], %224 {strides = array<i32>} : memref<1x4x12xf32, #tpu.memory_space<vmem>>, vector<1x4x12xf32>,
    %232 = tpu.iota {dimensions = array<i32: 2>} : vector<1x1x2xi32>
    %c0_i32 = arith.constant 0 : i32
    %233 = vector.broadcast %c0_i32 : i32 to vector<1x1x2xi32>
    %234 = arith.cmpi eq, %232, %233 : vector<1x1x2xi32>
    %235 = vector.broadcast %182 : f32 to vector<1x1x2xf32>
    %236 = vector.broadcast %200 : f32 to vector<1x1x2xf32>
    %237 = arith.select %234, %235, %236 : vector<1x1x2xi1>, vector<1x1x2xf32>
    %c0_108 = arith.constant 0 : index
    %c0_109 = arith.constant 0 : index
    %c0_110 = arith.constant 0 : index
    %238 = vector.load %arg30[%c0_108, %c0_109, %c0_110] : memref<1x1x2xf32, #tpu.memory_space<vmem>>, vector<1x1x2xf32>
    tpu.vector_store %arg30[%c0_108, %c0_109, %c0_110], %237 {strides = array<i32>} : memref<1x1x2xf32, #tpu.memory_space<vmem>>, vector<1x1x2xf32>,
    return
  }
  func.func @transform_0(%arg0: i32) -> (i32, i32, i32) {
    %c0_i32 = arith.constant 0 : i32
    %c0_i32_0 = arith.constant 0 : i32
    %c0_i32_1 = arith.constant 0 : i32
    return %arg0, %c0_i32, %c0_i32_0 : i32, i32, i32
  }
  func.func @transform_1(%arg0: i32) -> (i32, i32, i32) {
    %c0_i32 = arith.constant 0 : i32
    %c0_i32_0 = arith.constant 0 : i32
    %c0_i32_1 = arith.constant 0 : i32
    return %arg0, %c0_i32, %c0_i32_0 : i32, i32, i32
  }
  func.func @transform_2(%arg0: i32) -> (i32, i32) {
    %c0_i32 = arith.constant 0 : i32
    %c0_i32_0 = arith.constant 0 : i32
    %c0_i32_1 = arith.constant 0 : i32
    return %c0_i32, %c0_i32_0 : i32, i32
  }
  func.func @transform_3(%arg0: i32) -> (i32, i32) {
    %c0_i32 = arith.constant 0 : i32
    %c0_i32_0 = arith.constant 0 : i32
    %c0_i32_1 = arith.constant 0 : i32
    return %c0_i32, %c0_i32_0 : i32, i32
  }
  func.func @transform_4(%arg0: i32) -> (i32, i32) {
    %c0_i32 = arith.constant 0 : i32
    %c0_i32_0 = arith.constant 0 : i32
    %c0_i32_1 = arith.constant 0 : i32
    return %c0_i32, %c0_i32_0 : i32, i32
  }
  func.func @transform_5(%arg0: i32) -> (i32, i32) {
    %c0_i32 = arith.constant 0 : i32
    %c0_i32_0 = arith.constant 0 : i32
    %c0_i32_1 = arith.constant 0 : i32
    return %c0_i32, %c0_i32_0 : i32, i32
  }
  func.func @transform_6(%arg0: i32) -> (i32, i32) {
    %c0_i32 = arith.constant 0 : i32
    %c0_i32_0 = arith.constant 0 : i32
    %c0_i32_1 = arith.constant 0 : i32
    return %c0_i32, %c0_i32_0 : i32, i32
  }
  func.func @transform_7(%arg0: i32) -> (i32, i32) {
    %c0_i32 = arith.constant 0 : i32
    %c0_i32_0 = arith.constant 0 : i32
    %c0_i32_1 = arith.constant 0 : i32
    return %c0_i32, %c0_i32_0 : i32, i32
  }
  func.func @transform_8(%arg0: i32) -> (i32, i32) {
    %c0_i32 = arith.constant 0 : i32
    %c0_i32_0 = arith.constant 0 : i32
    %c0_i32_1 = arith.constant 0 : i32
    return %c0_i32, %c0_i32_0 : i32, i32
  }
  func.func @transform_9(%arg0: i32) -> (i32, i32) {
    %c0_i32 = arith.constant 0 : i32
    %c0_i32_0 = arith.constant 0 : i32
    %c0_i32_1 = arith.constant 0 : i32
    return %c0_i32, %c0_i32_0 : i32, i32
  }
  func.func @transform_10(%arg0: i32) -> (i32, i32) {
    %c0_i32 = arith.constant 0 : i32
    %c0_i32_0 = arith.constant 0 : i32
    %c0_i32_1 = arith.constant 0 : i32
    return %c0_i32, %c0_i32_0 : i32, i32
  }
  func.func @transform_11(%arg0: i32) -> (i32, i32) {
    %c0_i32 = arith.constant 0 : i32
    %c0_i32_0 = arith.constant 0 : i32
    %c0_i32_1 = arith.constant 0 : i32
    return %c0_i32, %c0_i32_0 : i32, i32
  }
  func.func @transform_12(%arg0: i32) -> (i32, i32) {
    %c0_i32 = arith.constant 0 : i32
    %c0_i32_0 = arith.constant 0 : i32
    %c0_i32_1 = arith.constant 0 : i32
    return %c0_i32, %c0_i32_0 : i32, i32
  }
  func.func @transform_13(%arg0: i32) -> (i32, i32) {
    %c0_i32 = arith.constant 0 : i32
    %c0_i32_0 = arith.constant 0 : i32
    %c0_i32_1 = arith.constant 0 : i32
    return %c0_i32, %c0_i32_0 : i32, i32
  }
  func.func @transform_14(%arg0: i32) -> (i32, i32) {
    %c0_i32 = arith.constant 0 : i32
    %c0_i32_0 = arith.constant 0 : i32
    %c0_i32_1 = arith.constant 0 : i32
    return %c0_i32, %c0_i32_0 : i32, i32
  }
  func.func @transform_15(%arg0: i32) -> (i32, i32) {
    %c0_i32 = arith.constant 0 : i32
    %c0_i32_0 = arith.constant 0 : i32
    %c0_i32_1 = arith.constant 0 : i32
    return %c0_i32, %c0_i32_0 : i32, i32
  }
  func.func @transform_16(%arg0: i32) -> (i32, i32) {
    %c0_i32 = arith.constant 0 : i32
    %c0_i32_0 = arith.constant 0 : i32
    %c0_i32_1 = arith.constant 0 : i32
    return %c0_i32, %c0_i32_0 : i32, i32
  }
  func.func @transform_17(%arg0: i32) -> (i32, i32) {
    %c0_i32 = arith.constant 0 : i32
    %c0_i32_0 = arith.constant 0 : i32
    %c0_i32_1 = arith.constant 0 : i32
    return %c0_i32, %c0_i32_0 : i32, i32
  }
  func.func @transform_18(%arg0: i32) -> (i32, i32) {
    %c0_i32 = arith.constant 0 : i32
    %c0_i32_0 = arith.constant 0 : i32
    %c0_i32_1 = arith.constant 0 : i32
    return %c0_i32, %c0_i32_0 : i32, i32
  }
  func.func @transform_19(%arg0: i32) -> (i32, i32) {
    %c0_i32 = arith.constant 0 : i32
    %c0_i32_0 = arith.constant 0 : i32
    %c0_i32_1 = arith.constant 0 : i32
    return %c0_i32, %c0_i32_0 : i32, i32
  }
  func.func @transform_20(%arg0: i32) -> (i32, i32) {
    %c0_i32 = arith.constant 0 : i32
    %c0_i32_0 = arith.constant 0 : i32
    %c0_i32_1 = arith.constant 0 : i32
    return %c0_i32, %c0_i32_0 : i32, i32
  }
  func.func @transform_21(%arg0: i32) -> (i32, i32) {
    %c0_i32 = arith.constant 0 : i32
    %c0_i32_0 = arith.constant 0 : i32
    %c0_i32_1 = arith.constant 0 : i32
    return %c0_i32, %c0_i32_0 : i32, i32
  }
  func.func @transform_22(%arg0: i32) -> (i32, i32) {
    %c0_i32 = arith.constant 0 : i32
    %c0_i32_0 = arith.constant 0 : i32
    %c0_i32_1 = arith.constant 0 : i32
    return %c0_i32, %c0_i32_0 : i32, i32
  }
  func.func @transform_23(%arg0: i32) -> (i32, i32) {
    %c0_i32 = arith.constant 0 : i32
    %c0_i32_0 = arith.constant 0 : i32
    %c0_i32_1 = arith.constant 0 : i32
    return %c0_i32, %c0_i32_0 : i32, i32
  }
  func.func @transform_24(%arg0: i32) -> (i32, i32) {
    %c0_i32 = arith.constant 0 : i32
    %c0_i32_0 = arith.constant 0 : i32
    %c0_i32_1 = arith.constant 0 : i32
    return %c0_i32, %c0_i32_0 : i32, i32
  }
  func.func @transform_25(%arg0: i32) -> (i32, i32) {
    %c0_i32 = arith.constant 0 : i32
    %c0_i32_0 = arith.constant 0 : i32
    %c0_i32_1 = arith.constant 0 : i32
    return %c0_i32, %c0_i32_0 : i32, i32
  }
  func.func @transform_26(%arg0: i32) -> (i32, i32, i32) {
    %c0_i32 = arith.constant 0 : i32
    %c0_i32_0 = arith.constant 0 : i32
    %c0_i32_1 = arith.constant 0 : i32
    return %arg0, %c0_i32, %c0_i32_0 : i32, i32, i32
  }
  func.func @transform_27(%arg0: i32) -> (i32, i32, i32) {
    %c0_i32 = arith.constant 0 : i32
    %c0_i32_0 = arith.constant 0 : i32
    %c0_i32_1 = arith.constant 0 : i32
    return %arg0, %c0_i32, %c0_i32_0 : i32, i32, i32
  }
  func.func @transform_28(%arg0: i32) -> (i32, i32, i32) {
    %c0_i32 = arith.constant 0 : i32
    %c0_i32_0 = arith.constant 0 : i32
    %c0_i32_1 = arith.constant 0 : i32
    return %arg0, %c0_i32, %c0_i32_0 : i32, i32, i32
  }
  func.func @transform_29(%arg0: i32) -> (i32, i32, i32) {
    %c0_i32 = arith.constant 0 : i32
    %c0_i32_0 = arith.constant 0 : i32
    %c0_i32_1 = arith.constant 0 : i32
    return %arg0, %c0_i32, %c0_i32_0 : i32, i32, i32
  }
}

</mosaic_0001>

<llo_original>
// kernel: tpu_custom_call.1
$region0: #{tpu_custom_call.1}
  #allocation0 [shape = 'u32[]', space=smem, size = 0x4, offset = 0x4, fixed_abs, tag = 'smem constant byte address 0x4 - core index']
  #allocation1 [shape = 'u32[144,128]{1,0:T(1,128)}', space=vmem, size = 0x12000, scoped, tag = 'internal scratch']
  %s0 = inlined_call_operand.smem [shape: u32[30], index: -1, kind: input, shape index: {}]
  %s1 = sld [smem:[%s0]]
  %s2 = scalar_lea.smem %s0, 1
  %s3 = sld [smem:[%s2]]
  %s4 = scalar_lea.smem %s0, 2
  %s5 = sld [smem:[%s4]]
  %s6 = scalar_lea.smem %s0, 3
  %s7 = sld [smem:[%s6]]
  %s8 = scalar_lea.smem %s0, 4
  %s9 = sld [smem:[%s8]]
  %s10 = scalar_lea.smem %s0, 5
  %s11 = sld [smem:[%s10]]
  %s12 = scalar_lea.smem %s0, 6
  %s13 = sld [smem:[%s12]]
  %s14 = scalar_lea.smem %s0, 7
  %s15 = sld [smem:[%s14]]
  %s16 = scalar_lea.smem %s0, 8
  %s17 = sld [smem:[%s16]]
  %s18 = scalar_lea.smem %s0, 9
  %s19 = sld [smem:[%s18]]
  %s20 = scalar_lea.smem %s0, 10
  %s21 = sld [smem:[%s20]]
  %s22 = scalar_lea.smem %s0, 11
  %s23 = sld [smem:[%s22]]
  %s24 = scalar_lea.smem %s0, 12
  %s25 = sld [smem:[%s24]]
  %s26 = scalar_lea.smem %s0, 13
  %s27 = sld [smem:[%s26]]
  %s28 = scalar_lea.smem %s0, 14
  %s29 = sld [smem:[%s28]]
  %s30 = scalar_lea.smem %s0, 15
  %s31 = sld [smem:[%s30]]
  %s32 = scalar_lea.smem %s0, 16
  %s33 = sld [smem:[%s32]]
  %s34 = scalar_lea.smem %s0, 17
  %s35 = sld [smem:[%s34]]
  %s36 = scalar_lea.smem %s0, 18
  %s37 = sld [smem:[%s36]]
  %s38 = scalar_lea.smem %s0, 19
  %s39 = sld [smem:[%s38]]
  %s40 = scalar_lea.smem %s0, 20
  %s41 = sld [smem:[%s40]]
  %s42 = scalar_lea.smem %s0, 21
  %s43 = sld [smem:[%s42]]
  %s44 = scalar_lea.smem %s0, 22
  %s45 = sld [smem:[%s44]]
  %s46 = scalar_lea.smem %s0, 23
  %s47 = sld [smem:[%s46]]
  %s48 = scalar_lea.smem %s0, 24
  %s49 = sld [smem:[%s48]]
  %s50 = scalar_lea.smem %s0, 25
  %s51 = sld [smem:[%s50]]
  %s52 = scalar_lea.smem %s0, 26
  %s53 = sld [smem:[%s52]]
  %s54 = scalar_lea.smem %s0, 27
  %s55 = sld [smem:[%s54]]
  %s56 = scalar_lea.smem %s0, 28
  %s57 = sld [smem:[%s56]]
  %s58 = scalar_lea.smem %s0, 29
  %s59 = sld [smem:[%s58]]
  %60 = xla_tuple %s53, %s55, %s57, %s59
  %s61 = sld [smem:[#allocation0]]
  $region161: #{tpu_custom_call.1} parent=0
    _
  %s63 = ssub.s32 1, %s61
  %s64 = scalar_select 0, %s63, %s61
  $region1: #{tpu_custom_call.1} parent=0
    #allocation2 [shape = 'u8[4096]{0}', space=vmem, size = 0x1000, scoped, tag = 'output window, operand 2']
    #allocation3 [shape = 's32[2]{0}', space=sflag, size = 0x8, scoped, tag = 'scoped memory for tpu_custom_call.1']
    #allocation4 [shape = 'u8[1024]{0}', space=vmem, size = 0x400, scoped, tag = 'output window, operand 3']
    #allocation5 [shape = 's32[2]{0}', space=sflag, size = 0x8, scoped, tag = 'scoped memory for tpu_custom_call.1']
    %65 = vsyncpa [#allocation3], 0
    %s66 = scalar_lea.sflag [#allocation3], 1
    %67 = vsyncpa %s66, 0
    %68 = vsyncpa [#allocation5], 0
    %s69 = scalar_lea.sflag [#allocation5], 1
    %70 = vsyncpa %s69, 0
    loop: start=0, step=1, limit=4
    $region2: #{tpu_custom_call.1} parent=1 // loop_pre_header
      _
    $region3: #{tpu_custom_call.1} parent=1 // loop_header
      %s72 = sphi 0, %s76
      %p73 = scmp.ge.s32.totalorder %s72, 4
      %s82 = sphi 0, %s84
      %s85 = sphi 0, %s82
      %s86 = sphi 0, %s85
      %s102 = sphi 0, %s86
      %s108 = sphi 0, %s110
      %s111 = sphi 0, %s108
      %s112 = sphi 0, %s111
      %s128 = sphi 0, %s112
      %s132 = sphi 0, %s132
      %s134 = sphi 0, %s132
      %s135 = sphi 0, %s134
      %s149 = sphi 0, %s135
      %s153 = sphi 0, %s153
      %s155 = sphi 0, %s153
      %s156 = sphi 0, %s155
      %s170 = sphi 0, %s156
      %s174 = sphi 0, %s174
      %s176 = sphi 0, %s174
      %s177 = sphi 0, %s176
      %s191 = sphi 0, %s177
      %s195 = sphi 0, %s195
      %s197 = sphi 0, %s195
      %s198 = sphi 0, %s197
      %s212 = sphi 0, %s198
      %s216 = sphi 0, %s216
      %s218 = sphi 0, %s216
      %s219 = sphi 0, %s218
      %s233 = sphi 0, %s219
      %s237 = sphi 0, %s237
      %s239 = sphi 0, %s237
      %s240 = sphi 0, %s239
      %s254 = sphi 0, %s240
      %s258 = sphi 0, %s258
      %s260 = sphi 0, %s258
      %s261 = sphi 0, %s260
      %s275 = sphi 0, %s261
      %s279 = sphi 0, %s279
      %s281 = sphi 0, %s279
      %s282 = sphi 0, %s281
      %s296 = sphi 0, %s282
      %s300 = sphi 0, %s300
      %s302 = sphi 0, %s300
      %s303 = sphi 0, %s302
      %s317 = sphi 0, %s303
      %s321 = sphi 0, %s321
      %s323 = sphi 0, %s321
      %s324 = sphi 0, %s323
      %s338 = sphi 0, %s324
      %s342 = sphi 0, %s342
      %s344 = sphi 0, %s342
      %s345 = sphi 0, %s344
      %s359 = sphi 0, %s345
      %s363 = sphi 0, %s363
      %s365 = sphi 0, %s363
      %s366 = sphi 0, %s365
      %s380 = sphi 0, %s366
      %s384 = sphi 0, %s384
      %s386 = sphi 0, %s384
      %s387 = sphi 0, %s386
      %s401 = sphi 0, %s387
      %s405 = sphi 0, %s405
      %s407 = sphi 0, %s405
      %s408 = sphi 0, %s407
      %s422 = sphi 0, %s408
      %s426 = sphi 0, %s426
      %s428 = sphi 0, %s426
      %s429 = sphi 0, %s428
      %s443 = sphi 0, %s429
      %s447 = sphi 0, %s447
      %s449 = sphi 0, %s447
      %s450 = sphi 0, %s449
      %s464 = sphi 0, %s450
      %s468 = sphi 0, %s468
      %s470 = sphi 0, %s468
      %s471 = sphi 0, %s470
      %s485 = sphi 0, %s471
      %s489 = sphi 0, %s489
      %s491 = sphi 0, %s489
      %s492 = sphi 0, %s491
      %s506 = sphi 0, %s492
      %s510 = sphi 0, %s510
      %s512 = sphi 0, %s510
      %s513 = sphi 0, %s512
      %s527 = sphi 0, %s513
      %s531 = sphi 0, %s531
      %s533 = sphi 0, %s531
      %s534 = sphi 0, %s533
      %s548 = sphi 0, %s534
      %s552 = sphi 0, %s552
      %s554 = sphi 0, %s552
      %s555 = sphi 0, %s554
      %s569 = sphi 0, %s555
      %s573 = sphi 0, %s573
      %s575 = sphi 0, %s573
      %s576 = sphi 0, %s575
      %s590 = sphi 0, %s576
      %s594 = sphi 0, %s594
      %s596 = sphi 0, %s594
      %s597 = sphi 0, %s596
      %s611 = sphi 0, %s597
      %s615 = sphi 0, %s615
      %s617 = sphi 0, %s615
      %s618 = sphi 0, %s617
      %s632 = sphi 0, %s618
      %s638 = sphi 0, %s640
      %s641 = sphi 0, %s638
      %s642 = sphi 0, %s641
      %s658 = sphi 0, %s642
      %s664 = sphi 0, %s666
      %s667 = sphi 0, %s664
      %s668 = sphi 0, %s667
      %s684 = sphi 0, %s668
      %s690 = sphi 0, %s692
      %s693 = sphi 0, %s690
      %s694 = sphi 0, %s693
      %s710 = sphi 0, %s694
      %s716 = sphi 0, %s718
      %s719 = sphi 0, %s716
      %s720 = sphi 0, %s719
      %s736 = sphi 0, %s720
    $region4: #{tpu_custom_call.1} parent=1 // loop_header_branch
      %75 = sbr.rel (%p73) target = $region8
    $region5: #{tpu_custom_call.1} parent=1 // loop_body
      %s77 = ssub.s32 %s72, 1
      %s78 = ssub.s32 %s72, 2
      %s79 = sadd.s32 %s72, 1
      %s80 = ssub.s32 %s72, %s79
      %p81 = scmp.eq.s32.totalorder %s80, 0
      %s83 = sadd.s32 %s82, 1
      %s84 = scalar_select %p81, %s82, %s83
      %p87 = pneg %p81
      %p88 = scmp.eq.s32.totalorder %s72, 1
      %p89 = por %p87, %p88
      %p90 = scmp.ne.s32.totalorder %s82, %s85
      %p91 = scmp.eq.s32.totalorder %s72, 0
      %p92 = por %p90, %p91
      %p93 = scmp.ne.s32.totalorder %s82, %s85
      %p94 = scmp.eq.s32.totalorder %s77, 1
      %p95 = por %p93, %p94
      %p96 = scmp.ne.s32.totalorder %s85, %s86
      %p97 = scmp.eq.s32.totalorder %s77, 0
      %p98 = por %p96, %p97
      %p99 = scmp.ne.s32.totalorder %s85, %s86
      %p100 = scmp.eq.s32.totalorder %s78, 1
      %p101 = por %p99, %p100
      %p103 = scmp.ne.s32.totalorder %s86, %s102
      %p104 = scmp.eq.s32.totalorder %s78, 0
      %p105 = por %p103, %p104
      %s106 = ssub.s32 %s72, %s79
      %p107 = scmp.eq.s32.totalorder %s106, 0
      %s109 = sadd.s32 %s108, 1
      %s110 = scalar_select %p107, %s108, %s109
      %p113 = pneg %p107
      %p114 = scmp.eq.s32.totalorder %s72, 1
      %p115 = por %p113, %p114
      %p116 = scmp.ne.s32.totalorder %s108, %s111
      %p117 = scmp.eq.s32.totalorder %s72, 0
      %p118 = por %p116, %p117
      %p119 = scmp.ne.s32.totalorder %s108, %s111
      %p120 = scmp.eq.s32.totalorder %s77, 1
      %p121 = por %p119, %p120
      %p122 = scmp.ne.s32.totalorder %s111, %s112
      %p123 = scmp.eq.s32.totalorder %s77, 0
      %p124 = por %p122, %p123
      %p125 = scmp.ne.s32.totalorder %s111, %s112
      %p126 = scmp.eq.s32.totalorder %s78, 1
      %p127 = por %p125, %p126
      %p129 = scmp.ne.s32.totalorder %s112, %s128
      %p130 = scmp.eq.s32.totalorder %s78, 0
      %p131 = por %p129, %p130
      %s133 = sadd.s32 %s132, 1
      %p136 = scmp.eq.s32.totalorder %s72, 1
      %p137 = scmp.ne.s32.totalorder %s132, %s134
      %p138 = scmp.eq.s32.totalorder %s72, 0
      %p139 = por %p137, %p138
      %p140 = scmp.ne.s32.totalorder %s132, %s134
      %p141 = scmp.eq.s32.totalorder %s77, 1
      %p142 = por %p140, %p141
      %p143 = scmp.ne.s32.totalorder %s134, %s135
      %p144 = scmp.eq.s32.totalorder %s77, 0
      %p145 = por %p143, %p144
      %p146 = scmp.ne.s32.totalorder %s134, %s135
      %p147 = scmp.eq.s32.totalorder %s78, 1
      %p148 = por %p146, %p147
      %p150 = scmp.ne.s32.totalorder %s135, %s149
      %p151 = scmp.eq.s32.totalorder %s78, 0
      %p152 = por %p150, %p151
      %s154 = sadd.s32 %s153, 1
      %p157 = scmp.eq.s32.totalorder %s72, 1
      %p158 = scmp.ne.s32.totalorder %s153, %s155
      %p159 = scmp.eq.s32.totalorder %s72, 0
      %p160 = por %p158, %p159
      %p161 = scmp.ne.s32.totalorder %s153, %s155
      %p162 = scmp.eq.s32.totalorder %s77, 1
      %p163 = por %p161, %p162
      %p164 = scmp.ne.s32.totalorder %s155, %s156
      %p165 = scmp.eq.s32.totalorder %s77, 0
      %p166 = por %p164, %p165
      %p167 = scmp.ne.s32.totalorder %s155, %s156
      %p168 = scmp.eq.s32.totalorder %s78, 1
      %p169 = por %p167, %p168
      %p171 = scmp.ne.s32.totalorder %s156, %s170
      %p172 = scmp.eq.s32.totalorder %s78, 0
      %p173 = por %p171, %p172
      %s175 = sadd.s32 %s174, 1
      %p178 = scmp.eq.s32.totalorder %s72, 1
      %p179 = scmp.ne.s32.totalorder %s174, %s176
      %p180 = scmp.eq.s32.totalorder %s72, 0
      %p181 = por %p179, %p180
      %p182 = scmp.ne.s32.totalorder %s174, %s176
      %p183 = scmp.eq.s32.totalorder %s77, 1
      %p184 = por %p182, %p183
      %p185 = scmp.ne.s32.totalorder %s176, %s177
      %p186 = scmp.eq.s32.totalorder %s77, 0
      %p187 = por %p185, %p186
      %p188 = scmp.ne.s32.totalorder %s176, %s177
      %p189 = scmp.eq.s32.totalorder %s78, 1
      %p190 = por %p188, %p189
      %p192 = scmp.ne.s32.totalorder %s177, %s191
      %p193 = scmp.eq.s32.totalorder %s78, 0
      %p194 = por %p192, %p193
      %s196 = sadd.s32 %s195, 1
      %p199 = scmp.eq.s32.totalorder %s72, 1
      %p200 = scmp.ne.s32.totalorder %s195, %s197
      %p201 = scmp.eq.s32.totalorder %s72, 0
      %p202 = por %p200, %p201
      %p203 = scmp.ne.s32.totalorder %s195, %s197
      %p204 = scmp.eq.s32.totalorder %s77, 1
      %p205 = por %p203, %p204
      %p206 = scmp.ne.s32.totalorder %s197, %s198
      %p207 = scmp.eq.s32.totalorder %s77, 0
      %p208 = por %p206, %p207
      %p209 = scmp.ne.s32.totalorder %s197, %s198
      %p210 = scmp.eq.s32.totalorder %s78, 1
      %p211 = por %p209, %p210
      %p213 = scmp.ne.s32.totalorder %s198, %s212
      %p214 = scmp.eq.s32.totalorder %s78, 0
      %p215 = por %p213, %p214
      %s217 = sadd.s32 %s216, 1
      %p220 = scmp.eq.s32.totalorder %s72, 1
      %p221 = scmp.ne.s32.totalorder %s216, %s218
      %p222 = scmp.eq.s32.totalorder %s72, 0
      %p223 = por %p221, %p222
      %p224 = scmp.ne.s32.totalorder %s216, %s218
      %p225 = scmp.eq.s32.totalorder %s77, 1
      %p226 = por %p224, %p225
      %p227 = scmp.ne.s32.totalorder %s218, %s219
      %p228 = scmp.eq.s32.totalorder %s77, 0
      %p229 = por %p227, %p228
      %p230 = scmp.ne.s32.totalorder %s218, %s219
      %p231 = scmp.eq.s32.totalorder %s78, 1
      %p232 = por %p230, %p231
      %p234 = scmp.ne.s32.totalorder %s219, %s233
      %p235 = scmp.eq.s32.totalorder %s78, 0
      %p236 = por %p234, %p235
      %s238 = sadd.s32 %s237, 1
      %p241 = scmp.eq.s32.totalorder %s72, 1
      %p242 = scmp.ne.s32.totalorder %s237, %s239
      %p243 = scmp.eq.s32.totalorder %s72, 0
      %p244 = por %p242, %p243
      %p245 = scmp.ne.s32.totalorder %s237, %s239
      %p246 = scmp.eq.s32.totalorder %s77, 1
      %p247 = por %p245, %p246
      %p248 = scmp.ne.s32.totalorder %s239, %s240
      %p249 = scmp.eq.s32.totalorder %s77, 0
      %p250 = por %p248, %p249
      %p251 = scmp.ne.s32.totalorder %s239, %s240
      %p252 = scmp.eq.s32.totalorder %s78, 1
      %p253 = por %p251, %p252
      %p255 = scmp.ne.s32.totalorder %s240, %s254
      %p256 = scmp.eq.s32.totalorder %s78, 0
      %p257 = por %p255, %p256
      %s259 = sadd.s32 %s258, 1
      %p262 = scmp.eq.s32.totalorder %s72, 1
      %p263 = scmp.ne.s32.totalorder %s258, %s260
      %p264 = scmp.eq.s32.totalorder %s72, 0
      %p265 = por %p263, %p264
      %p266 = scmp.ne.s32.totalorder %s258, %s260
      %p267 = scmp.eq.s32.totalorder %s77, 1
      %p268 = por %p266, %p267
      %p269 = scmp.ne.s32.totalorder %s260, %s261
      %p270 = scmp.eq.s32.totalorder %s77, 0
      %p271 = por %p269, %p270
      %p272 = scmp.ne.s32.totalorder %s260, %s261
      %p273 = scmp.eq.s32.totalorder %s78, 1
      %p274 = por %p272, %p273
      %p276 = scmp.ne.s32.totalorder %s261, %s275
      %p277 = scmp.eq.s32.totalorder %s78, 0
      %p278 = por %p276, %p277
      %s280 = sadd.s32 %s279, 1
      %p283 = scmp.eq.s32.totalorder %s72, 1
      %p284 = scmp.ne.s32.totalorder %s279, %s281
      %p285 = scmp.eq.s32.totalorder %s72, 0
      %p286 = por %p284, %p285
      %p287 = scmp.ne.s32.totalorder %s279, %s281
      %p288 = scmp.eq.s32.totalorder %s77, 1
      %p289 = por %p287, %p288
      %p290 = scmp.ne.s32.totalorder %s281, %s282
      %p291 = scmp.eq.s32.totalorder %s77, 0
      %p292 = por %p290, %p291
      %p293 = scmp.ne.s32.totalorder %s281, %s282
      %p294 = scmp.eq.s32.totalorder %s78, 1
      %p295 = por %p293, %p294
      %p297 = scmp.ne.s32.totalorder %s282, %s296
      %p298 = scmp.eq.s32.totalorder %s78, 0
      %p299 = por %p297, %p298
      %s301 = sadd.s32 %s300, 1
      %p304 = scmp.eq.s32.totalorder %s72, 1
      %p305 = scmp.ne.s32.totalorder %s300, %s302
      %p306 = scmp.eq.s32.totalorder %s72, 0
      %p307 = por %p305, %p306
      %p308 = scmp.ne.s32.totalorder %s300, %s302
      %p309 = scmp.eq.s32.totalorder %s77, 1
      %p310 = por %p308, %p309
      %p311 = scmp.ne.s32.totalorder %s302, %s303
      %p312 = scmp.eq.s32.totalorder %s77, 0
      %p313 = por %p311, %p312
      %p314 = scmp.ne.s32.totalorder %s302, %s303
      %p315 = scmp.eq.s32.totalorder %s78, 1
      %p316 = por %p314, %p315
      %p318 = scmp.ne.s32.totalorder %s303, %s317
      %p319 = scmp.eq.s32.totalorder %s78, 0
      %p320 = por %p318, %p319
      %s322 = sadd.s32 %s321, 1
      %p325 = scmp.eq.s32.totalorder %s72, 1
      %p326 = scmp.ne.s32.totalorder %s321, %s323
      %p327 = scmp.eq.s32.totalorder %s72, 0
      %p328 = por %p326, %p327
      %p329 = scmp.ne.s32.totalorder %s321, %s323
      %p330 = scmp.eq.s32.totalorder %s77, 1
      %p331 = por %p329, %p330
      %p332 = scmp.ne.s32.totalorder %s323, %s324
      %p333 = scmp.eq.s32.totalorder %s77, 0
      %p334 = por %p332, %p333
      %p335 = scmp.ne.s32.totalorder %s323, %s324
      %p336 = scmp.eq.s32.totalorder %s78, 1
      %p337 = por %p335, %p336
      %p339 = scmp.ne.s32.totalorder %s324, %s338
      %p340 = scmp.eq.s32.totalorder %s78, 0
      %p341 = por %p339, %p340
      %s343 = sadd.s32 %s342, 1
      %p346 = scmp.eq.s32.totalorder %s72, 1
      %p347 = scmp.ne.s32.totalorder %s342, %s344
      %p348 = scmp.eq.s32.totalorder %s72, 0
      %p349 = por %p347, %p348
      %p350 = scmp.ne.s32.totalorder %s342, %s344
      %p351 = scmp.eq.s32.totalorder %s77, 1
      %p352 = por %p350, %p351
      %p353 = scmp.ne.s32.totalorder %s344, %s345
      %p354 = scmp.eq.s32.totalorder %s77, 0
      %p355 = por %p353, %p354
      %p356 = scmp.ne.s32.totalorder %s344, %s345
      %p357 = scmp.eq.s32.totalorder %s78, 1
      %p358 = por %p356, %p357
      %p360 = scmp.ne.s32.totalorder %s345, %s359
      %p361 = scmp.eq.s32.totalorder %s78, 0
      %p362 = por %p360, %p361
      %s364 = sadd.s32 %s363, 1
      %p367 = scmp.eq.s32.totalorder %s72, 1
      %p368 = scmp.ne.s32.totalorder %s363, %s365
      %p369 = scmp.eq.s32.totalorder %s72, 0
      %p370 = por %p368, %p369
      %p371 = scmp.ne.s32.totalorder %s363, %s365
      %p372 = scmp.eq.s32.totalorder %s77, 1
      %p373 = por %p371, %p372
      %p374 = scmp.ne.s32.totalorder %s365, %s366
      %p375 = scmp.eq.s32.totalorder %s77, 0
      %p376 = por %p374, %p375
      %p377 = scmp.ne.s32.totalorder %s365, %s366
      %p378 = scmp.eq.s32.totalorder %s78, 1
      %p379 = por %p377, %p378
      %p381 = scmp.ne.s32.totalorder %s366, %s380
      %p382 = scmp.eq.s32.totalorder %s78, 0
      %p383 = por %p381, %p382
      %s385 = sadd.s32 %s384, 1
      %p388 = scmp.eq.s32.totalorder %s72, 1
      %p389 = scmp.ne.s32.totalorder %s384, %s386
      %p390 = scmp.eq.s32.totalorder %s72, 0
      %p391 = por %p389, %p390
      %p392 = scmp.ne.s32.totalorder %s384, %s386
      %p393 = scmp.eq.s32.totalorder %s77, 1
      %p394 = por %p392, %p393
      %p395 = scmp.ne.s32.totalorder %s386, %s387
      %p396 = scmp.eq.s32.totalorder %s77, 0
      %p397 = por %p395, %p396
      %p398 = scmp.ne.s32.totalorder %s386, %s387
      %p399 = scmp.eq.s32.totalorder %s78, 1
      %p400 = por %p398, %p399
      %p402 = scmp.ne.s32.totalorder %s387, %s401
      %p403 = scmp.eq.s32.totalorder %s78, 0
      %p404 = por %p402, %p403
      %s406 = sadd.s32 %s405, 1
      %p409 = scmp.eq.s32.totalorder %s72, 1
      %p410 = scmp.ne.s32.totalorder %s405, %s407
      %p411 = scmp.eq.s32.totalorder %s72, 0
      %p412 = por %p410, %p411
      %p413 = scmp.ne.s32.totalorder %s405, %s407
      %p414 = scmp.eq.s32.totalorder %s77, 1
      %p415 = por %p413, %p414
      %p416 = scmp.ne.s32.totalorder %s407, %s408
      %p417 = scmp.eq.s32.totalorder %s77, 0
      %p418 = por %p416, %p417
      %p419 = scmp.ne.s32.totalorder %s407, %s408
      %p420 = scmp.eq.s32.totalorder %s78, 1
      %p421 = por %p419, %p420
      %p423 = scmp.ne.s32.totalorder %s408, %s422
      %p424 = scmp.eq.s32.totalorder %s78, 0
      %p425 = por %p423, %p424
      %s427 = sadd.s32 %s426, 1
      %p430 = scmp.eq.s32.totalorder %s72, 1
      %p431 = scmp.ne.s32.totalorder %s426, %s428
      %p432 = scmp.eq.s32.totalorder %s72, 0
      %p433 = por %p431, %p432
      %p434 = scmp.ne.s32.totalorder %s426, %s428
      %p435 = scmp.eq.s32.totalorder %s77, 1
      %p436 = por %p434, %p435
      %p437 = scmp.ne.s32.totalorder %s428, %s429
      %p438 = scmp.eq.s32.totalorder %s77, 0
      %p439 = por %p437, %p438
      %p440 = scmp.ne.s32.totalorder %s428, %s429
      %p441 = scmp.eq.s32.totalorder %s78, 1
      %p442 = por %p440, %p441
      %p444 = scmp.ne.s32.totalorder %s429, %s443
      %p445 = scmp.eq.s32.totalorder %s78, 0
      %p446 = por %p444, %p445
      %s448 = sadd.s32 %s447, 1
      %p451 = scmp.eq.s32.totalorder %s72, 1
      %p452 = scmp.ne.s32.totalorder %s447, %s449
      %p453 = scmp.eq.s32.totalorder %s72, 0
      %p454 = por %p452, %p453
      %p455 = scmp.ne.s32.totalorder %s447, %s449
      %p456 = scmp.eq.s32.totalorder %s77, 1
      %p457 = por %p455, %p456
      %p458 = scmp.ne.s32.totalorder %s449, %s450
      %p459 = scmp.eq.s32.totalorder %s77, 0
      %p460 = por %p458, %p459
      %p461 = scmp.ne.s32.totalorder %s449, %s450
      %p462 = scmp.eq.s32.totalorder %s78, 1
      %p463 = por %p461, %p462
      %p465 = scmp.ne.s32.totalorder %s450, %s464
      %p466 = scmp.eq.s32.totalorder %s78, 0
      %p467 = por %p465, %p466
      %s469 = sadd.s32 %s468, 1
      %p472 = scmp.eq.s32.totalorder %s72, 1
      %p473 = scmp.ne.s32.totalorder %s468, %s470
      %p474 = scmp.eq.s32.totalorder %s72, 0
      %p475 = por %p473, %p474
      %p476 = scmp.ne.s32.totalorder %s468, %s470
      %p477 = scmp.eq.s32.totalorder %s77, 1
      %p478 = por %p476, %p477
      %p479 = scmp.ne.s32.totalorder %s470, %s471
      %p480 = scmp.eq.s32.totalorder %s77, 0
      %p481 = por %p479, %p480
      %p482 = scmp.ne.s32.totalorder %s470, %s471
      %p483 = scmp.eq.s32.totalorder %s78, 1
      %p484 = por %p482, %p483
      %p486 = scmp.ne.s32.totalorder %s471, %s485
      %p487 = scmp.eq.s32.totalorder %s78, 0
      %p488 = por %p486, %p487
      %s490 = sadd.s32 %s489, 1
      %p493 = scmp.eq.s32.totalorder %s72, 1
      %p494 = scmp.ne.s32.totalorder %s489, %s491
      %p495 = scmp.eq.s32.totalorder %s72, 0
      %p496 = por %p494, %p495
      %p497 = scmp.ne.s32.totalorder %s489, %s491
      %p498 = scmp.eq.s32.totalorder %s77, 1
      %p499 = por %p497, %p498
      %p500 = scmp.ne.s32.totalorder %s491, %s492
      %p501 = scmp.eq.s32.totalorder %s77, 0
      %p502 = por %p500, %p501
      %p503 = scmp.ne.s32.totalorder %s491, %s492
      %p504 = scmp.eq.s32.totalorder %s78, 1
      %p505 = por %p503, %p504
      %p507 = scmp.ne.s32.totalorder %s492, %s506
      %p508 = scmp.eq.s32.totalorder %s78, 0
      %p509 = por %p507, %p508
      %s511 = sadd.s32 %s510, 1
      %p514 = scmp.eq.s32.totalorder %s72, 1
      %p515 = scmp.ne.s32.totalorder %s510, %s512
      %p516 = scmp.eq.s32.totalorder %s72, 0
      %p517 = por %p515, %p516
      %p518 = scmp.ne.s32.totalorder %s510, %s512
      %p519 = scmp.eq.s32.totalorder %s77, 1
      %p520 = por %p518, %p519
      %p521 = scmp.ne.s32.totalorder %s512, %s513
      %p522 = scmp.eq.s32.totalorder %s77, 0
      %p523 = por %p521, %p522
      %p524 = scmp.ne.s32.totalorder %s512, %s513
      %p525 = scmp.eq.s32.totalorder %s78, 1
      %p526 = por %p524, %p525
      %p528 = scmp.ne.s32.totalorder %s513, %s527
      %p529 = scmp.eq.s32.totalorder %s78, 0
      %p530 = por %p528, %p529
      %s532 = sadd.s32 %s531, 1
      %p535 = scmp.eq.s32.totalorder %s72, 1
      %p536 = scmp.ne.s32.totalorder %s531, %s533
      %p537 = scmp.eq.s32.totalorder %s72, 0
      %p538 = por %p536, %p537
      %p539 = scmp.ne.s32.totalorder %s531, %s533
      %p540 = scmp.eq.s32.totalorder %s77, 1
      %p541 = por %p539, %p540
      %p542 = scmp.ne.s32.totalorder %s533, %s534
      %p543 = scmp.eq.s32.totalorder %s77, 0
      %p544 = por %p542, %p543
      %p545 = scmp.ne.s32.totalorder %s533, %s534
      %p546 = scmp.eq.s32.totalorder %s78, 1
      %p547 = por %p545, %p546
      %p549 = scmp.ne.s32.totalorder %s534, %s548
      %p550 = scmp.eq.s32.totalorder %s78, 0
      %p551 = por %p549, %p550
      %s553 = sadd.s32 %s552, 1
      %p556 = scmp.eq.s32.totalorder %s72, 1
      %p557 = scmp.ne.s32.totalorder %s552, %s554
      %p558 = scmp.eq.s32.totalorder %s72, 0
      %p559 = por %p557, %p558
      %p560 = scmp.ne.s32.totalorder %s552, %s554
      %p561 = scmp.eq.s32.totalorder %s77, 1
      %p562 = por %p560, %p561
      %p563 = scmp.ne.s32.totalorder %s554, %s555
      %p564 = scmp.eq.s32.totalorder %s77, 0
      %p565 = por %p563, %p564
      %p566 = scmp.ne.s32.totalorder %s554, %s555
      %p567 = scmp.eq.s32.totalorder %s78, 1
      %p568 = por %p566, %p567
      %p570 = scmp.ne.s32.totalorder %s555, %s569
      %p571 = scmp.eq.s32.totalorder %s78, 0
      %p572 = por %p570, %p571
      %s574 = sadd.s32 %s573, 1
      %p577 = scmp.eq.s32.totalorder %s72, 1
      %p578 = scmp.ne.s32.totalorder %s573, %s575
      %p579 = scmp.eq.s32.totalorder %s72, 0
      %p580 = por %p578, %p579
      %p581 = scmp.ne.s32.totalorder %s573, %s575
      %p582 = scmp.eq.s32.totalorder %s77, 1
      %p583 = por %p581, %p582
      %p584 = scmp.ne.s32.totalorder %s575, %s576
      %p585 = scmp.eq.s32.totalorder %s77, 0
      %p586 = por %p584, %p585
      %p587 = scmp.ne.s32.totalorder %s575, %s576
      %p588 = scmp.eq.s32.totalorder %s78, 1
      %p589 = por %p587, %p588
      %p591 = scmp.ne.s32.totalorder %s576, %s590
      %p592 = scmp.eq.s32.totalorder %s78, 0
      %p593 = por %p591, %p592
      %s595 = sadd.s32 %s594, 1
      %p598 = scmp.eq.s32.totalorder %s72, 1
      %p599 = scmp.ne.s32.totalorder %s594, %s596
      %p600 = scmp.eq.s32.totalorder %s72, 0
      %p601 = por %p599, %p600
      %p602 = scmp.ne.s32.totalorder %s594, %s596
      %p603 = scmp.eq.s32.totalorder %s77, 1
      %p604 = por %p602, %p603
      %p605 = scmp.ne.s32.totalorder %s596, %s597
      %p606 = scmp.eq.s32.totalorder %s77, 0
      %p607 = por %p605, %p606
      %p608 = scmp.ne.s32.totalorder %s596, %s597
      %p609 = scmp.eq.s32.totalorder %s78, 1
      %p610 = por %p608, %p609
      %p612 = scmp.ne.s32.totalorder %s597, %s611
      %p613 = scmp.eq.s32.totalorder %s78, 0
      %p614 = por %p612, %p613
      %s616 = sadd.s32 %s615, 1
      %p619 = scmp.eq.s32.totalorder %s72, 1
      %p620 = scmp.ne.s32.totalorder %s615, %s617
      %p621 = scmp.eq.s32.totalorder %s72, 0
      %p622 = por %p620, %p621
      %p623 = scmp.ne.s32.totalorder %s615, %s617
      %p624 = scmp.eq.s32.totalorder %s77, 1
      %p625 = por %p623, %p624
      %p626 = scmp.ne.s32.totalorder %s617, %s618
      %p627 = scmp.eq.s32.totalorder %s77, 0
      %p628 = por %p626, %p627
      %p629 = scmp.ne.s32.totalorder %s617, %s618
      %p630 = scmp.eq.s32.totalorder %s78, 1
      %p631 = por %p629, %p630
      %p633 = scmp.ne.s32.totalorder %s618, %s632
      %p634 = scmp.eq.s32.totalorder %s78, 0
      %p635 = por %p633, %p634
      %s636 = ssub.s32 %s72, %s79
      %p637 = scmp.eq.s32.totalorder %s636, 0
      %s639 = sadd.s32 %s638, 1
      %s640 = scalar_select %p637, %s638, %s639
      %p643 = pneg %p637
      %p644 = scmp.eq.s32.totalorder %s72, 1
      %p645 = por %p643, %p644
      %p646 = scmp.ne.s32.totalorder %s638, %s641
      %p647 = scmp.eq.s32.totalorder %s72, 0
      %p648 = por %p646, %p647
      %p649 = scmp.ne.s32.totalorder %s638, %s641
      %p650 = scmp.eq.s32.totalorder %s77, 1
      %p651 = por %p649, %p650
      %p652 = scmp.ne.s32.totalorder %s641, %s642
      %p653 = scmp.eq.s32.totalorder %s77, 0
      %p654 = por %p652, %p653
      %p655 = scmp.ne.s32.totalorder %s641, %s642
      %p656 = scmp.eq.s32.totalorder %s78, 1
      %p657 = por %p655, %p656
      %p659 = scmp.ne.s32.totalorder %s642, %s658
      %p660 = scmp.eq.s32.totalorder %s78, 0
      %p661 = por %p659, %p660
      %s662 = ssub.s32 %s72, %s79
      %p663 = scmp.eq.s32.totalorder %s662, 0
      %s665 = sadd.s32 %s664, 1
      %s666 = scalar_select %p663, %s664, %s665
      %p669 = pneg %p663
      %p670 = scmp.eq.s32.totalorder %s72, 1
      %p671 = por %p669, %p670
      %p672 = scmp.ne.s32.totalorder %s664, %s667
      %p673 = scmp.eq.s32.totalorder %s72, 0
      %p674 = por %p672, %p673
      %p675 = scmp.ne.s32.totalorder %s664, %s667
      %p676 = scmp.eq.s32.totalorder %s77, 1
      %p677 = por %p675, %p676
      %p678 = scmp.ne.s32.totalorder %s667, %s668
      %p679 = scmp.eq.s32.totalorder %s77, 0
      %p680 = por %p678, %p679
      %p681 = scmp.ne.s32.totalorder %s667, %s668
      %p682 = scmp.eq.s32.totalorder %s78, 1
      %p683 = por %p681, %p682
      %p685 = scmp.ne.s32.totalorder %s668, %s684
      %p686 = scmp.eq.s32.totalorder %s78, 0
      %p687 = por %p685, %p686
      %s688 = ssub.s32 %s72, %s79
      %p689 = scmp.eq.s32.totalorder %s688, 0
      %s691 = sadd.s32 %s690, 1
      %s692 = scalar_select %p689, %s690, %s691
      %p695 = pneg %p689
      %p696 = scmp.eq.s32.totalorder %s72, 1
      %p697 = por %p695, %p696
      %p698 = scmp.ne.s32.totalorder %s690, %s693
      %p699 = scmp.eq.s32.totalorder %s72, 0
      %p700 = por %p698, %p699
      %p701 = scmp.ne.s32.totalorder %s690, %s693
      %p702 = scmp.eq.s32.totalorder %s77, 1
      %p703 = por %p701, %p702
      %p704 = scmp.ne.s32.totalorder %s693, %s694
      %p705 = scmp.eq.s32.totalorder %s77, 0
      %p706 = por %p704, %p705
      %p707 = scmp.ne.s32.totalorder %s693, %s694
      %p708 = scmp.eq.s32.totalorder %s78, 1
      %p709 = por %p707, %p708
      %p711 = scmp.ne.s32.totalorder %s694, %s710
      %p712 = scmp.eq.s32.totalorder %s78, 0
      %p713 = por %p711, %p712
      %s714 = ssub.s32 %s72, %s79
      %p715 = scmp.eq.s32.totalorder %s714, 0
      %s717 = sadd.s32 %s716, 1
      %s718 = scalar_select %p715, %s716, %s717
      %p721 = pneg %p715
      %p722 = scmp.eq.s32.totalorder %s72, 1
      %p723 = por %p721, %p722
      %p724 = scmp.ne.s32.totalorder %s716, %s719
      %p725 = scmp.eq.s32.totalorder %s72, 0
      %p726 = por %p724, %p725
      %p727 = scmp.ne.s32.totalorder %s716, %s719
      %p728 = scmp.eq.s32.totalorder %s77, 1
      %p729 = por %p727, %p728
      %p730 = scmp.ne.s32.totalorder %s719, %s720
      %p731 = scmp.eq.s32.totalorder %s77, 0
      %p732 = por %p730, %p731
      %p733 = scmp.ne.s32.totalorder %s719, %s720
      %p734 = scmp.eq.s32.totalorder %s78, 1
      %p735 = por %p733, %p734
      %p737 = scmp.ne.s32.totalorder %s720, %s736
      %p738 = scmp.eq.s32.totalorder %s78, 0
      %p739 = por %p737, %p738
      %p740 = scmp.le.s32.totalorder 1, %s72
      %p741 = scmp.lt.s32.totalorder %s72, 3
      %p742 = pnand %p740, %p741
      %p743 = pneg %p742
      // Predicated region
      $region9: #{tpu_custom_call.1} parent=5 // pred_check
        _
      $region10: #{tpu_custom_call.1} parent=5 // pred_check_branch
        %745 = sbr.rel (%p742) target = $region12
      $region11: #{tpu_custom_call.1} parent=5 // pred_region
        %s746 = ssub.s32 %s72, 1
        // Predicated region
        $region13: #{tpu_custom_call.1} parent=11 // pred_check
          %p747 = pneg %p145
        $region14: #{tpu_custom_call.1} parent=11 // pred_check_branch
          %749 = sbr.rel (%p747) target = $region16
        $region15: #{tpu_custom_call.1} parent=11 // pred_region
          _
        $region16: #{tpu_custom_call.1} parent=11 // pred_fallthru
          _
        // Predicated region
        $region17: #{tpu_custom_call.1} parent=11 // pred_check
          %p750 = pneg %p166
        $region18: #{tpu_custom_call.1} parent=11 // pred_check_branch
          %752 = sbr.rel (%p750) target = $region20
        $region19: #{tpu_custom_call.1} parent=11 // pred_region
          _
        $region20: #{tpu_custom_call.1} parent=11 // pred_fallthru
          _
        // Predicated region
        $region21: #{tpu_custom_call.1} parent=11 // pred_check
          %p753 = pneg %p187
        $region22: #{tpu_custom_call.1} parent=11 // pred_check_branch
          %755 = sbr.rel (%p753) target = $region24
        $region23: #{tpu_custom_call.1} parent=11 // pred_region
          _
        $region24: #{tpu_custom_call.1} parent=11 // pred_fallthru
          _
        // Predicated region
        $region25: #{tpu_custom_call.1} parent=11 // pred_check
          %p756 = pneg %p208
        $region26: #{tpu_custom_call.1} parent=11 // pred_check_branch
          %758 = sbr.rel (%p756) target = $region28
        $region27: #{tpu_custom_call.1} parent=11 // pred_region
          _
        $region28: #{tpu_custom_call.1} parent=11 // pred_fallthru
          _
        // Predicated region
        $region29: #{tpu_custom_call.1} parent=11 // pred_check
          %p759 = pneg %p229
        $region30: #{tpu_custom_call.1} parent=11 // pred_check_branch
          %761 = sbr.rel (%p759) target = $region32
        $region31: #{tpu_custom_call.1} parent=11 // pred_region
          _
        $region32: #{tpu_custom_call.1} parent=11 // pred_fallthru
          _
        // Predicated region
        $region33: #{tpu_custom_call.1} parent=11 // pred_check
          %p762 = pneg %p250
        $region34: #{tpu_custom_call.1} parent=11 // pred_check_branch
          %764 = sbr.rel (%p762) target = $region36
        $region35: #{tpu_custom_call.1} parent=11 // pred_region
          _
        $region36: #{tpu_custom_call.1} parent=11 // pred_fallthru
          _
        // Predicated region
        $region37: #{tpu_custom_call.1} parent=11 // pred_check
          %p765 = pneg %p271
        $region38: #{tpu_custom_call.1} parent=11 // pred_check_branch
          %767 = sbr.rel (%p765) target = $region40
        $region39: #{tpu_custom_call.1} parent=11 // pred_region
          _
        $region40: #{tpu_custom_call.1} parent=11 // pred_fallthru
          _
        // Predicated region
        $region41: #{tpu_custom_call.1} parent=11 // pred_check
          %p768 = pneg %p292
        $region42: #{tpu_custom_call.1} parent=11 // pred_check_branch
          %770 = sbr.rel (%p768) target = $region44
        $region43: #{tpu_custom_call.1} parent=11 // pred_region
          _
        $region44: #{tpu_custom_call.1} parent=11 // pred_fallthru
          _
        // Predicated region
        $region45: #{tpu_custom_call.1} parent=11 // pred_check
          %p771 = pneg %p313
        $region46: #{tpu_custom_call.1} parent=11 // pred_check_branch
          %773 = sbr.rel (%p771) target = $region48
        $region47: #{tpu_custom_call.1} parent=11 // pred_region
          _
        $region48: #{tpu_custom_call.1} parent=11 // pred_fallthru
          _
        // Predicated region
        $region49: #{tpu_custom_call.1} parent=11 // pred_check
          %p774 = pneg %p334
        $region50: #{tpu_custom_call.1} parent=11 // pred_check_branch
          %776 = sbr.rel (%p774) target = $region52
        $region51: #{tpu_custom_call.1} parent=11 // pred_region
          _
        $region52: #{tpu_custom_call.1} parent=11 // pred_fallthru
          _
        // Predicated region
        $region53: #{tpu_custom_call.1} parent=11 // pred_check
          %p777 = pneg %p355
        $region54: #{tpu_custom_call.1} parent=11 // pred_check_branch
          %779 = sbr.rel (%p777) target = $region56
        $region55: #{tpu_custom_call.1} parent=11 // pred_region
          _
        $region56: #{tpu_custom_call.1} parent=11 // pred_fallthru
          _
        // Predicated region
        $region57: #{tpu_custom_call.1} parent=11 // pred_check
          %p780 = pneg %p376
        $region58: #{tpu_custom_call.1} parent=11 // pred_check_branch
          %782 = sbr.rel (%p780) target = $region60
        $region59: #{tpu_custom_call.1} parent=11 // pred_region
          _
        $region60: #{tpu_custom_call.1} parent=11 // pred_fallthru
          _
        // Predicated region
        $region61: #{tpu_custom_call.1} parent=11 // pred_check
          %p783 = pneg %p397
        $region62: #{tpu_custom_call.1} parent=11 // pred_check_branch
          %785 = sbr.rel (%p783) target = $region64
        $region63: #{tpu_custom_call.1} parent=11 // pred_region
          _
        $region64: #{tpu_custom_call.1} parent=11 // pred_fallthru
          _
        // Predicated region
        $region65: #{tpu_custom_call.1} parent=11 // pred_check
          %p786 = pneg %p418
        $region66: #{tpu_custom_call.1} parent=11 // pred_check_branch
          %788 = sbr.rel (%p786) target = $region68
        $region67: #{tpu_custom_call.1} parent=11 // pred_region
          _
        $region68: #{tpu_custom_call.1} parent=11 // pred_fallthru
          _
        // Predicated region
        $region69: #{tpu_custom_call.1} parent=11 // pred_check
          %p789 = pneg %p439
        $region70: #{tpu_custom_call.1} parent=11 // pred_check_branch
          %791 = sbr.rel (%p789) target = $region72
        $region71: #{tpu_custom_call.1} parent=11 // pred_region
          _
        $region72: #{tpu_custom_call.1} parent=11 // pred_fallthru
          _
        // Predicated region
        $region73: #{tpu_custom_call.1} parent=11 // pred_check
          %p792 = pneg %p460
        $region74: #{tpu_custom_call.1} parent=11 // pred_check_branch
          %794 = sbr.rel (%p792) target = $region76
        $region75: #{tpu_custom_call.1} parent=11 // pred_region
          _
        $region76: #{tpu_custom_call.1} parent=11 // pred_fallthru
          _
        // Predicated region
        $region77: #{tpu_custom_call.1} parent=11 // pred_check
          %p795 = pneg %p481
        $region78: #{tpu_custom_call.1} parent=11 // pred_check_branch
          %797 = sbr.rel (%p795) target = $region80
        $region79: #{tpu_custom_call.1} parent=11 // pred_region
          _
        $region80: #{tpu_custom_call.1} parent=11 // pred_fallthru
          _
        // Predicated region
        $region81: #{tpu_custom_call.1} parent=11 // pred_check
          %p798 = pneg %p502
        $region82: #{tpu_custom_call.1} parent=11 // pred_check_branch
          %800 = sbr.rel (%p798) target = $region84
        $region83: #{tpu_custom_call.1} parent=11 // pred_region
          _
        $region84: #{tpu_custom_call.1} parent=11 // pred_fallthru
          _
        // Predicated region
        $region85: #{tpu_custom_call.1} parent=11 // pred_check
          %p801 = pneg %p523
        $region86: #{tpu_custom_call.1} parent=11 // pred_check_branch
          %803 = sbr.rel (%p801) target = $region88
        $region87: #{tpu_custom_call.1} parent=11 // pred_region
          _
        $region88: #{tpu_custom_call.1} parent=11 // pred_fallthru
          _
        // Predicated region
        $region89: #{tpu_custom_call.1} parent=11 // pred_check
          %p804 = pneg %p544
        $region90: #{tpu_custom_call.1} parent=11 // pred_check_branch
          %806 = sbr.rel (%p804) target = $region92
        $region91: #{tpu_custom_call.1} parent=11 // pred_region
          _
        $region92: #{tpu_custom_call.1} parent=11 // pred_fallthru
          _
        // Predicated region
        $region93: #{tpu_custom_call.1} parent=11 // pred_check
          %p807 = pneg %p565
        $region94: #{tpu_custom_call.1} parent=11 // pred_check_branch
          %809 = sbr.rel (%p807) target = $region96
        $region95: #{tpu_custom_call.1} parent=11 // pred_region
          _
        $region96: #{tpu_custom_call.1} parent=11 // pred_fallthru
          _
        // Predicated region
        $region97: #{tpu_custom_call.1} parent=11 // pred_check
          %p810 = pneg %p586
        $region98: #{tpu_custom_call.1} parent=11 // pred_check_branch
          %812 = sbr.rel (%p810) target = $region100
        $region99: #{tpu_custom_call.1} parent=11 // pred_region
          _
        $region100: #{tpu_custom_call.1} parent=11 // pred_fallthru
          _
        // Predicated region
        $region101: #{tpu_custom_call.1} parent=11 // pred_check
          %p813 = pneg %p607
        $region102: #{tpu_custom_call.1} parent=11 // pred_check_branch
          %815 = sbr.rel (%p813) target = $region104
        $region103: #{tpu_custom_call.1} parent=11 // pred_region
          _
        $region104: #{tpu_custom_call.1} parent=11 // pred_fallthru
          _
        // Predicated region
        $region105: #{tpu_custom_call.1} parent=11 // pred_check
          %p816 = pneg %p628
        $region106: #{tpu_custom_call.1} parent=11 // pred_check_branch
          %818 = sbr.rel (%p816) target = $region108
        $region107: #{tpu_custom_call.1} parent=11 // pred_region
          _
        $region108: #{tpu_custom_call.1} parent=11 // pred_fallthru
          _
      $region12: #{tpu_custom_call.1} parent=5 // pred_fallthru
        _
      %p819 = scmp.lt.s32.totalorder %s72, 2
      // Predicated region
      $region109: #{tpu_custom_call.1} parent=5 // pred_check
        %p820 = pneg %p819
      $region110: #{tpu_custom_call.1} parent=5 // pred_check_branch
        %822 = sbr.rel (%p820) target = $region112
      $region111: #{tpu_custom_call.1} parent=5 // pred_region
        // Predicated region
        $region113: #{tpu_custom_call.1} parent=111 // pred_check
          %p823 = pneg %p92
        $region114: #{tpu_custom_call.1} parent=111 // pred_check_branch
          %825 = sbr.rel (%p823) target = $region116
        $region115: #{tpu_custom_call.1} parent=111 // pred_region
          %p826 = scmp.lt.s32.totalorder %s72, 1
          %s827 = scalar_select %p826, %s72, 1
          %s828 = smul.addr %s827, 8
          %s829 = scalar_lea.vmem %s1, %s828
        $region116: #{tpu_custom_call.1} parent=111 // pred_fallthru
          _
        // Predicated region
        $region117: #{tpu_custom_call.1} parent=111 // pred_check
          %p830 = pneg %p118
        $region118: #{tpu_custom_call.1} parent=111 // pred_check_branch
          %832 = sbr.rel (%p830) target = $region120
        $region119: #{tpu_custom_call.1} parent=111 // pred_region
          %p833 = scmp.lt.s32.totalorder %s72, 1
          %s834 = scalar_select %p833, %s72, 1
          %s835 = smul.addr %s834, 8
          %s836 = scalar_lea.vmem %s3, %s835
        $region120: #{tpu_custom_call.1} parent=111 // pred_fallthru
          _
      $region112: #{tpu_custom_call.1} parent=5 // pred_fallthru
        _
      %p837 = scmp.le.s32.totalorder 1, %s72
      %p838 = scmp.lt.s32.totalorder %s72, 3
      %p839 = pnand %p837, %p838
      %p840 = pneg %p839
      // Predicated region
      $region121: #{tpu_custom_call.1} parent=5 // pred_check
        _
      $region122: #{tpu_custom_call.1} parent=5 // pred_check_branch
        %842 = sbr.rel (%p839) target = $region124
      $region123: #{tpu_custom_call.1} parent=5 // pred_region
        %s843 = ssub.s32 %s72, 1
        %p844 = scmp.lt.s32.totalorder %s77, 1
        %s845 = scalar_select %p844, %s77, 1
        %s846 = smul.addr %s845, 8
        %s847 = scalar_lea.vmem %s1, %s846
        %p848 = pneg %p98
        %p849 = pneg %p95
        %p850 = scmp.lt.s32.totalorder %s77, 1
        %s851 = scalar_select %p850, %s77, 1
        %s852 = smul.addr %s851, 8
        %s853 = scalar_lea.vmem %s3, %s852
        %p854 = pneg %p124
        %p855 = pneg %p121
        %p856 = pneg %p145
        %p857 = pneg %p142
        %p858 = pneg %p166
        %p859 = pneg %p163
        %p860 = pneg %p187
        %p861 = pneg %p184
        %p862 = pneg %p208
        %p863 = pneg %p205
        %p864 = pneg %p229
        %p865 = pneg %p226
        %p866 = pneg %p250
        %p867 = pneg %p247
        %p868 = pneg %p271
        %p869 = pneg %p268
        %p870 = pneg %p292
        %p871 = pneg %p289
        %p872 = pneg %p313
        %p873 = pneg %p310
        %p874 = pneg %p334
        %p875 = pneg %p331
        %p876 = pneg %p355
        %p877 = pneg %p352
        %p878 = pneg %p376
        %p879 = pneg %p373
        %p880 = pneg %p397
        %p881 = pneg %p394
        %p882 = pneg %p418
        %p883 = pneg %p415
        %p884 = pneg %p439
        %p885 = pneg %p436
        %p886 = pneg %p460
        %p887 = pneg %p457
        %p888 = pneg %p481
        %p889 = pneg %p478
        %p890 = pneg %p502
        %p891 = pneg %p499
        %p892 = pneg %p523
        %p893 = pneg %p520
        %p894 = pneg %p544
        %p895 = pneg %p541
        %p896 = pneg %p565
        %p897 = pneg %p562
        %p898 = pneg %p586
        %p899 = pneg %p583
        %p900 = pneg %p607
        %p901 = pneg %p604
        %p902 = pneg %p628
        %p903 = pneg %p625
        %p904 = pneg %p654
        %p905 = pneg %p651
        %p906 = scmp.lt.s32.totalorder %s77, 1
        %s907 = scalar_select %p906, %s77, 1
        %s908 = smul.addr %s907, 2
        %s909 = smul.addr %s908, 8
        %s910 = scalar_lea.vmem %s53, %s909
        %p911 = pneg %p680
        %p912 = pneg %p677
        %p913 = scmp.lt.s32.totalorder %s77, 1
        %s914 = scalar_select %p913, %s77, 1
        %s915 = smul.addr %s914, 2
        %s916 = smul.addr %s915, 8
        %s917 = scalar_lea.vmem %s55, %s916
        %p918 = pneg %p706
        %p919 = pneg %p703
        %s920 = sand.u32 %s693, 1
        %s921 = scalar_lea.sflag [#allocation3], %s920
        %s922 = sand.u32 %s693, 1
        %s923 = smul.addr %s922, 4
        %s924 = scalar_lea.vmem [#allocation2], %s923
        %p925 = pneg %p732
        %p926 = pneg %p729
        %s927 = sand.u32 %s719, 1
        %s928 = scalar_lea.sflag [#allocation5], %s927
        %s929 = sand.u32 %s719, 1
        %s930 = scalar_lea.vmem [#allocation4], %s929
        %p931 = scmp.lt.s32.totalorder %s77, 1
        %s932 = scalar_select %p931, %s77, 1
        %s933 = smul.addr %s932, 8
        %s934 = scalar_lea.vmem %s1, %s933
        %p935 = scmp.lt.s32.totalorder %s77, 1
        %s936 = scalar_select %p935, %s77, 1
        %s937 = smul.addr %s936, 8
        %s938 = scalar_lea.vmem %s3, %s937
        %p939 = scmp.lt.s32.totalorder %s77, 1
        %s940 = scalar_select %p939, %s77, 1
        %s941 = smul.addr %s940, 2
        %s942 = smul.addr %s941, 8
        %s943 = scalar_lea.vmem %s53, %s942
        %p944 = scmp.lt.s32.totalorder %s77, 1
        %s945 = scalar_select %p944, %s77, 1
        %s946 = smul.addr %s945, 2
        %s947 = smul.addr %s946, 8
        %s948 = scalar_lea.vmem %s55, %s947
        %v950 = vld [vmem:[%s934] sm:$0xff]
        %vm951 = vcmask 97280
        %v952 = vsel %vm951, %v950, 0.0
        %v953 = vrot.slane %v952, 4
        %v954 = vadd.f32 %v952, %v953
        %v955 = vrot.slane %v954, 2
        %v956 = vadd.f32 %v954, %v955
        %v957 = vrot.slane %v956, 1
        %v958 = vadd.f32 %v956, %v957
        %v959 = vrcp.pop 8.0
        %v960 = vmul.f32 %v958, %v959
        %v961 = vsub.f32 %v950, %v960
        %v962 = vmul.f32 %v961, %v961
        %v963 = vsel %vm951, %v962, 0.0
        %v964 = vrot.slane %v963, 4
        %v965 = vadd.f32 %v963, %v964
        %v966 = vrot.slane %v965, 2
        %v967 = vadd.f32 %v965, %v966
        %v968 = vrot.slane %v967, 1
        %v969 = vadd.f32 %v967, %v968
        %v970 = vmul.f32 %v969, %v959
        %v971 = vadd.f32 %v970, 1e-05
        %v972 = vrsqrt.pop %v971
        %v973 = vmul.f32 %v971, %v972
        %vm974 = vcmp.eq.f32.partialorder %v971, inf
        %v975 = vsel %vm974, %v971, %v973
        %vm976 = vcmp.eq.f32.partialorder %v971, 0.0
        %v977 = vand.u32 %v971, 2147483648
        %v978 = vsel %vm976, %v977, %v975
        %v979 = vrsqrt.pop %v971
        %v980 = vld [vmem:[%s49] sm:$0x1]
        %v981 = vmul.f32 %v979, %v980
        %v982 = vld [vmem:[%s51] sm:$0x1]
        %v983 = vmul.f32 %v960, %v981
        %v984 = vsub.f32 %v982, %v983
        %v985 = vlaneseq
        %v986 = vshrl.u32 %v985, 7
        %v987 = vsub.s32 0, %v986
        %v988 = vrot.slane %v981, %v987
        %v989 = vmul.f32 %v950, %v988
        %v991 = vlaneseq
        %v992 = vshrl.u32 %v991, 7
        %v993 = vsub.s32 0, %v992
        %v994 = vrot.slane %v984, %v993
        %v996 = vadd.f32 %v989, %v994
        %v997 = vld [vmem:[%s938] sm:$0xff]
        %v998 = vpack.c.bf16 %v997, %v997
        %v999 = vld [vmem:[%s7] sm:$0x3]
        %v1000 = vld [vmem:[%s9] sm:$0xff]
        %vm1001 = vcmask 31744
        %v1003 = vsel %vm1001, %v998, 0
        %vm1005 = vcmask 1041408
        %v1007 = vsel %vm1005, %v999, 0
        %1009 = vmatprep.subr.bf16.mxu0 0
        %1010 = vmatpush1.bf16.msra.mxu0 0
        %1011 = vmatprep.subr.bf16.mxu0 0
        %1012 = vmatpush1.bf16.msra.mxu0 0
        %1013 = vmatprep.subr.bf16.mxu0 0
        %1014 = vmatpush1.bf16.msra.mxu0 0
        %1015 = vmatprep.subr.bf16.mxu0 0
        %1016 = vmatpush1.bf16.msra.mxu0 0
        %1017 = vmatprep.subr.bf16.mxu0 0
        %1018 = vmatpush1.bf16.msra.mxu0 0
        %1019 = vmatprep.subr.bf16.mxu0 0
        %1020 = vmatpush1.bf16.msra.mxu0 0
        %1021 = vmatprep.subr.bf16.mxu0 0
        %1022 = vmatpush1.bf16.msra.mxu0 0
        %1023 = vmatprep.subr.bf16.mxu0 0
        %1024 = vmatpush1.bf16.msra.mxu0 %v1007
        %1025 = vmatprep.subr.bf16.mxu0 0
        %1026 = vmatpush2.bf16.msra.mxu0 0
        %1027 = vmatprep.subr.bf16.mxu0 0
        %1028 = vmatpush2.bf16.msra.mxu0 0
        %1029 = vmatprep.subr.bf16.mxu0 0
        %1030 = vmatpush2.bf16.msra.mxu0 0
        %1031 = vmatprep.subr.bf16.mxu0 0
        %1032 = vmatpush2.bf16.msra.mxu0 0
        %1033 = vmatprep.subr.bf16.mxu0 0
        %1034 = vmatpush2.bf16.msra.mxu0 0
        %1035 = vmatprep.subr.bf16.mxu0 0
        %1036 = vmatpush2.bf16.msra.mxu0 0
        %1037 = vmatprep.subr.bf16.mxu0 0
        %1038 = vmatpush2.bf16.msra.mxu0 0
        %1039 = vmatprep.subr.bf16.mxu0 0
        %1040 = vmatpush2.bf16.msra.mxu0 0
        %1041 = vmatprep.mubr.bf16.mxu0 0
        %1042 = vmatmul.mubr.bf16.gmra.mxu0 %v1003
        %v1043 = vpop.f32.mrf.mxu0
        %v1044 = vadd.f32 %v1000, %v1043
        %v1045 = vpop.f32.mrf.mxu0
        %v1046 = vpop.f32.mrf.mxu0
        %v1047 = vpop.f32.mrf.mxu0
        %1048 = vdwg.mxu0
        %v1049 = vld [vmem:[%s11] sm:$0xff]
        %v1050 = vld [vmem:[%s13] sm:$0xff]
        %v1051 = vpack.c.bf16 %v996, %v996
        %v1052 = vld [vmem:[%s5] sm:$0xf]
        %v1053 = vld [vmem:[%s5 + $0x4] sm:$0x3]
        %v1056 = vunpack.c.l.b16 %v1052
        %v1057 = vunpack.c.l.b16 %v1053
        %v1058 = vpack.c.b16 %v1057, %v1056
        %v1060 = vsel %vm951, %v1051, 0
        %vm1062 = vcmask 1045504
        %v1064 = vsel %vm1062, %v1058, 0
        %1066 = vmatprep.subr.bf16.mxu0 0
        %1067 = vmatpush1.bf16.msra.mxu0 0
        %1068 = vmatprep.subr.bf16.mxu0 0
        %1069 = vmatpush1.bf16.msra.mxu0 0
        %1070 = vmatprep.subr.bf16.mxu0 0
        %1071 = vmatpush1.bf16.msra.mxu0 0
        %1072 = vmatprep.subr.bf16.mxu0 0
        %1073 = vmatpush1.bf16.msra.mxu0 0
        %1074 = vmatprep.subr.bf16.mxu0 0
        %1075 = vmatpush1.bf16.msra.mxu0 0
        %1076 = vmatprep.subr.bf16.mxu0 0
        %1077 = vmatpush1.bf16.msra.mxu0 0
        %1078 = vmatprep.subr.bf16.mxu0 0
        %1079 = vmatpush1.bf16.msra.mxu0 0
        %1080 = vmatprep.subr.bf16.mxu0 0
        %1081 = vmatpush1.bf16.msra.mxu0 %v1064
        %1082 = vmatprep.subr.bf16.mxu0 0
        %1083 = vmatpush2.bf16.msra.mxu0 0
        %1084 = vmatprep.subr.bf16.mxu0 0
        %1085 = vmatpush2.bf16.msra.mxu0 0
        %1086 = vmatprep.subr.bf16.mxu0 0
        %1087 = vmatpush2.bf16.msra.mxu0 0
        %1088 = vmatprep.subr.bf16.mxu0 0
        %1089 = vmatpush2.bf16.msra.mxu0 0
        %1090 = vmatprep.subr.bf16.mxu0 0
        %1091 = vmatpush2.bf16.msra.mxu0 0
        %1092 = vmatprep.subr.bf16.mxu0 0
        %1093 = vmatpush2.bf16.msra.mxu0 0
        %1094 = vmatprep.subr.bf16.mxu0 0
        %1095 = vmatpush2.bf16.msra.mxu0 0
        %1096 = vmatprep.subr.bf16.mxu0 0
        %1097 = vmatpush2.bf16.msra.mxu0 0
        %1098 = vmatprep.mubr.bf16.mxu0 0
        %1099 = vmatmul.mubr.bf16.gmra.mxu0 %v1060
        %v1100 = vpop.f32.mrf.mxu0
        %v1101 = vadd.f32 0.0, %v1100
        %v1102 = vpop.f32.mrf.mxu0
        %v1103 = vpop.f32.mrf.mxu0
        %v1104 = vpop.f32.mrf.mxu0
        %1105 = vdwg.mxu0
        %1107 = vrot.lane.b32.xlu0 %v1101, 112
        %v1108 = vpop.permute.xlu0 %1107
        %vm1110 = vcmask 64512
        %v1112 = vsel %vm1110, %v1049, 0
        %1114 = vmatprep.subr.mxu0 0.0
        %1115 = vmatpush1.msra.mxu0 0.0
        %1116 = vmatprep.subr.mxu0 0.0
        %1117 = vmatpush1.msra.mxu0 0.0
        %1118 = vmatprep.subr.mxu0 0.0
        %1119 = vmatpush1.msra.mxu0 0.0
        %1120 = vmatprep.subr.mxu0 0.0
        %1121 = vmatpush1.msra.mxu0 0.0
        %1122 = vmatprep.subr.mxu0 0.0
        %1123 = vmatpush1.msra.mxu0 0.0
        %1124 = vmatprep.subr.mxu0 0.0
        %1125 = vmatpush1.msra.mxu0 0.0
        %1126 = vmatprep.subr.mxu0 0.0
        %1127 = vmatpush1.msra.mxu0 0.0
        %1128 = vmatprep.subr.mxu0 0.0
        %1129 = vmatpush1.msra.mxu0 0.0
        %1130 = vmatprep.subr.mxu0 0.0
        %1131 = vmatpush1.msra.mxu0 0.0
        %1132 = vmatprep.subr.mxu0 0.0
        %1133 = vmatpush1.msra.mxu0 0.0
        %1134 = vmatprep.subr.mxu0 0.0
        %1135 = vmatpush1.msra.mxu0 0.0
        %1136 = vmatprep.subr.mxu0 0.0
        %1137 = vmatpush1.msra.mxu0 0.0
        %1138 = vmatprep.subr.mxu0 0.0
        %1139 = vmatpush1.msra.mxu0 0.0
        %1140 = vmatprep.subr.mxu0 0.0
        %1141 = vmatpush1.msra.mxu0 0.0
        %1142 = vmatprep.subr.mxu0 0.0
        %1143 = vmatpush1.msra.mxu0 0.0
        %1144 = vmatprep.subr.mxu0 0.0
        %1145 = vmatpush1.msra.mxu0 %v1101
        %1146 = vmatprep.subr.mxu0 0.0
        %1147 = vmatpush2.msra.mxu0 0.0
        %1148 = vmatprep.subr.mxu0 0.0
        %1149 = vmatpush2.msra.mxu0 0.0
        %1150 = vmatprep.subr.mxu0 0.0
        %1151 = vmatpush2.msra.mxu0 0.0
        %1152 = vmatprep.subr.mxu0 0.0
        %1153 = vmatpush2.msra.mxu0 0.0
        %1154 = vmatprep.subr.mxu0 0.0
        %1155 = vmatpush2.msra.mxu0 0.0
        %1156 = vmatprep.subr.mxu0 0.0
        %1157 = vmatpush2.msra.mxu0 0.0
        %1158 = vmatprep.subr.mxu0 0.0
        %1159 = vmatpush2.msra.mxu0 0.0
        %1160 = vmatprep.subr.mxu0 0.0
        %1161 = vmatpush2.msra.mxu0 0.0
        %1162 = vmatprep.subr.mxu0 0.0
        %1163 = vmatpush2.msra.mxu0 0.0
        %1164 = vmatprep.subr.mxu0 0.0
        %1165 = vmatpush2.msra.mxu0 0.0
        %1166 = vmatprep.subr.mxu0 0.0
        %1167 = vmatpush2.msra.mxu0 0.0
        %1168 = vmatprep.subr.mxu0 0.0
        %1169 = vmatpush2.msra.mxu0 0.0
        %1170 = vmatprep.subr.mxu0 0.0
        %1171 = vmatpush2.msra.mxu0 0.0
        %1172 = vmatprep.subr.mxu0 0.0
        %1173 = vmatpush2.msra.mxu0 0.0
        %1174 = vmatprep.subr.mxu0 0.0
        %1175 = vmatpush2.msra.mxu0 0.0
        %1176 = vmatprep.subr.mxu0 0.0
        %1177 = vmatpush2.msra.mxu0 0.0
        %1178 = vmatprep.mubr.f32.mxu0 0.0
        %1179 = vmatmul.mubr.f32.gmra.mxu0 %v1112
        %v1180 = vpop.f32.mrf.mxu0
        %v1181 = vadd.f32 %v1108, %v1180
        %v1182 = vpop.f32.mrf.mxu0
        %1183 = vdwg.mxu0
        %1184 = vrot.lane.b32.xlu0 %v1101, 96
        %v1185 = vpop.permute.xlu0 %1184
        %v1188 = vsel %vm1110, %v1050, 0
        %1190 = vmatprep.subr.mxu0 0.0
        %1191 = vmatpush1.msra.mxu0 0.0
        %1192 = vmatprep.subr.mxu0 0.0
        %1193 = vmatpush1.msra.mxu0 0.0
        %1194 = vmatprep.subr.mxu0 0.0
        %1195 = vmatpush1.msra.mxu0 0.0
        %1196 = vmatprep.subr.mxu0 0.0
        %1197 = vmatpush1.msra.mxu0 0.0
        %1198 = vmatprep.subr.mxu0 0.0
        %1199 = vmatpush1.msra.mxu0 0.0
        %1200 = vmatprep.subr.mxu0 0.0
        %1201 = vmatpush1.msra.mxu0 0.0
        %1202 = vmatprep.subr.mxu0 0.0
        %1203 = vmatpush1.msra.mxu0 0.0
        %1204 = vmatprep.subr.mxu0 0.0
        %1205 = vmatpush1.msra.mxu0 0.0
        %1206 = vmatprep.subr.mxu0 0.0
        %1207 = vmatpush1.msra.mxu0 0.0
        %1208 = vmatprep.subr.mxu0 0.0
        %1209 = vmatpush1.msra.mxu0 0.0
        %1210 = vmatprep.subr.mxu0 0.0
        %1211 = vmatpush1.msra.mxu0 0.0
        %1212 = vmatprep.subr.mxu0 0.0
        %1213 = vmatpush1.msra.mxu0 0.0
        %1214 = vmatprep.subr.mxu0 0.0
        %1215 = vmatpush1.msra.mxu0 0.0
        %1216 = vmatprep.subr.mxu0 0.0
        %1217 = vmatpush1.msra.mxu0 0.0
        %1218 = vmatprep.subr.mxu0 0.0
        %1219 = vmatpush1.msra.mxu0 0.0
        %1220 = vmatprep.subr.mxu0 0.0
        %1221 = vmatpush1.msra.mxu0 %v1185
        %1222 = vmatprep.subr.mxu0 0.0
        %1223 = vmatpush2.msra.mxu0 0.0
        %1224 = vmatprep.subr.mxu0 0.0
        %1225 = vmatpush2.msra.mxu0 0.0
        %1226 = vmatprep.subr.mxu0 0.0
        %1227 = vmatpush2.msra.mxu0 0.0
        %1228 = vmatprep.subr.mxu0 0.0
        %1229 = vmatpush2.msra.mxu0 0.0
        %1230 = vmatprep.subr.mxu0 0.0
        %1231 = vmatpush2.msra.mxu0 0.0
        %1232 = vmatprep.subr.mxu0 0.0
        %1233 = vmatpush2.msra.mxu0 0.0
        %1234 = vmatprep.subr.mxu0 0.0
        %1235 = vmatpush2.msra.mxu0 0.0
        %1236 = vmatprep.subr.mxu0 0.0
        %1237 = vmatpush2.msra.mxu0 0.0
        %1238 = vmatprep.subr.mxu0 0.0
        %1239 = vmatpush2.msra.mxu0 0.0
        %1240 = vmatprep.subr.mxu0 0.0
        %1241 = vmatpush2.msra.mxu0 0.0
        %1242 = vmatprep.subr.mxu0 0.0
        %1243 = vmatpush2.msra.mxu0 0.0
        %1244 = vmatprep.subr.mxu0 0.0
        %1245 = vmatpush2.msra.mxu0 0.0
        %1246 = vmatprep.subr.mxu0 0.0
        %1247 = vmatpush2.msra.mxu0 0.0
        %1248 = vmatprep.subr.mxu0 0.0
        %1249 = vmatpush2.msra.mxu0 0.0
        %1250 = vmatprep.subr.mxu0 0.0
        %1251 = vmatpush2.msra.mxu0 0.0
        %1252 = vmatprep.subr.mxu0 0.0
        %1253 = vmatpush2.msra.mxu0 0.0
        %1254 = vmatprep.mubr.f32.mxu0 0.0
        %1255 = vmatmul.mubr.f32.gmra.mxu0 %v1188
        %v1256 = vpop.f32.mrf.mxu0
        %v1257 = vadd.f32 0.0, %v1256
        %v1258 = vpop.f32.mrf.mxu0
        %1259 = vdwg.mxu0
        %v1260 = vadd.f32 %v1181, %v1257
        %v1261 = vadd.f32 %v1260, %v1044
        %v1262 = vpack.c.bf16 %v950, %v950
        %v1263 = vld [vmem:[%s5] sm:$0xf]
        %v1264 = vld [vmem:[%s5 + $0x4] sm:$0x3]
        %v1267 = vunpack.c.l.b16 %v1263
        %v1268 = vunpack.c.l.b16 %v1264
        %v1269 = vpack.c.b16 %v1268, %v1267
        %v1271 = vsel %vm951, %v1262, 0
        %v1274 = vsel %vm1062, %v1269, 0
        %1276 = vmatprep.subr.bf16.mxu0 0
        %1277 = vmatpush1.bf16.msra.mxu0 0
        %1278 = vmatprep.subr.bf16.mxu0 0
        %1279 = vmatpush1.bf16.msra.mxu0 0
        %1280 = vmatprep.subr.bf16.mxu0 0
        %1281 = vmatpush1.bf16.msra.mxu0 0
        %1282 = vmatprep.subr.bf16.mxu0 0
        %1283 = vmatpush1.bf16.msra.mxu0 0
        %1284 = vmatprep.subr.bf16.mxu0 0
        %1285 = vmatpush1.bf16.msra.mxu0 0
        %1286 = vmatprep.subr.bf16.mxu0 0
        %1287 = vmatpush1.bf16.msra.mxu0 0
        %1288 = vmatprep.subr.bf16.mxu0 0
        %1289 = vmatpush1.bf16.msra.mxu0 0
        %1290 = vmatprep.subr.bf16.mxu0 0
        %1291 = vmatpush1.bf16.msra.mxu0 %v1274
        %1292 = vmatprep.subr.bf16.mxu0 0
        %1293 = vmatpush2.bf16.msra.mxu0 0
        %1294 = vmatprep.subr.bf16.mxu0 0
        %1295 = vmatpush2.bf16.msra.mxu0 0
        %1296 = vmatprep.subr.bf16.mxu0 0
        %1297 = vmatpush2.bf16.msra.mxu0 0
        %1298 = vmatprep.subr.bf16.mxu0 0
        %1299 = vmatpush2.bf16.msra.mxu0 0
        %1300 = vmatprep.subr.bf16.mxu0 0
        %1301 = vmatpush2.bf16.msra.mxu0 0
        %1302 = vmatprep.subr.bf16.mxu0 0
        %1303 = vmatpush2.bf16.msra.mxu0 0
        %1304 = vmatprep.subr.bf16.mxu0 0
        %1305 = vmatpush2.bf16.msra.mxu0 0
        %1306 = vmatprep.subr.bf16.mxu0 0
        %1307 = vmatpush2.bf16.msra.mxu0 0
        %1308 = vmatprep.mubr.bf16.mxu0 0
        %1309 = vmatmul.mubr.bf16.gmra.mxu0 %v1271
        %v1310 = vpop.f32.mrf.mxu0
        %v1311 = vadd.f32 0.0, %v1310
        %v1312 = vpop.f32.mrf.mxu0
        %v1313 = vpop.f32.mrf.mxu0
        %v1314 = vpop.f32.mrf.mxu0
        %1315 = vdwg.mxu0
        %1317 = vrot.lane.b32.xlu0 %v1311, 112
        %v1318 = vpop.permute.xlu0 %1317
        %1320 = vmatprep.subr.mxu0 0.0
        %1321 = vmatpush1.msra.mxu0 0.0
        %1322 = vmatprep.subr.mxu0 0.0
        %1323 = vmatpush1.msra.mxu0 0.0
        %1324 = vmatprep.subr.mxu0 0.0
        %1325 = vmatpush1.msra.mxu0 0.0
        %1326 = vmatprep.subr.mxu0 0.0
        %1327 = vmatpush1.msra.mxu0 0.0
        %1328 = vmatprep.subr.mxu0 0.0
        %1329 = vmatpush1.msra.mxu0 0.0
        %1330 = vmatprep.subr.mxu0 0.0
        %1331 = vmatpush1.msra.mxu0 0.0
        %1332 = vmatprep.subr.mxu0 0.0
        %1333 = vmatpush1.msra.mxu0 0.0
        %1334 = vmatprep.subr.mxu0 0.0
        %1335 = vmatpush1.msra.mxu0 0.0
        %1336 = vmatprep.subr.mxu0 0.0
        %1337 = vmatpush1.msra.mxu0 0.0
        %1338 = vmatprep.subr.mxu0 0.0
        %1339 = vmatpush1.msra.mxu0 0.0
        %1340 = vmatprep.subr.mxu0 0.0
        %1341 = vmatpush1.msra.mxu0 0.0
        %1342 = vmatprep.subr.mxu0 0.0
        %1343 = vmatpush1.msra.mxu0 0.0
        %1344 = vmatprep.subr.mxu0 0.0
        %1345 = vmatpush1.msra.mxu0 0.0
        %1346 = vmatprep.subr.mxu0 0.0
        %1347 = vmatpush1.msra.mxu0 0.0
        %1348 = vmatprep.subr.mxu0 0.0
        %1349 = vmatpush1.msra.mxu0 0.0
        %1350 = vmatprep.subr.mxu0 0.0
        %1351 = vmatpush1.msra.mxu0 %v1311
        %1352 = vmatprep.subr.mxu0 0.0
        %1353 = vmatpush2.msra.mxu0 0.0
        %1354 = vmatprep.subr.mxu0 0.0
        %1355 = vmatpush2.msra.mxu0 0.0
        %1356 = vmatprep.subr.mxu0 0.0
        %1357 = vmatpush2.msra.mxu0 0.0
        %1358 = vmatprep.subr.mxu0 0.0
        %1359 = vmatpush2.msra.mxu0 0.0
        %1360 = vmatprep.subr.mxu0 0.0
        %1361 = vmatpush2.msra.mxu0 0.0
        %1362 = vmatprep.subr.mxu0 0.0
        %1363 = vmatpush2.msra.mxu0 0.0
        %1364 = vmatprep.subr.mxu0 0.0
        %1365 = vmatpush2.msra.mxu0 0.0
        %1366 = vmatprep.subr.mxu0 0.0
        %1367 = vmatpush2.msra.mxu0 0.0
        %1368 = vmatprep.subr.mxu0 0.0
        %1369 = vmatpush2.msra.mxu0 0.0
        %1370 = vmatprep.subr.mxu0 0.0
        %1371 = vmatpush2.msra.mxu0 0.0
        %1372 = vmatprep.subr.mxu0 0.0
        %1373 = vmatpush2.msra.mxu0 0.0
        %1374 = vmatprep.subr.mxu0 0.0
        %1375 = vmatpush2.msra.mxu0 0.0
        %1376 = vmatprep.subr.mxu0 0.0
        %1377 = vmatpush2.msra.mxu0 0.0
        %1378 = vmatprep.subr.mxu0 0.0
        %1379 = vmatpush2.msra.mxu0 0.0
        %1380 = vmatprep.subr.mxu0 0.0
        %1381 = vmatpush2.msra.mxu0 0.0
        %1382 = vmatprep.subr.mxu0 0.0
        %1383 = vmatpush2.msra.mxu0 0.0
        %1384 = vmatprep.mubr.f32.mxu0 0.0
        %1385 = vmatmul.mubr.f32.gmra.mxu0 %v1112
        %v1386 = vpop.f32.mrf.mxu0
        %v1387 = vadd.f32 %v1318, %v1386
        %v1388 = vpop.f32.mrf.mxu0
        %1389 = vdwg.mxu0
        %1390 = vrot.lane.b32.xlu0 %v1311, 96
        %v1391 = vpop.permute.xlu0 %1390
        %1393 = vmatprep.subr.mxu0 0.0
        %1394 = vmatpush1.msra.mxu0 0.0
        %1395 = vmatprep.subr.mxu0 0.0
        %1396 = vmatpush1.msra.mxu0 0.0
        %1397 = vmatprep.subr.mxu0 0.0
        %1398 = vmatpush1.msra.mxu0 0.0
        %1399 = vmatprep.subr.mxu0 0.0
        %1400 = vmatpush1.msra.mxu0 0.0
        %1401 = vmatprep.subr.mxu0 0.0
        %1402 = vmatpush1.msra.mxu0 0.0
        %1403 = vmatprep.subr.mxu0 0.0
        %1404 = vmatpush1.msra.mxu0 0.0
        %1405 = vmatprep.subr.mxu0 0.0
        %1406 = vmatpush1.msra.mxu0 0.0
        %1407 = vmatprep.subr.mxu0 0.0
        %1408 = vmatpush1.msra.mxu0 0.0
        %1409 = vmatprep.subr.mxu0 0.0
        %1410 = vmatpush1.msra.mxu0 0.0
        %1411 = vmatprep.subr.mxu0 0.0
        %1412 = vmatpush1.msra.mxu0 0.0
        %1413 = vmatprep.subr.mxu0 0.0
        %1414 = vmatpush1.msra.mxu0 0.0
        %1415 = vmatprep.subr.mxu0 0.0
        %1416 = vmatpush1.msra.mxu0 0.0
        %1417 = vmatprep.subr.mxu0 0.0
        %1418 = vmatpush1.msra.mxu0 0.0
        %1419 = vmatprep.subr.mxu0 0.0
        %1420 = vmatpush1.msra.mxu0 0.0
        %1421 = vmatprep.subr.mxu0 0.0
        %1422 = vmatpush1.msra.mxu0 0.0
        %1423 = vmatprep.subr.mxu0 0.0
        %1424 = vmatpush1.msra.mxu0 %v1391
        %1425 = vmatprep.subr.mxu0 0.0
        %1426 = vmatpush2.msra.mxu0 0.0
        %1427 = vmatprep.subr.mxu0 0.0
        %1428 = vmatpush2.msra.mxu0 0.0
        %1429 = vmatprep.subr.mxu0 0.0
        %1430 = vmatpush2.msra.mxu0 0.0
        %1431 = vmatprep.subr.mxu0 0.0
        %1432 = vmatpush2.msra.mxu0 0.0
        %1433 = vmatprep.subr.mxu0 0.0
        %1434 = vmatpush2.msra.mxu0 0.0
        %1435 = vmatprep.subr.mxu0 0.0
        %1436 = vmatpush2.msra.mxu0 0.0
        %1437 = vmatprep.subr.mxu0 0.0
        %1438 = vmatpush2.msra.mxu0 0.0
        %1439 = vmatprep.subr.mxu0 0.0
        %1440 = vmatpush2.msra.mxu0 0.0
        %1441 = vmatprep.subr.mxu0 0.0
        %1442 = vmatpush2.msra.mxu0 0.0
        %1443 = vmatprep.subr.mxu0 0.0
        %1444 = vmatpush2.msra.mxu0 0.0
        %1445 = vmatprep.subr.mxu0 0.0
        %1446 = vmatpush2.msra.mxu0 0.0
        %1447 = vmatprep.subr.mxu0 0.0
        %1448 = vmatpush2.msra.mxu0 0.0
        %1449 = vmatprep.subr.mxu0 0.0
        %1450 = vmatpush2.msra.mxu0 0.0
        %1451 = vmatprep.subr.mxu0 0.0
        %1452 = vmatpush2.msra.mxu0 0.0
        %1453 = vmatprep.subr.mxu0 0.0
        %1454 = vmatpush2.msra.mxu0 0.0
        %1455 = vmatprep.subr.mxu0 0.0
        %1456 = vmatpush2.msra.mxu0 0.0
        %1457 = vmatprep.mubr.f32.mxu0 0.0
        %1458 = vmatmul.mubr.f32.gmra.mxu0 %v1188
        %v1459 = vpop.f32.mrf.mxu0
        %v1460 = vadd.f32 0.0, %v1459
        %v1461 = vpop.f32.mrf.mxu0
        %1462 = vdwg.mxu0
        %v1463 = vadd.f32 %v1387, %v1460
        %v1464 = vadd.f32 %v1463, %v1044
        %v1465 = vpack.c.bf16 %v1261, %v1261
        %v1466 = vld [vmem:[%s15] sm:$0xf]
        %v1467 = vld [vmem:[%s15 + $0x4] sm:$0xf]
        %v1468 = vld [vmem:[%s17] sm:$0x1]
        %v1470 = vlaneseq
        %v1471 = vshrl.u32 %v1470, 7
        %v1472 = vsub.s32 0, %v1471
        %v1473 = vrot.slane %v1468, %v1472
        %v1477 = vunpack.c.l.b16 %v1466
        %v1478 = vunpack.c.l.b16 %v1467
        %v1479 = vpack.c.b16 %v1478, %v1477
        %vm1481 = vcmask 130048
        %v1483 = vsel %vm1481, %v1465, 0
        %1485 = vmatprep.subr.bf16.mxu0 0
        %1486 = vmatpush1.bf16.msra.mxu0 0
        %1487 = vmatprep.subr.bf16.mxu0 0
        %1488 = vmatpush1.bf16.msra.mxu0 0
        %1489 = vmatprep.subr.bf16.mxu0 0
        %1490 = vmatpush1.bf16.msra.mxu0 0
        %1491 = vmatprep.subr.bf16.mxu0 0
        %1492 = vmatpush1.bf16.msra.mxu0 0
        %1493 = vmatprep.subr.bf16.mxu0 0
        %1494 = vmatpush1.bf16.msra.mxu0 0
        %1495 = vmatprep.subr.bf16.mxu0 0
        %1496 = vmatpush1.bf16.msra.mxu0 0
        %1497 = vmatprep.subr.bf16.mxu0 0
        %1498 = vmatpush1.bf16.msra.mxu0 0
        %1499 = vmatprep.subr.bf16.mxu0 0
        %1500 = vmatpush1.bf16.msra.mxu0 %v1479
        %1501 = vmatprep.subr.bf16.mxu0 0
        %1502 = vmatpush2.bf16.msra.mxu0 0
        %1503 = vmatprep.subr.bf16.mxu0 0
        %1504 = vmatpush2.bf16.msra.mxu0 0
        %1505 = vmatprep.subr.bf16.mxu0 0
        %1506 = vmatpush2.bf16.msra.mxu0 0
        %1507 = vmatprep.subr.bf16.mxu0 0
        %1508 = vmatpush2.bf16.msra.mxu0 0
        %1509 = vmatprep.subr.bf16.mxu0 0
        %1510 = vmatpush2.bf16.msra.mxu0 0
        %1511 = vmatprep.subr.bf16.mxu0 0
        %1512 = vmatpush2.bf16.msra.mxu0 0
        %1513 = vmatprep.subr.bf16.mxu0 0
        %1514 = vmatpush2.bf16.msra.mxu0 0
        %1515 = vmatprep.subr.bf16.mxu0 0
        %1516 = vmatpush2.bf16.msra.mxu0 0
        %1517 = vmatprep.mubr.bf16.mxu0 0
        %1518 = vmatmul.mubr.bf16.gmra.mxu0 %v1483
        %v1519 = vpop.f32.mrf.mxu0
        %v1520 = vadd.f32 %v1473, %v1519
        %v1521 = vpop.f32.mrf.mxu0
        %v1522 = vpop.f32.mrf.mxu0
        %v1523 = vpop.f32.mrf.mxu0
        %1524 = vdwg.mxu0
        %v1525 = vpack.c.bf16 %v1520, %v1520
        %1527 = vrot.lane.b32.xlu0 %v1525, 112
        %v1528 = vpop.permute.xlu0 %1527
        %v1530 = vsel %vm1481, %v1525, 0
        %v1533 = vsel %vm1481, %v1528, 0
        %1535 = vmatprep.subr.bf16.mxu0 0
        %1536 = vmatpush1.bf16.xpose.msra.mxu0 0
        %1537 = vmatprep.subr.bf16.mxu0 0
        %1538 = vmatpush1.bf16.xpose.msra.mxu0 0
        %1539 = vmatprep.subr.bf16.mxu0 0
        %1540 = vmatpush1.bf16.xpose.msra.mxu0 0
        %1541 = vmatprep.subr.bf16.mxu0 0
        %1542 = vmatpush1.bf16.xpose.msra.mxu0 0
        %1543 = vmatprep.subr.bf16.mxu0 0
        %1544 = vmatpush1.bf16.xpose.msra.mxu0 0
        %1545 = vmatprep.subr.bf16.mxu0 0
        %1546 = vmatpush1.bf16.xpose.msra.mxu0 0
        %1547 = vmatprep.subr.bf16.mxu0 0
        %1548 = vmatpush1.bf16.xpose.msra.mxu0 0
        %1549 = vmatprep.subr.bf16.mxu0 0
        %1550 = vmatpush1.bf16.xpose.msra.mxu0 %v1533
        %1551 = vmatprep.subr.bf16.mxu0 0
        %1552 = vmatpush2.bf16.xpose.msra.mxu0 0
        %1553 = vmatprep.subr.bf16.mxu0 0
        %1554 = vmatpush2.bf16.xpose.msra.mxu0 0
        %1555 = vmatprep.subr.bf16.mxu0 0
        %1556 = vmatpush2.bf16.xpose.msra.mxu0 0
        %1557 = vmatprep.subr.bf16.mxu0 0
        %1558 = vmatpush2.bf16.xpose.msra.mxu0 0
        %1559 = vmatprep.subr.bf16.mxu0 0
        %1560 = vmatpush2.bf16.xpose.msra.mxu0 0
        %1561 = vmatprep.subr.bf16.mxu0 0
        %1562 = vmatpush2.bf16.xpose.msra.mxu0 0
        %1563 = vmatprep.subr.bf16.mxu0 0
        %1564 = vmatpush2.bf16.xpose.msra.mxu0 0
        %1565 = vmatprep.subr.bf16.mxu0 0
        %1566 = vmatpush2.bf16.xpose.msra.mxu0 0
        %1567 = vmatprep.mubr.bf16.mxu0 0
        %1568 = vmatmul.mubr.bf16.gmra.mxu0 %v1530
        %v1569 = vpop.f32.mrf.mxu0
        %v1570 = vadd.f32 0.0, %v1569
        %v1571 = vpop.f32.mrf.mxu0
        %v1572 = vpop.f32.mrf.mxu0
        %v1573 = vpop.f32.mrf.mxu0
        %1574 = vdwg.mxu0
        %v1575 = vmul.f32 %v1570, 0.25
        %v1576 = vsel %vm1110, %v1575, -inf
        %1577 = vmax.xlane.f32.xlu0 %v1576
        %v1578 = vpop.xlane.xlu0 %1577
        %v1579 = vsub.f32 %v1575, %v1578
        %v1580 = vmul.f32 %v1579, 1.442695
        %v1581 = vpow.pop %v1580
        %v1582 = vsel %vm1110, %v1581, 0.0
        %1583 = vadd.xlane.f32.xlu0 %v1582
        %v1584 = vpop.xlane.xlu0 %1583
        %v1585 = vrcp.pop %v1584
        %v1586 = vmul.f32 %v1581, %v1585
        %v1587 = vpack.c.bf16 %v1586, %v1586
        %1588 = vrot.lane.b32.xlu0 %v1525, 96
        %v1589 = vpop.permute.xlu0 %1588
        %v1591 = vsel %vm1110, %v1587, 0
        %vm1593 = vcmask 1043456
        %v1595 = vsel %vm1593, %v1589, 0
        %1597 = vmatprep.subr.bf16.mxu0 0
        %1598 = vmatpush1.bf16.msra.mxu0 0
        %1599 = vmatprep.subr.bf16.mxu0 0
        %1600 = vmatpush1.bf16.msra.mxu0 0
        %1601 = vmatprep.subr.bf16.mxu0 0
        %1602 = vmatpush1.bf16.msra.mxu0 0
        %1603 = vmatprep.subr.bf16.mxu0 0
        %1604 = vmatpush1.bf16.msra.mxu0 0
        %1605 = vmatprep.subr.bf16.mxu0 0
        %1606 = vmatpush1.bf16.msra.mxu0 0
        %1607 = vmatprep.subr.bf16.mxu0 0
        %1608 = vmatpush1.bf16.msra.mxu0 0
        %1609 = vmatprep.subr.bf16.mxu0 0
        %1610 = vmatpush1.bf16.msra.mxu0 0
        %1611 = vmatprep.subr.bf16.mxu0 0
        %1612 = vmatpush1.bf16.msra.mxu0 %v1595
        %1613 = vmatprep.subr.bf16.mxu0 0
        %1614 = vmatpush2.bf16.msra.mxu0 0
        %1615 = vmatprep.subr.bf16.mxu0 0
        %1616 = vmatpush2.bf16.msra.mxu0 0
        %1617 = vmatprep.subr.bf16.mxu0 0
        %1618 = vmatpush2.bf16.msra.mxu0 0
        %1619 = vmatprep.subr.bf16.mxu0 0
        %1620 = vmatpush2.bf16.msra.mxu0 0
        %1621 = vmatprep.subr.bf16.mxu0 0
        %1622 = vmatpush2.bf16.msra.mxu0 0
        %1623 = vmatprep.subr.bf16.mxu0 0
        %1624 = vmatpush2.bf16.msra.mxu0 0
        %1625 = vmatprep.subr.bf16.mxu0 0
        %1626 = vmatpush2.bf16.msra.mxu0 0
        %1627 = vmatprep.subr.bf16.mxu0 0
        %1628 = vmatpush2.bf16.msra.mxu0 0
        %1629 = vmatprep.mubr.bf16.mxu0 0
        %1630 = vmatmul.mubr.bf16.gmra.mxu0 %v1591
        %v1631 = vpop.f32.mrf.mxu0
        %v1632 = vadd.f32 0.0, %v1631
        %v1633 = vpop.f32.mrf.mxu0
        %v1634 = vpop.f32.mrf.mxu0
        %v1635 = vpop.f32.mrf.mxu0
        %1636 = vdwg.mxu0
        %v1637 = vpack.c.bf16 %v1632, %v1632
        %v1638 = vld [vmem:[%s19] sm:$0xf]
        %v1639 = vld [vmem:[%s19 + $0x4] sm:$0xf]
        %v1642 = vunpack.c.l.b16 %v1638
        %v1643 = vunpack.c.l.b16 %v1639
        %v1644 = vpack.c.b16 %v1643, %v1642
        %v1647 = vsel %vm1481, %v1637, 0
        %1649 = vmatprep.subr.bf16.mxu0 0
        %1650 = vmatpush1.bf16.msra.mxu0 0
        %1651 = vmatprep.subr.bf16.mxu0 0
        %1652 = vmatpush1.bf16.msra.mxu0 0
        %1653 = vmatprep.subr.bf16.mxu0 0
        %1654 = vmatpush1.bf16.msra.mxu0 0
        %1655 = vmatprep.subr.bf16.mxu0 0
        %1656 = vmatpush1.bf16.msra.mxu0 0
        %1657 = vmatprep.subr.bf16.mxu0 0
        %1658 = vmatpush1.bf16.msra.mxu0 0
        %1659 = vmatprep.subr.bf16.mxu0 0
        %1660 = vmatpush1.bf16.msra.mxu0 0
        %1661 = vmatprep.subr.bf16.mxu0 0
        %1662 = vmatpush1.bf16.msra.mxu0 0
        %1663 = vmatprep.subr.bf16.mxu0 0
        %1664 = vmatpush1.bf16.msra.mxu0 %v1644
        %1665 = vmatprep.subr.bf16.mxu0 0
        %1666 = vmatpush2.bf16.msra.mxu0 0
        %1667 = vmatprep.subr.bf16.mxu0 0
        %1668 = vmatpush2.bf16.msra.mxu0 0
        %1669 = vmatprep.subr.bf16.mxu0 0
        %1670 = vmatpush2.bf16.msra.mxu0 0
        %1671 = vmatprep.subr.bf16.mxu0 0
        %1672 = vmatpush2.bf16.msra.mxu0 0
        %1673 = vmatprep.subr.bf16.mxu0 0
        %1674 = vmatpush2.bf16.msra.mxu0 0
        %1675 = vmatprep.subr.bf16.mxu0 0
        %1676 = vmatpush2.bf16.msra.mxu0 0
        %1677 = vmatprep.subr.bf16.mxu0 0
        %1678 = vmatpush2.bf16.msra.mxu0 0
        %1679 = vmatprep.subr.bf16.mxu0 0
        %1680 = vmatpush2.bf16.msra.mxu0 0
        %1681 = vmatprep.mubr.bf16.mxu0 0
        %1682 = vmatmul.mubr.bf16.gmra.mxu0 %v1647
        %v1683 = vpop.f32.mrf.mxu0
        %v1684 = vadd.f32 0.0, %v1683
        %v1685 = vpop.f32.mrf.mxu0
        %v1686 = vpop.f32.mrf.mxu0
        %v1687 = vpop.f32.mrf.mxu0
        %1688 = vdwg.mxu0
        %v1689 = vadd.f32 %v1261, %v1684
        %v1690 = vld [vmem:[%s21] sm:$0x1]
        %v1692 = vlaneseq
        %v1693 = vshrl.u32 %v1692, 7
        %v1694 = vsub.s32 0, %v1693
        %v1695 = vrot.slane %v1690, %v1694
        %v1697 = vadd.f32 %v1689, %v1695
        %v1698 = vpack.c.bf16 %v1697, %v1697
        %v1699 = vld [vmem:[%s23] sm:$0xf]
        %v1700 = vld [vmem:[%s23 + $0x4] sm:$0xf]
        %v1701 = vld [vmem:[%s25] sm:$0x1]
        %v1703 = vlaneseq
        %v1704 = vshrl.u32 %v1703, 7
        %v1705 = vsub.s32 0, %v1704
        %v1706 = vrot.slane %v1701, %v1705
        %v1710 = vunpack.c.l.b16 %v1699
        %v1711 = vunpack.c.l.b16 %v1700
        %v1712 = vpack.c.b16 %v1711, %v1710
        %v1715 = vsel %vm1481, %v1698, 0
        %1717 = vmatprep.subr.bf16.mxu0 0
        %1718 = vmatpush1.bf16.msra.mxu0 0
        %1719 = vmatprep.subr.bf16.mxu0 0
        %1720 = vmatpush1.bf16.msra.mxu0 0
        %1721 = vmatprep.subr.bf16.mxu0 0
        %1722 = vmatpush1.bf16.msra.mxu0 0
        %1723 = vmatprep.subr.bf16.mxu0 0
        %1724 = vmatpush1.bf16.msra.mxu0 0
        %1725 = vmatprep.subr.bf16.mxu0 0
        %1726 = vmatpush1.bf16.msra.mxu0 0
        %1727 = vmatprep.subr.bf16.mxu0 0
        %1728 = vmatpush1.bf16.msra.mxu0 0
        %1729 = vmatprep.subr.bf16.mxu0 0
        %1730 = vmatpush1.bf16.msra.mxu0 0
        %1731 = vmatprep.subr.bf16.mxu0 0
        %1732 = vmatpush1.bf16.msra.mxu0 %v1712
        %1733 = vmatprep.subr.bf16.mxu0 0
        %1734 = vmatpush2.bf16.msra.mxu0 0
        %1735 = vmatprep.subr.bf16.mxu0 0
        %1736 = vmatpush2.bf16.msra.mxu0 0
        %1737 = vmatprep.subr.bf16.mxu0 0
        %1738 = vmatpush2.bf16.msra.mxu0 0
        %1739 = vmatprep.subr.bf16.mxu0 0
        %1740 = vmatpush2.bf16.msra.mxu0 0
        %1741 = vmatprep.subr.bf16.mxu0 0
        %1742 = vmatpush2.bf16.msra.mxu0 0
        %1743 = vmatprep.subr.bf16.mxu0 0
        %1744 = vmatpush2.bf16.msra.mxu0 0
        %1745 = vmatprep.subr.bf16.mxu0 0
        %1746 = vmatpush2.bf16.msra.mxu0 0
        %1747 = vmatprep.subr.bf16.mxu0 0
        %1748 = vmatpush2.bf16.msra.mxu0 0
        %1749 = vmatprep.mubr.bf16.mxu0 0
        %1750 = vmatmul.mubr.bf16.gmra.mxu0 %v1715
        %v1751 = vpop.f32.mrf.mxu0
        %v1752 = vadd.f32 %v1706, %v1751
        %v1753 = vpop.f32.mrf.mxu0
        %v1754 = vpop.f32.mrf.mxu0
        %v1755 = vpop.f32.mrf.mxu0
        %1756 = vdwg.mxu0
        %v1757 = vmax.f32 %v1752, 0.0
        %v1758 = vpack.c.bf16 %v1757, %v1757
        %v1759 = vld [vmem:[%s27] sm:$0xf]
        %v1760 = vld [vmem:[%s27 + $0x4] sm:$0xf]
        %v1761 = vld [vmem:[%s27 + $0x8] sm:$0xf]
        %v1762 = vld [vmem:[%s27 + $0xc] sm:$0xf]
        %v1767 = vunpack.c.l.b16 %v1759
        %v1768 = vunpack.c.l.b16 %v1760
        %v1769 = vunpack.c.l.b16 %v1761
        %v1770 = vunpack.c.l.b16 %v1762
        %v1771 = vpack.c.b16 %v1768, %v1767
        %v1772 = vpack.c.b16 %v1770, %v1769
        %vm1775 = vcmask 261120
        %v1777 = vsel %vm1775, %v1758, 0
        %1779 = vmatprep.subr.bf16.mxu0 0
        %1780 = vmatpush1.bf16.msra.mxu0 0
        %1781 = vmatprep.subr.bf16.mxu0 0
        %1782 = vmatpush1.bf16.msra.mxu0 0
        %1783 = vmatprep.subr.bf16.mxu0 0
        %1784 = vmatpush1.bf16.msra.mxu0 0
        %1785 = vmatprep.subr.bf16.mxu0 0
        %1786 = vmatpush1.bf16.msra.mxu0 0
        %1787 = vmatprep.subr.bf16.mxu0 0
        %1788 = vmatpush1.bf16.msra.mxu0 0
        %1789 = vmatprep.subr.bf16.mxu0 0
        %1790 = vmatpush1.bf16.msra.mxu0 0
        %1791 = vmatprep.subr.bf16.mxu0 0
        %1792 = vmatpush1.bf16.msra.mxu0 %v1772
        %1793 = vmatprep.subr.bf16.mxu0 0
        %1794 = vmatpush1.bf16.msra.mxu0 %v1771
        %1795 = vmatprep.subr.bf16.mxu0 0
        %1796 = vmatpush2.bf16.msra.mxu0 0
        %1797 = vmatprep.subr.bf16.mxu0 0
        %1798 = vmatpush2.bf16.msra.mxu0 0
        %1799 = vmatprep.subr.bf16.mxu0 0
        %1800 = vmatpush2.bf16.msra.mxu0 0
        %1801 = vmatprep.subr.bf16.mxu0 0
        %1802 = vmatpush2.bf16.msra.mxu0 0
        %1803 = vmatprep.subr.bf16.mxu0 0
        %1804 = vmatpush2.bf16.msra.mxu0 0
        %1805 = vmatprep.subr.bf16.mxu0 0
        %1806 = vmatpush2.bf16.msra.mxu0 0
        %1807 = vmatprep.subr.bf16.mxu0 0
        %1808 = vmatpush2.bf16.msra.mxu0 0
        %1809 = vmatprep.subr.bf16.mxu0 0
        %1810 = vmatpush2.bf16.msra.mxu0 0
        %1811 = vmatprep.mubr.bf16.mxu0 0
        %1812 = vmatmul.mubr.bf16.gmra.mxu0 %v1777
        %v1813 = vpop.f32.mrf.mxu0
        %v1814 = vadd.f32 0.0, %v1813
        %v1815 = vpop.f32.mrf.mxu0
        %v1816 = vpop.f32.mrf.mxu0
        %v1817 = vpop.f32.mrf.mxu0
        %1818 = vdwg.mxu0
        %v1819 = vadd.f32 %v1697, %v1814
        %v1820 = vld [vmem:[%s29] sm:$0x1]
        %v1822 = vlaneseq
        %v1823 = vshrl.u32 %v1822, 7
        %v1824 = vsub.s32 0, %v1823
        %v1825 = vrot.slane %v1820, %v1824
        %v1827 = vadd.f32 %v1819, %v1825
        %v1828 = vpack.c.bf16 %v1464, %v1464
        %v1829 = vld [vmem:[%s31] sm:$0xf]
        %v1830 = vld [vmem:[%s31 + $0x4] sm:$0xf]
        %v1831 = vld [vmem:[%s33] sm:$0x1]
        %v1833 = vlaneseq
        %v1834 = vshrl.u32 %v1833, 7
        %v1835 = vsub.s32 0, %v1834
        %v1836 = vrot.slane %v1831, %v1835
        %v1840 = vunpack.c.l.b16 %v1829
        %v1841 = vunpack.c.l.b16 %v1830
        %v1842 = vpack.c.b16 %v1841, %v1840
        %v1845 = vsel %vm1481, %v1828, 0
        %1847 = vmatprep.subr.bf16.mxu0 0
        %1848 = vmatpush1.bf16.msra.mxu0 0
        %1849 = vmatprep.subr.bf16.mxu0 0
        %1850 = vmatpush1.bf16.msra.mxu0 0
        %1851 = vmatprep.subr.bf16.mxu0 0
        %1852 = vmatpush1.bf16.msra.mxu0 0
        %1853 = vmatprep.subr.bf16.mxu0 0
        %1854 = vmatpush1.bf16.msra.mxu0 0
        %1855 = vmatprep.subr.bf16.mxu0 0
        %1856 = vmatpush1.bf16.msra.mxu0 0
        %1857 = vmatprep.subr.bf16.mxu0 0
        %1858 = vmatpush1.bf16.msra.mxu0 0
        %1859 = vmatprep.subr.bf16.mxu0 0
        %1860 = vmatpush1.bf16.msra.mxu0 0
        %1861 = vmatprep.subr.bf16.mxu0 0
        %1862 = vmatpush1.bf16.msra.mxu0 %v1842
        %1863 = vmatprep.subr.bf16.mxu0 0
        %1864 = vmatpush2.bf16.msra.mxu0 0
        %1865 = vmatprep.subr.bf16.mxu0 0
        %1866 = vmatpush2.bf16.msra.mxu0 0
        %1867 = vmatprep.subr.bf16.mxu0 0
        %1868 = vmatpush2.bf16.msra.mxu0 0
        %1869 = vmatprep.subr.bf16.mxu0 0
        %1870 = vmatpush2.bf16.msra.mxu0 0
        %1871 = vmatprep.subr.bf16.mxu0 0
        %1872 = vmatpush2.bf16.msra.mxu0 0
        %1873 = vmatprep.subr.bf16.mxu0 0
        %1874 = vmatpush2.bf16.msra.mxu0 0
        %1875 = vmatprep.subr.bf16.mxu0 0
        %1876 = vmatpush2.bf16.msra.mxu0 0
        %1877 = vmatprep.subr.bf16.mxu0 0
        %1878 = vmatpush2.bf16.msra.mxu0 0
        %1879 = vmatprep.mubr.bf16.mxu0 0
        %1880 = vmatmul.mubr.bf16.gmra.mxu0 %v1845
        %v1881 = vpop.f32.mrf.mxu0
        %v1882 = vadd.f32 %v1836, %v1881
        %v1883 = vpop.f32.mrf.mxu0
        %v1884 = vpop.f32.mrf.mxu0
        %v1885 = vpop.f32.mrf.mxu0
        %1886 = vdwg.mxu0
        %v1887 = vmax.f32 %v1882, 0.0
        %v1888 = vpack.c.bf16 %v1827, %v1827
        %v1889 = vpack.c.bf16 %v1887, %v1887
        %v1890 = vld [vmem:[%s35] sm:$0xf]
        %v1891 = vld [vmem:[%s35 + $0x4] sm:$0xf]
        %v1892 = vld [vmem:[%s35 + $0x8] sm:$0xf]
        %v1893 = vld [vmem:[%s35 + $0xc] sm:$0xf]
        %v1894 = vld [vmem:[%s35 + $0x10] sm:$0xf]
        %v1895 = vld [vmem:[%s37] sm:$0xff]
        %v1896 = vld [vmem:[%s37 + $0x8] sm:$0xff]
        %v1897 = vld [vmem:[%s37 + $0x10] sm:$0xff]
        %v1898 = vld [vmem:[%s37 + $0x18] sm:$0xff]
        %v1899 = vld [vmem:[%s37 + $0x20] sm:$0xff]
        %1901 = vset.pattern.permute.xlu0 0
        %1902 = vperm.xlu0 %1901, %v1895
        %v1903 = vpop.permute.xlu0 %1902
        %1906 = vset.pattern.permute.xlu0 0
        %1907 = vperm.xlu0 %1906, %v1896
        %v1908 = vpop.permute.xlu0 %1907
        %1911 = vset.pattern.permute.xlu0 0
        %1912 = vperm.xlu0 %1911, %v1897
        %v1913 = vpop.permute.xlu0 %1912
        %1916 = vset.pattern.permute.xlu0 0
        %1917 = vperm.xlu0 %1916, %v1898
        %v1918 = vpop.permute.xlu0 %1917
        %1921 = vset.pattern.permute.xlu0 0
        %1922 = vperm.xlu0 %1921, %v1899
        %v1923 = vpop.permute.xlu0 %1922
        %v1930 = vunpack.c.l.b16 %v1890
        %v1931 = vunpack.c.l.b16 %v1891
        %v1932 = vunpack.c.l.b16 %v1892
        %v1933 = vunpack.c.l.b16 %v1893
        %v1934 = vunpack.c.l.b16 %v1894
        %v1935 = vpack.c.b16 %v1931, %v1930
        %v1936 = vpack.c.b16 %v1933, %v1932
        %v1937 = vpack.c.b16 %v1934, %v1934
        %v1939 = vsel %vm1481, %v1935, 0
        %v1942 = vsel %vm1481, %v1936, 0
        %v1945 = vsel %vm1481, %v1937, 0
        %v1948 = vsel %vm1481, %v1888, 0
        %1950 = vmatprep.subr.bf16.mxu0 0
        %1951 = vmatpush1.bf16.xpose.msra.mxu0 0
        %1952 = vmatprep.subr.bf16.mxu0 0
        %1953 = vmatpush1.bf16.xpose.msra.mxu0 0
        %1954 = vmatprep.subr.bf16.mxu0 0
        %1955 = vmatpush1.bf16.xpose.msra.mxu0 0
        %1956 = vmatprep.subr.bf16.mxu0 0
        %1957 = vmatpush1.bf16.xpose.msra.mxu0 0
        %1958 = vmatprep.subr.bf16.mxu0 0
        %1959 = vmatpush1.bf16.xpose.msra.mxu0 0
        %1960 = vmatprep.subr.bf16.mxu0 0
        %1961 = vmatpush1.bf16.xpose.msra.mxu0 0
        %1962 = vmatprep.subr.bf16.mxu0 0
        %1963 = vmatpush1.bf16.xpose.msra.mxu0 0
        %1964 = vmatprep.subr.bf16.mxu0 0
        %1965 = vmatpush1.bf16.xpose.msra.mxu0 %v1948
        %1966 = vmatprep.subr.bf16.mxu0 0
        %1967 = vmatpush2.bf16.xpose.msra.mxu0 0
        %1968 = vmatprep.subr.bf16.mxu0 0
        %1969 = vmatpush2.bf16.xpose.msra.mxu0 0
        %1970 = vmatprep.subr.bf16.mxu0 0
        %1971 = vmatpush2.bf16.xpose.msra.mxu0 0
        %1972 = vmatprep.subr.bf16.mxu0 0
        %1973 = vmatpush2.bf16.xpose.msra.mxu0 0
        %1974 = vmatprep.subr.bf16.mxu0 0
        %1975 = vmatpush2.bf16.xpose.msra.mxu0 0
        %1976 = vmatprep.subr.bf16.mxu0 0
        %1977 = vmatpush2.bf16.xpose.msra.mxu0 0
        %1978 = vmatprep.subr.bf16.mxu0 0
        %1979 = vmatpush2.bf16.xpose.msra.mxu0 0
        %1980 = vmatprep.subr.bf16.mxu0 0
        %1981 = vmatpush2.bf16.xpose.msra.mxu0 0
        %1982 = vmatprep.mubr.bf16.mxu0 0
        %1983 = vmatmul.mubr.bf16.gmra.mxu0 %v1939
        %v1984 = vpop.f32.mrf.mxu0
        %v1985 = vadd.f32 %v1903, %v1984
        %v1986 = vpop.f32.mrf.mxu0
        %v1987 = vpop.f32.mrf.mxu0
        %v1988 = vadd.f32 %v1908, %v1987
        %v1989 = vpop.f32.mrf.mxu0
        %1990 = vmatprep.mubr.bf16.mxu0 0
        %1991 = vmatmul.mubr.bf16.gmra.mxu0 %v1942
        %v1992 = vpop.f32.mrf.mxu0
        %v1993 = vadd.f32 %v1913, %v1992
        %v1994 = vpop.f32.mrf.mxu0
        %v1995 = vpop.f32.mrf.mxu0
        %v1996 = vadd.f32 %v1918, %v1995
        %v1997 = vpop.f32.mrf.mxu0
        %1998 = vmatprep.mubr.bf16.mxu0 0
        %1999 = vmatmul.mubr.bf16.gmra.mxu0 %v1945
        %v2000 = vpop.f32.mrf.mxu0
        %v2001 = vadd.f32 %v1923, %v2000
        %v2002 = vpop.f32.mrf.mxu0
        %v2003 = vpop.f32.mrf.mxu0
        %v2004 = vpop.f32.mrf.mxu0
        %2005 = vdwg.mxu0
        %v2006 = vld [vmem:[%s39] sm:$0xf]
        %v2007 = vld [vmem:[%s39 + $0x4] sm:$0xf]
        %v2008 = vld [vmem:[%s41] sm:$0xff]
        %v2009 = vld [vmem:[%s41 + $0x8] sm:$0xff]
        %2011 = vset.pattern.permute.xlu0 0
        %2012 = vperm.xlu0 %2011, %v2008
        %v2013 = vpop.permute.xlu0 %2012
        %2016 = vset.pattern.permute.xlu0 0
        %2017 = vperm.xlu0 %2016, %v2009
        %v2018 = vpop.permute.xlu0 %2017
        %v2022 = vunpack.c.l.b16 %v2006
        %v2023 = vunpack.c.l.b16 %v2007
        %v2024 = vpack.c.b16 %v2023, %v2022
        %v2026 = vsel %vm1481, %v2024, 0
        %v2029 = vsel %vm1481, %v1889, 0
        %2031 = vmatprep.subr.bf16.mxu0 0
        %2032 = vmatpush1.bf16.xpose.msra.mxu0 0
        %2033 = vmatprep.subr.bf16.mxu0 0
        %2034 = vmatpush1.bf16.xpose.msra.mxu0 0
        %2035 = vmatprep.subr.bf16.mxu0 0
        %2036 = vmatpush1.bf16.xpose.msra.mxu0 0
        %2037 = vmatprep.subr.bf16.mxu0 0
        %2038 = vmatpush1.bf16.xpose.msra.mxu0 0
        %2039 = vmatprep.subr.bf16.mxu0 0
        %2040 = vmatpush1.bf16.xpose.msra.mxu0 0
        %2041 = vmatprep.subr.bf16.mxu0 0
        %2042 = vmatpush1.bf16.xpose.msra.mxu0 0
        %2043 = vmatprep.subr.bf16.mxu0 0
        %2044 = vmatpush1.bf16.xpose.msra.mxu0 0
        %2045 = vmatprep.subr.bf16.mxu0 0
        %2046 = vmatpush1.bf16.xpose.msra.mxu0 %v2029
        %2047 = vmatprep.subr.bf16.mxu0 0
        %2048 = vmatpush2.bf16.xpose.msra.mxu0 0
        %2049 = vmatprep.subr.bf16.mxu0 0
        %2050 = vmatpush2.bf16.xpose.msra.mxu0 0
        %2051 = vmatprep.subr.bf16.mxu0 0
        %2052 = vmatpush2.bf16.xpose.msra.mxu0 0
        %2053 = vmatprep.subr.bf16.mxu0 0
        %2054 = vmatpush2.bf16.xpose.msra.mxu0 0
        %2055 = vmatprep.subr.bf16.mxu0 0
        %2056 = vmatpush2.bf16.xpose.msra.mxu0 0
        %2057 = vmatprep.subr.bf16.mxu0 0
        %2058 = vmatpush2.bf16.xpose.msra.mxu0 0
        %2059 = vmatprep.subr.bf16.mxu0 0
        %2060 = vmatpush2.bf16.xpose.msra.mxu0 0
        %2061 = vmatprep.subr.bf16.mxu0 0
        %2062 = vmatpush2.bf16.xpose.msra.mxu0 0
        %2063 = vmatprep.mubr.bf16.mxu0 0
        %2064 = vmatmul.mubr.bf16.gmra.mxu0 %v2026
        %v2065 = vpop.f32.mrf.mxu0
        %v2066 = vadd.f32 %v2013, %v2065
        %v2067 = vpop.f32.mrf.mxu0
        %v2068 = vpop.f32.mrf.mxu0
        %v2069 = vadd.f32 %v2018, %v2068
        %v2070 = vpop.f32.mrf.mxu0
        %2071 = vdwg.mxu0
        %v2072 = vmax.f32 %v1996, 0.0
        %v2073 = vmax.f32 %v2001, 0.0
        %vm2074 = vcmp.ne.f32.partialorder %v1996, %v1996
        %vm2075 = vcmp.ne.f32.partialorder %v2001, %v2001
        %v2076 = vadd.f32 %v1996, 0.0
        %v2077 = vadd.f32 %v2001, 0.0
        %v2078 = vand.u32 2147483647, %v1996
        %v2079 = vand.u32 2147483647, %v2001
        %v2080 = vsub.f32 0.0, %v2078
        %v2081 = vsub.f32 0.0, %v2079
        %v2082 = vmul.f32 %v2080, 1.442695
        %v2083 = vpow.pop %v2082
        %v2084 = vmul.f32 %v2081, 1.442695
        %v2085 = vpow.pop %v2084
        %v2086 = vadd.f32 %v2083, 1.0
        %v2087 = vlog2.pop %v2086
        %v2088 = vmul.f32 %v2087, 0.6931472
        %v2089 = vmul.f32 -0.5, %v2083
        %v2090 = vadd.f32 %v2089, 1.0
        %v2091 = vmul.f32 %v2090, %v2083
        %v2092 = vand.u32 2147483647, %v2083
        %vm2093 = vcmp.lt.f32.partialorder %v2092, 0.0004427343
        %v2094 = vsel %vm2093, %v2091, %v2088
        %v2095 = vadd.f32 %v2085, 1.0
        %v2096 = vlog2.pop %v2095
        %v2097 = vmul.f32 %v2096, 0.6931472
        %v2098 = vmul.f32 -0.5, %v2085
        %v2099 = vadd.f32 %v2098, 1.0
        %v2100 = vmul.f32 %v2099, %v2085
        %v2101 = vand.u32 2147483647, %v2085
        %vm2102 = vcmp.lt.f32.partialorder %v2101, 0.0004427343
        %v2103 = vsel %vm2102, %v2100, %v2097
        %v2104 = vadd.f32 %v2072, %v2094
        %v2105 = vadd.f32 %v2073, %v2103
        %v2106 = vsel %vm2074, %v2076, %v2104
        %v2107 = vsel %vm2075, %v2077, %v2105
        %v2108 = vadd.f32 %v2106, 0.0001
        %v2109 = vadd.f32 %v2107, 0.0001
        %v2110 = vlaneseq
        %v2111 = vshrl.u32 %v2110, 7
        %v2112 = vadd.s32 %v2111, 8
        %v2113 = vlaneseq
        %v2114 = vand.u32 %v2113, 127
        %vm2115 = vcmp.eq.s32.totalorder %v2111, %v2114
        %vm2116 = vcmp.eq.s32.totalorder %v2112, %v2114
        %v2117 = vsel %vm2115, 1, 0
        %v2118 = vsel %vm2116, 1, 0
        %v2119 = vcvt.s32.f32 %v2117
        %v2120 = vcvt.s32.f32 %v2118
        %v2122 = vsel %vm951, %v2119, 0
        %v2125 = vsel %vm951, %v2120, 0
        %v2128 = vsel %vm951, %v950, 0
        %2130 = vmatprep.subr.mxu0 0.0
        %2131 = vmatpush1.xpose.msra.mxu0 0.0
        %2132 = vmatprep.subr.mxu0 0.0
        %2133 = vmatpush1.xpose.msra.mxu0 0.0
        %2134 = vmatprep.subr.mxu0 0.0
        %2135 = vmatpush1.xpose.msra.mxu0 0.0
        %2136 = vmatprep.subr.mxu0 0.0
        %2137 = vmatpush1.xpose.msra.mxu0 0.0
        %2138 = vmatprep.subr.mxu0 0.0
        %2139 = vmatpush1.xpose.msra.mxu0 0.0
        %2140 = vmatprep.subr.mxu0 0.0
        %2141 = vmatpush1.xpose.msra.mxu0 0.0
        %2142 = vmatprep.subr.mxu0 0.0
        %2143 = vmatpush1.xpose.msra.mxu0 0.0
        %2144 = vmatprep.subr.mxu0 0.0
        %2145 = vmatpush1.xpose.msra.mxu0 0.0
        %2146 = vmatprep.subr.mxu0 0.0
        %2147 = vmatpush1.xpose.msra.mxu0 0.0
        %2148 = vmatprep.subr.mxu0 0.0
        %2149 = vmatpush1.xpose.msra.mxu0 0.0
        %2150 = vmatprep.subr.mxu0 0.0
        %2151 = vmatpush1.xpose.msra.mxu0 0.0
        %2152 = vmatprep.subr.mxu0 0.0
        %2153 = vmatpush1.xpose.msra.mxu0 0.0
        %2154 = vmatprep.subr.mxu0 0.0
        %2155 = vmatpush1.xpose.msra.mxu0 0.0
        %2156 = vmatprep.subr.mxu0 0.0
        %2157 = vmatpush1.xpose.msra.mxu0 0.0
        %2158 = vmatprep.subr.mxu0 0.0
        %2159 = vmatpush1.xpose.msra.mxu0 0.0
        %2160 = vmatprep.subr.mxu0 0.0
        %2161 = vmatpush1.xpose.msra.mxu0 %v2128
        %2162 = vmatprep.subr.mxu0 0.0
        %2163 = vmatpush2.xpose.msra.mxu0 0.0
        %2164 = vmatprep.subr.mxu0 0.0
        %2165 = vmatpush2.xpose.msra.mxu0 0.0
        %2166 = vmatprep.subr.mxu0 0.0
        %2167 = vmatpush2.xpose.msra.mxu0 0.0
        %2168 = vmatprep.subr.mxu0 0.0
        %2169 = vmatpush2.xpose.msra.mxu0 0.0
        %2170 = vmatprep.subr.mxu0 0.0
        %2171 = vmatpush2.xpose.msra.mxu0 0.0
        %2172 = vmatprep.subr.mxu0 0.0
        %2173 = vmatpush2.xpose.msra.mxu0 0.0
        %2174 = vmatprep.subr.mxu0 0.0
        %2175 = vmatpush2.xpose.msra.mxu0 0.0
        %2176 = vmatprep.subr.mxu0 0.0
        %2177 = vmatpush2.xpose.msra.mxu0 0.0
        %2178 = vmatprep.subr.mxu0 0.0
        %2179 = vmatpush2.xpose.msra.mxu0 0.0
        %2180 = vmatprep.subr.mxu0 0.0
        %2181 = vmatpush2.xpose.msra.mxu0 0.0
        %2182 = vmatprep.subr.mxu0 0.0
        %2183 = vmatpush2.xpose.msra.mxu0 0.0
        %2184 = vmatprep.subr.mxu0 0.0
        %2185 = vmatpush2.xpose.msra.mxu0 0.0
        %2186 = vmatprep.subr.mxu0 0.0
        %2187 = vmatpush2.xpose.msra.mxu0 0.0
        %2188 = vmatprep.subr.mxu0 0.0
        %2189 = vmatpush2.xpose.msra.mxu0 0.0
        %2190 = vmatprep.subr.mxu0 0.0
        %2191 = vmatpush2.xpose.msra.mxu0 0.0
        %2192 = vmatprep.subr.mxu0 0.0
        %2193 = vmatpush2.xpose.msra.mxu0 0.0
        %2194 = vmatprep.mubr.f32.mxu0 0.0
        %2195 = vmatmul.mubr.f32.gmra.mxu0 %v2122
        %v2196 = vpop.f32.mrf.mxu0
        %v2197 = vadd.f32 0.0, %v2196
        %v2198 = vpop.f32.mrf.mxu0
        %2199 = vmatprep.mubr.f32.mxu0 0.0
        %2200 = vmatmul.mubr.f32.gmra.mxu0 %v2125
        %v2201 = vpop.f32.mrf.mxu0
        %v2202 = vadd.f32 0.0, %v2201
        %v2203 = vpop.f32.mrf.mxu0
        %2204 = vdwg.mxu0
        %v2205 = vsub.f32 %v2197, %v1993
        %v2206 = vsub.f32 %v2202, %v1996
        %v2207 = vrcp.pop %v2108
        %v2208 = vrcp.pop %v2109
        %v2209 = vlog2.pop %v2108
        %v2210 = vmul.f32 %v2209, 0.6931472
        %v2211 = vlog2.pop %v2109
        %v2212 = vmul.f32 %v2211, 0.6931472
        %v2213 = vadd.f32 %v2210, 1.837877
        %v2214 = vadd.f32 %v2212, 1.837877
        %v2215 = vmul.f32 %v2205, %v2205
        %v2216 = vmul.f32 %v2206, %v2206
        %v2219 = vrot.slane %v2207, 4
        %v2220 = vrot.slane %v2208, 4
        %v2221 = vsel %vm1593, %v2219, %v2220
        %v2224 = vmul.f32 %v2215, %v2221
        %v2225 = vmul.f32 %v2216, %v2220
        %v2228 = vrot.slane %v2224, 4
        %v2229 = vrot.slane %v2225, 4
        %v2230 = vsel %vm1593, %v2228, %v2229
        %v2233 = vadd.f32 %v2213, %v2228
        %v2234 = vadd.f32 %v2214, %v2230
        %v2237 = vrot.slane %v2233, 4
        %v2238 = vrot.slane %v2234, 4
        %v2239 = vsel %vm1593, %v2237, %v2238
        %v2242 = vsel %vm1110, %v2239, 0.0
        %vm2243 = vcmask 60416
        %v2244 = vsel %vm2243, %v2238, 0.0
        %v2245 = vadd.f32 %v2242, %v2244
        %2246 = vadd.xlane.f32.xlu0 %v2245
        %v2247 = vpop.xlane.xlu0 %2246
        %v2248 = vrot.slane %v2247, 4
        %v2249 = vadd.f32 %v2247, %v2248
        %v2250 = vrot.slane %v2249, 2
        %v2251 = vadd.f32 %v2249, %v2250
        %v2252 = vrot.slane %v2251, 1
        %v2253 = vadd.f32 %v2251, %v2252
        %s2254 = vtos %v2253
        %s2255 = smul.f32 %s2254, -0.5
        %v2256 = vsub.f32 %v2069, %v1988
        %v2257 = vsub.f32 %v1988, %v2069
        %v2258 = vmul.f32 %v2257, 1.442695
        %v2259 = vpow.pop %v2258
        %v2260 = vadd.f32 %v2256, %v2259
        %v2261 = vsub.f32 %v1985, %v2066
        %v2262 = vmul.f32 %v2261, %v2261
        %v2263 = vsub.f32 0.0, %v2069
        %v2264 = vmul.f32 %v2263, 1.442695
        %v2265 = vpow.pop %v2264
        %v2266 = vmul.f32 %v2262, %v2265
        %v2267 = vadd.f32 %v2260, %v2266
        %v2268 = vsub.f32 %v2267, 1.0
        %v2269 = vsel %vm1110, %v2268, 0.0
        %2270 = vadd.xlane.f32.xlu0 %v2269
        %v2271 = vpop.xlane.xlu0 %2270
        %v2272 = vrot.slane %v2271, 4
        %v2273 = vadd.f32 %v2271, %v2272
        %v2274 = vrot.slane %v2273, 2
        %v2275 = vadd.f32 %v2273, %v2274
        %v2276 = vrot.slane %v2275, 1
        %v2277 = vadd.f32 %v2275, %v2276
        %s2278 = vtos %v2277
        %s2279 = smul.f32 %s2278, 0.5
        %v2280 = vld [vmem:[%s43] sm:$0xf]
        %v2281 = vld [vmem:[%s43 + $0x4] sm:$0xf]
        %v2284 = vunpack.c.l.b16 %v2280
        %v2285 = vunpack.c.l.b16 %v2281
        %v2286 = vpack.c.b16 %v2285, %v2284
        %2288 = vmatprep.subr.bf16.mxu0 0
        %2289 = vmatpush1.bf16.msra.mxu0 0
        %2290 = vmatprep.subr.bf16.mxu0 0
        %2291 = vmatpush1.bf16.msra.mxu0 0
        %2292 = vmatprep.subr.bf16.mxu0 0
        %2293 = vmatpush1.bf16.msra.mxu0 0
        %2294 = vmatprep.subr.bf16.mxu0 0
        %2295 = vmatpush1.bf16.msra.mxu0 0
        %2296 = vmatprep.subr.bf16.mxu0 0
        %2297 = vmatpush1.bf16.msra.mxu0 0
        %2298 = vmatprep.subr.bf16.mxu0 0
        %2299 = vmatpush1.bf16.msra.mxu0 0
        %2300 = vmatprep.subr.bf16.mxu0 0
        %2301 = vmatpush1.bf16.msra.mxu0 0
        %2302 = vmatprep.subr.bf16.mxu0 0
        %2303 = vmatpush1.bf16.msra.mxu0 %v2286
        %2304 = vmatprep.subr.bf16.mxu0 0
        %2305 = vmatpush2.bf16.msra.mxu0 0
        %2306 = vmatprep.subr.bf16.mxu0 0
        %2307 = vmatpush2.bf16.msra.mxu0 0
        %2308 = vmatprep.subr.bf16.mxu0 0
        %2309 = vmatpush2.bf16.msra.mxu0 0
        %2310 = vmatprep.subr.bf16.mxu0 0
        %2311 = vmatpush2.bf16.msra.mxu0 0
        %2312 = vmatprep.subr.bf16.mxu0 0
        %2313 = vmatpush2.bf16.msra.mxu0 0
        %2314 = vmatprep.subr.bf16.mxu0 0
        %2315 = vmatpush2.bf16.msra.mxu0 0
        %2316 = vmatprep.subr.bf16.mxu0 0
        %2317 = vmatpush2.bf16.msra.mxu0 0
        %2318 = vmatprep.subr.bf16.mxu0 0
        %2319 = vmatpush2.bf16.msra.mxu0 0
        %2320 = vmatprep.mubr.bf16.mxu0 0
        %2321 = vmatmul.mubr.bf16.gmra.mxu0 %v1948
        %v2322 = vpop.f32.mrf.mxu0
        %v2323 = vadd.f32 0.0, %v2322
        %v2324 = vpop.f32.mrf.mxu0
        %v2325 = vpop.f32.mrf.mxu0
        %v2326 = vpop.f32.mrf.mxu0
        %2327 = vdwg.mxu0
        %v2328 = vld [vmem:[%s45] sm:$0xf]
        %v2329 = vld [vmem:[%s47] sm:$0xf]
        %v2331 = vsel %vm1110, %v2328, 0
        %2333 = vmatprep.subr.mxu0 0.0
        %2334 = vmatpush1.msra.mxu0 0.0
        %2335 = vmatprep.subr.mxu0 0.0
        %2336 = vmatpush1.msra.mxu0 0.0
        %2337 = vmatprep.subr.mxu0 0.0
        %2338 = vmatpush1.msra.mxu0 0.0
        %2339 = vmatprep.subr.mxu0 0.0
        %2340 = vmatpush1.msra.mxu0 0.0
        %2341 = vmatprep.subr.mxu0 0.0
        %2342 = vmatpush1.msra.mxu0 0.0
        %2343 = vmatprep.subr.mxu0 0.0
        %2344 = vmatpush1.msra.mxu0 0.0
        %2345 = vmatprep.subr.mxu0 0.0
        %2346 = vmatpush1.msra.mxu0 0.0
        %2347 = vmatprep.subr.mxu0 0.0
        %2348 = vmatpush1.msra.mxu0 0.0
        %2349 = vmatprep.subr.mxu0 0.0
        %2350 = vmatpush1.msra.mxu0 0.0
        %2351 = vmatprep.subr.mxu0 0.0
        %2352 = vmatpush1.msra.mxu0 0.0
        %2353 = vmatprep.subr.mxu0 0.0
        %2354 = vmatpush1.msra.mxu0 0.0
        %2355 = vmatprep.subr.mxu0 0.0
        %2356 = vmatpush1.msra.mxu0 0.0
        %2357 = vmatprep.subr.mxu0 0.0
        %2358 = vmatpush1.msra.mxu0 0.0
        %2359 = vmatprep.subr.mxu0 0.0
        %2360 = vmatpush1.msra.mxu0 0.0
        %2361 = vmatprep.subr.mxu0 0.0
        %2362 = vmatpush1.msra.mxu0 0.0
        %2363 = vmatprep.subr.mxu0 0.0
        %2364 = vmatpush1.msra.mxu0 %v2323
        %2365 = vmatprep.subr.mxu0 0.0
        %2366 = vmatpush2.msra.mxu0 0.0
        %2367 = vmatprep.subr.mxu0 0.0
        %2368 = vmatpush2.msra.mxu0 0.0
        %2369 = vmatprep.subr.mxu0 0.0
        %2370 = vmatpush2.msra.mxu0 0.0
        %2371 = vmatprep.subr.mxu0 0.0
        %2372 = vmatpush2.msra.mxu0 0.0
        %2373 = vmatprep.subr.mxu0 0.0
        %2374 = vmatpush2.msra.mxu0 0.0
        %2375 = vmatprep.subr.mxu0 0.0
        %2376 = vmatpush2.msra.mxu0 0.0
        %2377 = vmatprep.subr.mxu0 0.0
        %2378 = vmatpush2.msra.mxu0 0.0
        %2379 = vmatprep.subr.mxu0 0.0
        %2380 = vmatpush2.msra.mxu0 0.0
        %2381 = vmatprep.subr.mxu0 0.0
        %2382 = vmatpush2.msra.mxu0 0.0
        %2383 = vmatprep.subr.mxu0 0.0
        %2384 = vmatpush2.msra.mxu0 0.0
        %2385 = vmatprep.subr.mxu0 0.0
        %2386 = vmatpush2.msra.mxu0 0.0
        %2387 = vmatprep.subr.mxu0 0.0
        %2388 = vmatpush2.msra.mxu0 0.0
        %2389 = vmatprep.subr.mxu0 0.0
        %2390 = vmatpush2.msra.mxu0 0.0
        %2391 = vmatprep.subr.mxu0 0.0
        %2392 = vmatpush2.msra.mxu0 0.0
        %2393 = vmatprep.subr.mxu0 0.0
        %2394 = vmatpush2.msra.mxu0 0.0
        %2395 = vmatprep.subr.mxu0 0.0
        %2396 = vmatpush2.msra.mxu0 0.0
        %2397 = vmatprep.mubr.f32.mxu0 0.0
        %2398 = vmatmul.mubr.f32.gmra.mxu0 %v2331
        %v2399 = vpop.f32.mrf.mxu0
        %v2400 = vadd.f32 %v2329, %v2399
        %v2401 = vpop.f32.mrf.mxu0
        %2402 = vdwg.mxu0
        %v2403 = vld [vmem:[%s49] sm:$0x1]
        %v2404 = vadd.f32 %v2403, 1e-10
        %v2405 = vrcp.pop %v2404
        %v2406 = vld [vmem:[%s51] sm:$0x1]
        %v2408 = vlaneseq
        %v2409 = vshrl.u32 %v2408, 7
        %v2410 = vsub.s32 0, %v2409
        %v2411 = vrot.slane %v2406, %v2410
        %v2413 = vsub.f32 %v2400, %v2411
        %v2415 = vlaneseq
        %v2416 = vshrl.u32 %v2415, 7
        %v2417 = vsub.s32 0, %v2416
        %v2418 = vrot.slane %v2405, %v2417
        %v2420 = vmul.f32 %v2413, %v2418
        %v2421 = vmul.f32 %v2420, %v978
        %v2422 = vadd.f32 %v2421, %v960
        %2423 = vst.msk [vmem:[%s943] sm:$0xff] %vm1110, %v1993
        %2424 = vst.msk [vmem:[%s943 + $0x8] sm:$0xf] %vm2243, %v1996
        %vm2425 = vcmask 64516
        %2426 = vst.msk [vmem:[%s948 - $0x4] sm:$0xf0] %vm2425, %v2108
        %2427 = vst.msk [vmem:[%s948 + $0x4] sm:$0xff] %vm1110, %v2109
        %vm2428 = vcmask 93184
        %2429 = vst.msk [vmem:[%s924] sm:$0xf] %vm2428, %v2422
        %vm2430 = vcmp.eq.s32.totalorder %v2114, 0
        %v2431 = vstv %s2255
        %v2432 = vstv %s2279
        %v2433 = vsel %vm2430, %v2431, %v2432
        %vm2434 = vcmask 8192
        %2435 = vst.msk [vmem:[%s930] sm:$0x1] %vm2434, %v2433
        %p2436 = scmp.lt.s32.totalorder %s77, 1
        %s2437 = scalar_select %p2436, %s77, 1
        %s2438 = smul.addr %s2437, 2
        %s2439 = smul.addr %s2438, 8
        %s2440 = scalar_lea.vmem %s53, %s2439
        %p2441 = scmp.lt.s32.totalorder %s77, 1
        %s2442 = scalar_select %p2441, %s77, 1
        %s2443 = smul.addr %s2442, 2
        %s2444 = smul.addr %s2443, 8
        %s2445 = scalar_lea.vmem %s55, %s2444
        %s2446 = sand.u32 %s693, 1
        %s2447 = scalar_lea.sflag [#allocation3], %s2446
        %s2448 = sand.u32 %s693, 1
        %s2449 = smul.addr %s2448, 4
        %s2450 = scalar_lea.vmem [#allocation2], %s2449
        %s2451 = sand.u32 %s719, 1
        %s2452 = scalar_lea.sflag [#allocation5], %s2451
        %s2453 = sand.u32 %s719, 1
        %s2454 = scalar_lea.vmem [#allocation4], %s2453
        // Predicated region
        $region125: #{tpu_custom_call.1} parent=123 // pred_check
          %p2455 = pneg %p651
        $region126: #{tpu_custom_call.1} parent=123 // pred_check_branch
          %2457 = sbr.rel (%p2455) target = $region128
        $region127: #{tpu_custom_call.1} parent=123 // pred_region
          _
        $region128: #{tpu_custom_call.1} parent=123 // pred_fallthru
          _
        // Predicated region
        $region129: #{tpu_custom_call.1} parent=123 // pred_check
          %p2458 = pneg %p677
        $region130: #{tpu_custom_call.1} parent=123 // pred_check_branch
          %2460 = sbr.rel (%p2458) target = $region132
        $region131: #{tpu_custom_call.1} parent=123 // pred_region
          _
        $region132: #{tpu_custom_call.1} parent=123 // pred_fallthru
          _
        // Predicated region
        $region133: #{tpu_custom_call.1} parent=123 // pred_check
          %p2461 = pneg %p703
        $region134: #{tpu_custom_call.1} parent=123 // pred_check_branch
          %2463 = sbr.rel (%p2461) target = $region136
        $region135: #{tpu_custom_call.1} parent=123 // pred_region
          %s2465 = ssub.s32 64, 64
          %2466 = vsyncadd %s2447, %s2465
          %s2467 = smul.addr %s77, 64
          %s2468 = scalar_lea.hbm %s57, %s2467
          %s2470 = sshll.u32 %s2450, 4
          %s2471 = int_to_ptr.vmem [resolvable:$true] %s2470
          %2473 = dma.vmem_to_hbm [thread:$0]  %s2471, 64, %s2468, %s2447
        $region136: #{tpu_custom_call.1} parent=123 // pred_fallthru
          _
        // Predicated region
        $region137: #{tpu_custom_call.1} parent=123 // pred_check
          %p2474 = pneg %p729
        $region138: #{tpu_custom_call.1} parent=123 // pred_check_branch
          %2476 = sbr.rel (%p2474) target = $region140
        $region139: #{tpu_custom_call.1} parent=123 // pred_region
          %s2478 = ssub.s32 16, 16
          %2479 = vsyncadd %s2452, %s2478
          %s2480 = smul.addr %s77, 16
          %s2481 = scalar_lea.hbm %s59, %s2480
          %s2483 = sshll.u32 %s2454, 4
          %s2484 = int_to_ptr.vmem [resolvable:$true] %s2483
          %2486 = dma.vmem_to_hbm [thread:$0]  %s2484, 16, %s2481, %s2452
        $region140: #{tpu_custom_call.1} parent=123 // pred_fallthru
          _
      $region124: #{tpu_custom_call.1} parent=5 // pred_fallthru
        _
      %p2487 = scmp.le.s32.totalorder 2, %s72
      // Predicated region
      $region141: #{tpu_custom_call.1} parent=5 // pred_check
        %p2488 = pneg %p2487
      $region142: #{tpu_custom_call.1} parent=5 // pred_check_branch
        %2490 = sbr.rel (%p2488) target = $region144
      $region143: #{tpu_custom_call.1} parent=5 // pred_region
        %s2491 = ssub.s32 %s72, 2
        // Predicated region
        $region145: #{tpu_custom_call.1} parent=143 // pred_check
          %p2492 = pneg %p657
        $region146: #{tpu_custom_call.1} parent=143 // pred_check_branch
          %2494 = sbr.rel (%p2492) target = $region148
        $region147: #{tpu_custom_call.1} parent=143 // pred_region
          %p2495 = scmp.lt.s32.totalorder %s78, 1
          %s2496 = scalar_select %p2495, %s78, 1
          %s2497 = smul.addr %s2496, 2
          %s2498 = smul.addr %s2497, 8
          %s2499 = scalar_lea.vmem %s53, %s2498
        $region148: #{tpu_custom_call.1} parent=143 // pred_fallthru
          _
        // Predicated region
        $region149: #{tpu_custom_call.1} parent=143 // pred_check
          %p2500 = pneg %p683
        $region150: #{tpu_custom_call.1} parent=143 // pred_check_branch
          %2502 = sbr.rel (%p2500) target = $region152
        $region151: #{tpu_custom_call.1} parent=143 // pred_region
          %p2503 = scmp.lt.s32.totalorder %s78, 1
          %s2504 = scalar_select %p2503, %s78, 1
          %s2505 = smul.addr %s2504, 2
          %s2506 = smul.addr %s2505, 8
          %s2507 = scalar_lea.vmem %s55, %s2506
        $region152: #{tpu_custom_call.1} parent=143 // pred_fallthru
          _
        // Predicated region
        $region153: #{tpu_custom_call.1} parent=143 // pred_check
          %p2508 = pneg %p709
        $region154: #{tpu_custom_call.1} parent=143 // pred_check_branch
          %2510 = sbr.rel (%p2508) target = $region156
        $region155: #{tpu_custom_call.1} parent=143 // pred_region
          %s2511 = sand.u32 %s694, 1
          %s2512 = scalar_lea.sflag [#allocation3], %s2511
          %s2513 = sand.u32 %s694, 1
          %s2514 = smul.addr %s2513, 4
          %s2515 = scalar_lea.vmem [#allocation2], %s2514
          %2516 = dma.done %s2512, 64
        $region156: #{tpu_custom_call.1} parent=143 // pred_fallthru
          _
        // Predicated region
        $region157: #{tpu_custom_call.1} parent=143 // pred_check
          %p2517 = pneg %p735
        $region158: #{tpu_custom_call.1} parent=143 // pred_check_branch
          %2519 = sbr.rel (%p2517) target = $region160
        $region159: #{tpu_custom_call.1} parent=143 // pred_region
          %s2520 = sand.u32 %s720, 1
          %s2521 = scalar_lea.sflag [#allocation5], %s2520
          %s2522 = sand.u32 %s720, 1
          %s2523 = scalar_lea.vmem [#allocation4], %s2522
          %2524 = dma.done %s2521, 16
        $region160: #{tpu_custom_call.1} parent=143 // pred_fallthru
          _
      $region144: #{tpu_custom_call.1} parent=5 // pred_fallthru
        _
    $region6: #{tpu_custom_call.1} parent=1 // loop_footer
      %s76 = sadd.s32 1, %s72
    $region7: #{tpu_custom_call.1} parent=1 // loop_footer_branch
      %71 = sbr.rel target = $region3
    $region8: #{tpu_custom_call.1} parent=1 // loop_exit
      _
    %2525 = vsyncpa [#allocation3], 1
    %s2526 = scalar_lea.sflag [#allocation3], 1
    %2527 = vsyncpa %s2526, 1
    %2528 = vsyncpa [#allocation5], 1
    %s2529 = scalar_lea.sflag [#allocation5], 1
    %2530 = vsyncpa %s2529, 1

</llo_original>
